<compile_context>
chip_gen: v5e
topology: v5e:2x2
jax: 0.10.0
libtpu: 0.0.40
codegen_flags: <defaults>
</compile_context>

<pallas_src>
import numpy as np
import jax
import jax.numpy as jnp
from jax import lax
from jax.experimental import pallas as pl
from jax.experimental.pallas import tpu as pltpu

NUM_CONVS = 4
ROI = 16          # roi_feat_size (H = W)
CIN = 8           # in_channels
COUT = 16         # conv_out_channels
K = 8             # num_classes  (class_agnostic=False -> logits channels = K)
N = 2             # number of ROIs (batch)

H = W = ROI
ROIS_PER_BLOCK = N            # fold all ROIs into the matmul M dim (single grid step)
R = ROIS_PER_BLOCK
G = N // R                    # grid size
RH = R * H                    # 32  rows per block (sublane / M dim)
WCIN = W * CIN                # 128 lanes for the input activation
WC = W * COUT                 # 256 lanes for hidden activations
WK = W * K                    # 128 lanes for the logits tile


def _fcn_mask_head_kernel(a_ref, t_ref,
                          b0_ref, c0_ref, b1_ref, c1_ref,
                          b2_ref, c2_ref, b3_ref, c3_ref,
                          bup_ref, cup_ref, blog_ref, clog_ref,
                          out_ref):
    t_up = t_ref[0]           # (RH, RH) bf16: row i <- row i-1   (ky = 0)
    t_dn = t_ref[1]           # (RH, RH) bf16: row i <- row i+1   (ky = 2)

    def conv3x3_relu(act, b_ref, bias_ref):
        # act: (RH, W*Cin) bf16, lane-dense.  Row shift = tiny 0/1 matmul (exact in
        # bf16); column shift + channel mixing are pre-folded into the banded B_ky.
        up_rows = jnp.dot(t_up, act, preferred_element_type=jnp.float32).astype(jnp.bfloat16)
        dn_rows = jnp.dot(t_dn, act, preferred_element_type=jnp.float32).astype(jnp.bfloat16)
        acc = jnp.dot(up_rows, b_ref[0], preferred_element_type=jnp.float32)
        acc += jnp.dot(act, b_ref[1], preferred_element_type=jnp.float32)
        acc += jnp.dot(dn_rows, b_ref[2], preferred_element_type=jnp.float32)
        return jnp.maximum(acc + bias_ref[...], 0.0).astype(jnp.bfloat16)   # (RH, W*COUT)

    act = a_ref[...]                                  # (RH, W*CIN) bf16
    act = conv3x3_relu(act, b0_ref, c0_ref)
    act = conv3x3_relu(act, b1_ref, c1_ref)
    act = conv3x3_relu(act, b2_ref, c2_ref)
    act = conv3x3_relu(act, b3_ref, c3_ref)           # (RH, 256)

    # ConvTranspose2d(k=2, s=2) + ReLU: all 4 sub-pixels in one matmul, lanes ordered
    # (a*2+b, column, channel).
    up = jnp.dot(act, bup_ref[...], preferred_element_type=jnp.float32)     # (RH, 1024)
    up = jnp.maximum(up + cup_ref[...], 0.0).astype(jnp.bfloat16)

    blog = blog_ref[...]
    clog = clog_ref[...]
    for ab in range(4):
        u = up[:, ab * WC:(ab + 1) * WC]              # 256-aligned lane slice (free)
        logits = jnp.dot(u, blog, preferred_element_type=jnp.float32) + clog
        out_ref[ab] = logits                          # lane-dense (RH, 128) store


def _fold_params(params):
    """Fold conv / deconv / logits weights into lane-dense banded bf16 matrices."""
    folded = {}

    # Row-shift matrices, block-diagonal over the ROIs stacked along the M dim.
    t = np.zeros((2, RH, RH), np.float32)
    for r in range(R):
        o = r * H
        for i in range(H):
            if i - 1 >= 0:
                t[0, o + i, o + i - 1] = 1.0          # ky = 0
            if i + 1 < H:
                t[1, o + i, o + i + 1] = 1.0          # ky = 2
    folded["t"] = jnp.asarray(t, jnp.bfloat16)

    # Conv weights (HWIO) -> per-ky banded matrices (W*Cin, W*Cout); zero padding of
    # the kx direction is encoded by the missing off-band blocks.
    bands, brows = [], []
    for (w, b) in params["convs"]:
        w = np.asarray(w, np.float32)                 # (3, 3, cin, COUT)
        cin = w.shape[2]
        band = np.zeros((3, W * cin, WC), np.float32)
        for ky in range(3):
            for j in range(W):
                for kx in range(3):
                    j2 = j + kx - 1
                    if 0 <= j2 < W:
                        band[ky, j2 * cin:(j2 + 1) * cin, j * COUT:(j + 1) * COUT] = w[ky, kx]
        bands.append(jnp.asarray(band, jnp.bfloat16))
        brows.append(jnp.asarray(np.tile(np.asarray(b, np.float32), W)[None, :], jnp.float32))
    folded["bands"] = bands
    folded["brows"] = brows

    # Deconv weight in (a, b, ci, co) order (a real torch ConvTranspose2d weight
    # (Cin, Cout, kH, kW) would need .transpose(2, 3, 0, 1) first).
    wup, bup = params["deconv"]
    wup = np.asarray(wup, np.float32)
    bup_mat = np.zeros((WC, 4 * WC), np.float32)
    for ab in range(4):
        a_, b_ = divmod(ab, 2)
        for j in range(W):
            bup_mat[j * COUT:(j + 1) * COUT,
                    ab * WC + j * COUT: ab * WC + (j + 1) * COUT] = wup[a_, b_]
    folded["bup"] = jnp.asarray(bup_mat, jnp.bfloat16)
    folded["cup"] = jnp.asarray(np.tile(np.asarray(bup, np.float32), 4 * W)[None, :],
                                jnp.float32)

    # 1x1 conv_logits -> block-diagonal (W*COUT, W*K).
    wlog, blog = params["logits"]
    wlog = np.asarray(wlog, np.float32)               # (COUT, K)
    blog_mat = np.zeros((WC, WK), np.float32)
    for j in range(W):
        blog_mat[j * COUT:(j + 1) * COUT, j * K:(j + 1) * K] = wlog
    folded["blog"] = jnp.asarray(blog_mat, jnp.bfloat16)
    folded["clog"] = jnp.asarray(np.tile(np.asarray(blog, np.float32), W)[None, :],
                                 jnp.float32)
    return folded


def fcn_mask_head_forward(x_nchw, params):
    """x_nchw: (N, CIN, H, W) float32 -> mask_pred (N, K, 2H, 2W) float32."""
    folded = _fold_params(params)

    # NCHW -> (ROI-block rows, W*C lanes): row = r*H + i, lane = j*CIN + c.
    x = jnp.transpose(jnp.asarray(x_nchw, jnp.float32), (0, 2, 3, 1))   # NHWC
    a0 = x.reshape(N, H, WCIN).reshape(G, RH, WCIN).astype(jnp.bfloat16)

    def _full(shape):
        nd = len(shape)
        return pl.BlockSpec(shape, lambda g, _nd=nd: (0,) * _nd)

    in_specs = [pl.BlockSpec((None, RH, WCIN), lambda g: (g, 0, 0)),
                _full((2, RH, RH))]
    operands = [a0, folded["t"]]
    for band, brow in zip(folded["bands"], folded["brows"]):
        in_specs += [_full(tuple(band.shape)), _full(tuple(brow.shape))]
        operands += [band, brow]
    in_specs += [_full(tuple(folded["bup"].shape)), _full(tuple(folded["cup"].shape)),
                 _full(tuple(folded["blog"].shape)), _full(tuple(folded["clog"].shape))]
    operands += [folded["bup"], folded["cup"], folded["blog"], folded["clog"]]

    grid_spec = pltpu.PrefetchScalarGridSpec(
        num_scalar_prefetch=0,
        grid=(G,),
        in_specs=in_specs,
        out_specs=pl.BlockSpec((None, 4, RH, WK), lambda g: (g, 0, 0, 0)),
    )

    out = pl.pallas_call(
        _fcn_mask_head_kernel,
        out_shape=jax.ShapeDtypeStruct((G, 4, RH, WK), jnp.float32),
        grid_spec=grid_spec,
        compiler_params=pltpu.CompilerParams(dimension_semantics=("parallel",)),
    )(*operands)

    # (g, ab, r*H+i, j*K+k) -> (n, k, 2i+a, 2j+b)
    out = out.reshape(G, 2, 2, R, H, W, K)
    out = jnp.transpose(out, (0, 3, 6, 4, 1, 5, 2))       # (G, R, K, H, 2, W, 2)
    return out.reshape(N, K, 2 * H, 2 * W)


def reference_forward(x_nchw, params):
    """Pure-JAX f32 reference (same math, different code path)."""
    h = jnp.transpose(x_nchw, (0, 2, 3, 1)).astype(jnp.float32)
    for w, b in params["convs"]:
        h = lax.conv_general_dilated(h, w, (1, 1), "SAME",
                                     dimension_numbers=("NHWC", "HWIO", "NHWC"))
        h = jnp.maximum(h + b, 0.0)
    wup, bup = params["deconv"]
    up = jnp.einsum("nijc,abco->niajbo", h, wup).reshape(N, 2 * H, 2 * W, COUT)
    up = jnp.maximum(up + bup, 0.0)
    wlog, blog = params["logits"]
    logits = jnp.einsum("nhwc,ck->nhwk", up, wlog) + blog
    return jnp.transpose(logits, (0, 3, 1, 2))


if __name__ == "__main__":
    key = jax.random.PRNGKey(0)
    keys = jax.random.split(key, 16)
    ki = 0

    params = {"convs": []}
    cin = CIN
    for _ in range(NUM_CONVS):
        w = jax.random.normal(keys[ki], (3, 3, cin, COUT), jnp.float32) * (0.1 / np.sqrt(cin)); ki += 1
        b = jax.random.normal(keys[ki], (COUT,), jnp.float32) * 0.01; ki += 1
        params["convs"].append((w, b))
        cin = COUT
    # ConvTranspose2d weight generated directly in (a, b, Cin, Cout) order.
    wup = jax.random.normal(keys[ki], (2, 2, COUT, COUT), jnp.float32) * 0.1; ki += 1
    bup = jax.random.normal(keys[ki], (COUT,), jnp.float32) * 0.01; ki += 1
    params["deconv"] = (wup, bup)
    wlog = jax.random.normal(keys[ki], (COUT, K), jnp.float32) * 0.1; ki += 1
    blog = jax.random.normal(keys[ki], (K,), jnp.float32) * 0.01; ki += 1
    params["logits"] = (wlog, blog)

    x = jax.random.normal(keys[ki], (N, CIN, H, W), jnp.float32)

    mask_pred = jax.block_until_ready(fcn_mask_head_forward(x, params))
    assert mask_pred.shape == (N, K, 2 * H, 2 * W), mask_pred.shape

    ref = reference_forward(x, params)
    np.testing.assert_allclose(np.asarray(mask_pred), np.asarray(ref),
                               rtol=2e-2, atol=2e-2)
    print("KERNEL_OK")
</pallas_src>

<mosaic_0001>
module attributes {stable_mosaic.version = 11 : i64} {
  func.func @_fcn_mask_head_kernel(%arg0: i32, %arg1: memref<1x32x128xbf16, #tpu.memory_space<vmem>>, %arg2: memref<2x32x32xbf16, #tpu.memory_space<vmem>>, %arg3: memref<3x128x256xbf16, #tpu.memory_space<vmem>>, %arg4: memref<1x256xf32, #tpu.memory_space<vmem>>, %arg5: memref<3x256x256xbf16, #tpu.memory_space<vmem>>, %arg6: memref<1x256xf32, #tpu.memory_space<vmem>>, %arg7: memref<3x256x256xbf16, #tpu.memory_space<vmem>>, %arg8: memref<1x256xf32, #tpu.memory_space<vmem>>, %arg9: memref<3x256x256xbf16, #tpu.memory_space<vmem>>, %arg10: memref<1x256xf32, #tpu.memory_space<vmem>>, %arg11: memref<256x1024xbf16, #tpu.memory_space<vmem>>, %arg12: memref<1x1024xf32, #tpu.memory_space<vmem>>, %arg13: memref<256x128xbf16, #tpu.memory_space<vmem>>, %arg14: memref<1x128xf32, #tpu.memory_space<vmem>>, %arg15: memref<1x4x32x128xf32, #tpu.memory_space<vmem>>) attributes {dimension_semantics = [#tpu.dimension_semantics<parallel>], iteration_bounds = array<i64: 1>, scalar_prefetch = 0 : i64, scratch_operands = 0 : i64, tpu.core_type = #tpu.core_type<tc>, window_params = [{transform_indices = @transform_0, window_bounds = array<i64: 1, 32, 128>}, {pipeline_mode = #tpu.pipeline_mode<synchronous>, transform_indices = @transform_1, window_bounds = array<i64: 2, 32, 32>}, {pipeline_mode = #tpu.pipeline_mode<synchronous>, transform_indices = @transform_2, window_bounds = array<i64: 3, 128, 256>}, {pipeline_mode = #tpu.pipeline_mode<synchronous>, transform_indices = @transform_3, window_bounds = array<i64: 1, 256>}, {pipeline_mode = #tpu.pipeline_mode<synchronous>, transform_indices = @transform_4, window_bounds = array<i64: 3, 256, 256>}, {pipeline_mode = #tpu.pipeline_mode<synchronous>, transform_indices = @transform_5, window_bounds = array<i64: 1, 256>}, {pipeline_mode = #tpu.pipeline_mode<synchronous>, transform_indices = @transform_6, window_bounds = array<i64: 3, 256, 256>}, {pipeline_mode = #tpu.pipeline_mode<synchronous>, transform_indices = @transform_7, window_bounds = array<i64: 1, 256>}, {pipeline_mode = #tpu.pipeline_mode<synchronous>, transform_indices = @transform_8, window_bounds = array<i64: 3, 256, 256>}, {pipeline_mode = #tpu.pipeline_mode<synchronous>, transform_indices = @transform_9, window_bounds = array<i64: 1, 256>}, {pipeline_mode = #tpu.pipeline_mode<synchronous>, transform_indices = @transform_10, window_bounds = array<i64: 256, 1024>}, {pipeline_mode = #tpu.pipeline_mode<synchronous>, transform_indices = @transform_11, window_bounds = array<i64: 1, 1024>}, {pipeline_mode = #tpu.pipeline_mode<synchronous>, transform_indices = @transform_12, window_bounds = array<i64: 256, 128>}, {pipeline_mode = #tpu.pipeline_mode<synchronous>, transform_indices = @transform_13, window_bounds = array<i64: 1, 128>}, {transform_indices = @transform_14, window_bounds = array<i64: 1, 4, 32, 128>}]} {
    %c0 = arith.constant 0 : index
    %c0_0 = arith.constant 0 : index
    %c0_1 = arith.constant 0 : index
    %0 = vector.load %arg2[%c0, %c0_0, %c0_1] : memref<2x32x32xbf16, #tpu.memory_space<vmem>>, vector<1x32x32xbf16>
    %1 = vector.shape_cast %0 : vector<1x32x32xbf16> to vector<32x32xbf16>
    %c1 = arith.constant 1 : index
    %c0_2 = arith.constant 0 : index
    %c0_3 = arith.constant 0 : index
    %2 = vector.load %arg2[%c1, %c0_2, %c0_3] : memref<2x32x32xbf16, #tpu.memory_space<vmem>>, vector<1x32x32xbf16>
    %3 = vector.shape_cast %2 : vector<1x32x32xbf16> to vector<32x32xbf16>
    %c0_4 = arith.constant 0 : index
    %c0_5 = arith.constant 0 : index
    %c0_6 = arith.constant 0 : index
    %4 = vector.load %arg1[%c0_4, %c0_5, %c0_6] : memref<1x32x128xbf16, #tpu.memory_space<vmem>>, vector<1x32x128xbf16>
    %5 = vector.shape_cast %4 : vector<1x32x128xbf16> to vector<32x128xbf16>
    %cst = arith.constant dense<0.000000e+00> : vector<32x128xf32>
    %6 = tpu.matmul %1, %5, %cst {dimension_numbers = #tpu.dot_dimension_numbers<[1], [0], [0], [1], [0, 0, 1, 1], [], []>} : vector<32x32xbf16>, vector<32x128xbf16>, vector<32x128xf32> -> vector<32x128xf32>
    %7 = arith.truncf %6 : vector<32x128xf32> to vector<32x128xbf16>
    %cst_7 = arith.constant dense<0.000000e+00> : vector<32x128xf32>
    %8 = tpu.matmul %3, %5, %cst_7 {dimension_numbers = #tpu.dot_dimension_numbers<[1], [0], [0], [1], [0, 0, 1, 1], [], []>} : vector<32x32xbf16>, vector<32x128xbf16>, vector<32x128xf32> -> vector<32x128xf32>
    %9 = arith.truncf %8 : vector<32x128xf32> to vector<32x128xbf16>
    %c0_8 = arith.constant 0 : index
    %c0_9 = arith.constant 0 : index
    %c0_10 = arith.constant 0 : index
    %10 = vector.load %arg3[%c0_8, %c0_9, %c0_10] : memref<3x128x256xbf16, #tpu.memory_space<vmem>>, vector<1x128x256xbf16>
    %11 = vector.shape_cast %10 : vector<1x128x256xbf16> to vector<128x256xbf16>
    %cst_11 = arith.constant dense<0.000000e+00> : vector<32x256xf32>
    %12 = tpu.matmul %7, %11, %cst_11 {dimension_numbers = #tpu.dot_dimension_numbers<[1], [0], [0], [1], [0, 0, 1, 1], [], []>} : vector<32x128xbf16>, vector<128x256xbf16>, vector<32x256xf32> -> vector<32x256xf32>
    %c1_12 = arith.constant 1 : index
    %c0_13 = arith.constant 0 : index
    %c0_14 = arith.constant 0 : index
    %13 = vector.load %arg3[%c1_12, %c0_13, %c0_14] : memref<3x128x256xbf16, #tpu.memory_space<vmem>>, vector<1x128x256xbf16>
    %14 = vector.shape_cast %13 : vector<1x128x256xbf16> to vector<128x256xbf16>
    %cst_15 = arith.constant dense<0.000000e+00> : vector<32x256xf32>
    %15 = tpu.matmul %5, %14, %cst_15 {dimension_numbers = #tpu.dot_dimension_numbers<[1], [0], [0], [1], [0, 0, 1, 1], [], []>} : vector<32x128xbf16>, vector<128x256xbf16>, vector<32x256xf32> -> vector<32x256xf32>
    %16 = arith.addf %12, %15 : vector<32x256xf32>
    %c2 = arith.constant 2 : index
    %c0_16 = arith.constant 0 : index
    %c0_17 = arith.constant 0 : index
    %17 = vector.load %arg3[%c2, %c0_16, %c0_17] : memref<3x128x256xbf16, #tpu.memory_space<vmem>>, vector<1x128x256xbf16>
    %18 = vector.shape_cast %17 : vector<1x128x256xbf16> to vector<128x256xbf16>
    %cst_18 = arith.constant dense<0.000000e+00> : vector<32x256xf32>
    %19 = tpu.matmul %9, %18, %cst_18 {dimension_numbers = #tpu.dot_dimension_numbers<[1], [0], [0], [1], [0, 0, 1, 1], [], []>} : vector<32x128xbf16>, vector<128x256xbf16>, vector<32x256xf32> -> vector<32x256xf32>
    %20 = arith.addf %16, %19 : vector<32x256xf32>
    %c0_19 = arith.constant 0 : index
    %c0_20 = arith.constant 0 : index
    %21 = vector.load %arg4[%c0_19, %c0_20] : memref<1x256xf32, #tpu.memory_space<vmem>>, vector<1x256xf32>
    %22 = vector.broadcast %21 : vector<1x256xf32> to vector<32x256xf32>
    %23 = arith.addf %20, %22 : vector<32x256xf32>
    %cst_21 = arith.constant 0.000000e+00 : f32
    %24 = vector.broadcast %cst_21 : f32 to vector<32x256xf32>
    %25 = arith.maximumf %23, %24 : vector<32x256xf32>
    %26 = arith.truncf %25 : vector<32x256xf32> to vector<32x256xbf16>
    %cst_22 = arith.constant dense<0.000000e+00> : vector<32x256xf32>
    %27 = tpu.matmul %1, %26, %cst_22 {dimension_numbers = #tpu.dot_dimension_numbers<[1], [0], [0], [1], [0, 0, 1, 1], [], []>} : vector<32x32xbf16>, vector<32x256xbf16>, vector<32x256xf32> -> vector<32x256xf32>
    %28 = arith.truncf %27 : vector<32x256xf32> to vector<32x256xbf16>
    %cst_23 = arith.constant dense<0.000000e+00> : vector<32x256xf32>
    %29 = tpu.matmul %3, %26, %cst_23 {dimension_numbers = #tpu.dot_dimension_numbers<[1], [0], [0], [1], [0, 0, 1, 1], [], []>} : vector<32x32xbf16>, vector<32x256xbf16>, vector<32x256xf32> -> vector<32x256xf32>
    %30 = arith.truncf %29 : vector<32x256xf32> to vector<32x256xbf16>
    %c0_24 = arith.constant 0 : index
    %c0_25 = arith.constant 0 : index
    %c0_26 = arith.constant 0 : index
    %31 = vector.load %arg5[%c0_24, %c0_25, %c0_26] : memref<3x256x256xbf16, #tpu.memory_space<vmem>>, vector<1x256x256xbf16>
    %32 = vector.shape_cast %31 : vector<1x256x256xbf16> to vector<256x256xbf16>
    %cst_27 = arith.constant dense<0.000000e+00> : vector<32x256xf32>
    %33 = tpu.matmul %28, %32, %cst_27 {dimension_numbers = #tpu.dot_dimension_numbers<[1], [0], [0], [1], [0, 0, 1, 1], [], []>} : vector<32x256xbf16>, vector<256x256xbf16>, vector<32x256xf32> -> vector<32x256xf32>
    %c1_28 = arith.constant 1 : index
    %c0_29 = arith.constant 0 : index
    %c0_30 = arith.constant 0 : index
    %34 = vector.load %arg5[%c1_28, %c0_29, %c0_30] : memref<3x256x256xbf16, #tpu.memory_space<vmem>>, vector<1x256x256xbf16>
    %35 = vector.shape_cast %34 : vector<1x256x256xbf16> to vector<256x256xbf16>
    %cst_31 = arith.constant dense<0.000000e+00> : vector<32x256xf32>
    %36 = tpu.matmul %26, %35, %cst_31 {dimension_numbers = #tpu.dot_dimension_numbers<[1], [0], [0], [1], [0, 0, 1, 1], [], []>} : vector<32x256xbf16>, vector<256x256xbf16>, vector<32x256xf32> -> vector<32x256xf32>
    %37 = arith.addf %33, %36 : vector<32x256xf32>
    %c2_32 = arith.constant 2 : index
    %c0_33 = arith.constant 0 : index
    %c0_34 = arith.constant 0 : index
    %38 = vector.load %arg5[%c2_32, %c0_33, %c0_34] : memref<3x256x256xbf16, #tpu.memory_space<vmem>>, vector<1x256x256xbf16>
    %39 = vector.shape_cast %38 : vector<1x256x256xbf16> to vector<256x256xbf16>
    %cst_35 = arith.constant dense<0.000000e+00> : vector<32x256xf32>
    %40 = tpu.matmul %30, %39, %cst_35 {dimension_numbers = #tpu.dot_dimension_numbers<[1], [0], [0], [1], [0, 0, 1, 1], [], []>} : vector<32x256xbf16>, vector<256x256xbf16>, vector<32x256xf32> -> vector<32x256xf32>
    %41 = arith.addf %37, %40 : vector<32x256xf32>
    %c0_36 = arith.constant 0 : index
    %c0_37 = arith.constant 0 : index
    %42 = vector.load %arg6[%c0_36, %c0_37] : memref<1x256xf32, #tpu.memory_space<vmem>>, vector<1x256xf32>
    %43 = vector.broadcast %42 : vector<1x256xf32> to vector<32x256xf32>
    %44 = arith.addf %41, %43 : vector<32x256xf32>
    %cst_38 = arith.constant 0.000000e+00 : f32
    %45 = vector.broadcast %cst_38 : f32 to vector<32x256xf32>
    %46 = arith.maximumf %44, %45 : vector<32x256xf32>
    %47 = arith.truncf %46 : vector<32x256xf32> to vector<32x256xbf16>
    %cst_39 = arith.constant dense<0.000000e+00> : vector<32x256xf32>
    %48 = tpu.matmul %1, %47, %cst_39 {dimension_numbers = #tpu.dot_dimension_numbers<[1], [0], [0], [1], [0, 0, 1, 1], [], []>} : vector<32x32xbf16>, vector<32x256xbf16>, vector<32x256xf32> -> vector<32x256xf32>
    %49 = arith.truncf %48 : vector<32x256xf32> to vector<32x256xbf16>
    %cst_40 = arith.constant dense<0.000000e+00> : vector<32x256xf32>
    %50 = tpu.matmul %3, %47, %cst_40 {dimension_numbers = #tpu.dot_dimension_numbers<[1], [0], [0], [1], [0, 0, 1, 1], [], []>} : vector<32x32xbf16>, vector<32x256xbf16>, vector<32x256xf32> -> vector<32x256xf32>
    %51 = arith.truncf %50 : vector<32x256xf32> to vector<32x256xbf16>
    %c0_41 = arith.constant 0 : index
    %c0_42 = arith.constant 0 : index
    %c0_43 = arith.constant 0 : index
    %52 = vector.load %arg7[%c0_41, %c0_42, %c0_43] : memref<3x256x256xbf16, #tpu.memory_space<vmem>>, vector<1x256x256xbf16>
    %53 = vector.shape_cast %52 : vector<1x256x256xbf16> to vector<256x256xbf16>
    %cst_44 = arith.constant dense<0.000000e+00> : vector<32x256xf32>
    %54 = tpu.matmul %49, %53, %cst_44 {dimension_numbers = #tpu.dot_dimension_numbers<[1], [0], [0], [1], [0, 0, 1, 1], [], []>} : vector<32x256xbf16>, vector<256x256xbf16>, vector<32x256xf32> -> vector<32x256xf32>
    %c1_45 = arith.constant 1 : index
    %c0_46 = arith.constant 0 : index
    %c0_47 = arith.constant 0 : index
    %55 = vector.load %arg7[%c1_45, %c0_46, %c0_47] : memref<3x256x256xbf16, #tpu.memory_space<vmem>>, vector<1x256x256xbf16>
    %56 = vector.shape_cast %55 : vector<1x256x256xbf16> to vector<256x256xbf16>
    %cst_48 = arith.constant dense<0.000000e+00> : vector<32x256xf32>
    %57 = tpu.matmul %47, %56, %cst_48 {dimension_numbers = #tpu.dot_dimension_numbers<[1], [0], [0], [1], [0, 0, 1, 1], [], []>} : vector<32x256xbf16>, vector<256x256xbf16>, vector<32x256xf32> -> vector<32x256xf32>
    %58 = arith.addf %54, %57 : vector<32x256xf32>
    %c2_49 = arith.constant 2 : index
    %c0_50 = arith.constant 0 : index
    %c0_51 = arith.constant 0 : index
    %59 = vector.load %arg7[%c2_49, %c0_50, %c0_51] : memref<3x256x256xbf16, #tpu.memory_space<vmem>>, vector<1x256x256xbf16>
    %60 = vector.shape_cast %59 : vector<1x256x256xbf16> to vector<256x256xbf16>
    %cst_52 = arith.constant dense<0.000000e+00> : vector<32x256xf32>
    %61 = tpu.matmul %51, %60, %cst_52 {dimension_numbers = #tpu.dot_dimension_numbers<[1], [0], [0], [1], [0, 0, 1, 1], [], []>} : vector<32x256xbf16>, vector<256x256xbf16>, vector<32x256xf32> -> vector<32x256xf32>
    %62 = arith.addf %58, %61 : vector<32x256xf32>
    %c0_53 = arith.constant 0 : index
    %c0_54 = arith.constant 0 : index
    %63 = vector.load %arg8[%c0_53, %c0_54] : memref<1x256xf32, #tpu.memory_space<vmem>>, vector<1x256xf32>
    %64 = vector.broadcast %63 : vector<1x256xf32> to vector<32x256xf32>
    %65 = arith.addf %62, %64 : vector<32x256xf32>
    %cst_55 = arith.constant 0.000000e+00 : f32
    %66 = vector.broadcast %cst_55 : f32 to vector<32x256xf32>
    %67 = arith.maximumf %65, %66 : vector<32x256xf32>
    %68 = arith.truncf %67 : vector<32x256xf32> to vector<32x256xbf16>
    %cst_56 = arith.constant dense<0.000000e+00> : vector<32x256xf32>
    %69 = tpu.matmul %1, %68, %cst_56 {dimension_numbers = #tpu.dot_dimension_numbers<[1], [0], [0], [1], [0, 0, 1, 1], [], []>} : vector<32x32xbf16>, vector<32x256xbf16>, vector<32x256xf32> -> vector<32x256xf32>
    %70 = arith.truncf %69 : vector<32x256xf32> to vector<32x256xbf16>
    %cst_57 = arith.constant dense<0.000000e+00> : vector<32x256xf32>
    %71 = tpu.matmul %3, %68, %cst_57 {dimension_numbers = #tpu.dot_dimension_numbers<[1], [0], [0], [1], [0, 0, 1, 1], [], []>} : vector<32x32xbf16>, vector<32x256xbf16>, vector<32x256xf32> -> vector<32x256xf32>
    %72 = arith.truncf %71 : vector<32x256xf32> to vector<32x256xbf16>
    %c0_58 = arith.constant 0 : index
    %c0_59 = arith.constant 0 : index
    %c0_60 = arith.constant 0 : index
    %73 = vector.load %arg9[%c0_58, %c0_59, %c0_60] : memref<3x256x256xbf16, #tpu.memory_space<vmem>>, vector<1x256x256xbf16>
    %74 = vector.shape_cast %73 : vector<1x256x256xbf16> to vector<256x256xbf16>
    %cst_61 = arith.constant dense<0.000000e+00> : vector<32x256xf32>
    %75 = tpu.matmul %70, %74, %cst_61 {dimension_numbers = #tpu.dot_dimension_numbers<[1], [0], [0], [1], [0, 0, 1, 1], [], []>} : vector<32x256xbf16>, vector<256x256xbf16>, vector<32x256xf32> -> vector<32x256xf32>
    %c1_62 = arith.constant 1 : index
    %c0_63 = arith.constant 0 : index
    %c0_64 = arith.constant 0 : index
    %76 = vector.load %arg9[%c1_62, %c0_63, %c0_64] : memref<3x256x256xbf16, #tpu.memory_space<vmem>>, vector<1x256x256xbf16>
    %77 = vector.shape_cast %76 : vector<1x256x256xbf16> to vector<256x256xbf16>
    %cst_65 = arith.constant dense<0.000000e+00> : vector<32x256xf32>
    %78 = tpu.matmul %68, %77, %cst_65 {dimension_numbers = #tpu.dot_dimension_numbers<[1], [0], [0], [1], [0, 0, 1, 1], [], []>} : vector<32x256xbf16>, vector<256x256xbf16>, vector<32x256xf32> -> vector<32x256xf32>
    %79 = arith.addf %75, %78 : vector<32x256xf32>
    %c2_66 = arith.constant 2 : index
    %c0_67 = arith.constant 0 : index
    %c0_68 = arith.constant 0 : index
    %80 = vector.load %arg9[%c2_66, %c0_67, %c0_68] : memref<3x256x256xbf16, #tpu.memory_space<vmem>>, vector<1x256x256xbf16>
    %81 = vector.shape_cast %80 : vector<1x256x256xbf16> to vector<256x256xbf16>
    %cst_69 = arith.constant dense<0.000000e+00> : vector<32x256xf32>
    %82 = tpu.matmul %72, %81, %cst_69 {dimension_numbers = #tpu.dot_dimension_numbers<[1], [0], [0], [1], [0, 0, 1, 1], [], []>} : vector<32x256xbf16>, vector<256x256xbf16>, vector<32x256xf32> -> vector<32x256xf32>
    %83 = arith.addf %79, %82 : vector<32x256xf32>
    %c0_70 = arith.constant 0 : index
    %c0_71 = arith.constant 0 : index
    %84 = vector.load %arg10[%c0_70, %c0_71] : memref<1x256xf32, #tpu.memory_space<vmem>>, vector<1x256xf32>
    %85 = vector.broadcast %84 : vector<1x256xf32> to vector<32x256xf32>
    %86 = arith.addf %83, %85 : vector<32x256xf32>
    %cst_72 = arith.constant 0.000000e+00 : f32
    %87 = vector.broadcast %cst_72 : f32 to vector<32x256xf32>
    %88 = arith.maximumf %86, %87 : vector<32x256xf32>
    %89 = arith.truncf %88 : vector<32x256xf32> to vector<32x256xbf16>
    %c0_73 = arith.constant 0 : index
    %c0_74 = arith.constant 0 : index
    %90 = vector.load %arg11[%c0_73, %c0_74] : memref<256x1024xbf16, #tpu.memory_space<vmem>>, vector<256x1024xbf16>
    %cst_75 = arith.constant dense<0.000000e+00> : vector<32x1024xf32>
    %91 = tpu.matmul %89, %90, %cst_75 {dimension_numbers = #tpu.dot_dimension_numbers<[1], [0], [0], [1], [0, 0, 1, 1], [], []>} : vector<32x256xbf16>, vector<256x1024xbf16>, vector<32x1024xf32> -> vector<32x1024xf32>
    %c0_76 = arith.constant 0 : index
    %c0_77 = arith.constant 0 : index
    %92 = vector.load %arg12[%c0_76, %c0_77] : memref<1x1024xf32, #tpu.memory_space<vmem>>, vector<1x1024xf32>
    %93 = vector.broadcast %92 : vector<1x1024xf32> to vector<32x1024xf32>
    %94 = arith.addf %91, %93 : vector<32x1024xf32>
    %cst_78 = arith.constant 0.000000e+00 : f32
    %95 = vector.broadcast %cst_78 : f32 to vector<32x1024xf32>
    %96 = arith.maximumf %94, %95 : vector<32x1024xf32>
    %97 = arith.truncf %96 : vector<32x1024xf32> to vector<32x1024xbf16>
    %c0_79 = arith.constant 0 : index
    %c0_80 = arith.constant 0 : index
    %98 = vector.load %arg13[%c0_79, %c0_80] : memref<256x128xbf16, #tpu.memory_space<vmem>>, vector<256x128xbf16>
    %c0_81 = arith.constant 0 : index
    %c0_82 = arith.constant 0 : index
    %99 = vector.load %arg14[%c0_81, %c0_82] : memref<1x128xf32, #tpu.memory_space<vmem>>, vector<1x128xf32>
    %100 = vector.extract_strided_slice %97 {offsets = [0, 0], sizes = [32, 256], strides = [1, 1]} : vector<32x1024xbf16> to vector<32x256xbf16>
    %cst_83 = arith.constant dense<0.000000e+00> : vector<32x128xf32>
    %101 = tpu.matmul %100, %98, %cst_83 {dimension_numbers = #tpu.dot_dimension_numbers<[1], [0], [0], [1], [0, 0, 1, 1], [], []>} : vector<32x256xbf16>, vector<256x128xbf16>, vector<32x128xf32> -> vector<32x128xf32>
    %102 = vector.broadcast %99 : vector<1x128xf32> to vector<32x128xf32>
    %103 = arith.addf %101, %102 : vector<32x128xf32>
    %c0_84 = arith.constant 0 : index
    %c0_85 = arith.constant 0 : index
    %c0_86 = arith.constant 0 : index
    %c0_87 = arith.constant 0 : index
    %104 = vector.load %arg15[%c0_84, %c0_85, %c0_86, %c0_87] : memref<1x4x32x128xf32, #tpu.memory_space<vmem>>, vector<1x1x32x128xf32>
    %105 = vector.shape_cast %104 : vector<1x1x32x128xf32> to vector<32x128xf32>
    %106 = vector.shape_cast %103 : vector<32x128xf32> to vector<1x1x32x128xf32>
    tpu.vector_store %arg15[%c0_84, %c0_85, %c0_86, %c0_87], %106 {strides = array<i32>} : memref<1x4x32x128xf32, #tpu.memory_space<vmem>>, vector<1x1x32x128xf32>,
    %107 = vector.extract_strided_slice %97 {offsets = [0, 256], sizes = [32, 256], strides = [1, 1]} : vector<32x1024xbf16> to vector<32x256xbf16>
    %cst_88 = arith.constant dense<0.000000e+00> : vector<32x128xf32>
    %108 = tpu.matmul %107, %98, %cst_88 {dimension_numbers = #tpu.dot_dimension_numbers<[1], [0], [0], [1], [0, 0, 1, 1], [], []>} : vector<32x256xbf16>, vector<256x128xbf16>, vector<32x128xf32> -> vector<32x128xf32>
    %109 = vector.broadcast %99 : vector<1x128xf32> to vector<32x128xf32>
    %110 = arith.addf %108, %109 : vector<32x128xf32>
    %c0_89 = arith.constant 0 : index
    %c1_90 = arith.constant 1 : index
    %c0_91 = arith.constant 0 : index
    %c0_92 = arith.constant 0 : index
    %111 = vector.load %arg15[%c0_89, %c1_90, %c0_91, %c0_92] : memref<1x4x32x128xf32, #tpu.memory_space<vmem>>, vector<1x1x32x128xf32>
    %112 = vector.shape_cast %111 : vector<1x1x32x128xf32> to vector<32x128xf32>
    %113 = vector.shape_cast %110 : vector<32x128xf32> to vector<1x1x32x128xf32>
    tpu.vector_store %arg15[%c0_89, %c1_90, %c0_91, %c0_92], %113 {strides = array<i32>} : memref<1x4x32x128xf32, #tpu.memory_space<vmem>>, vector<1x1x32x128xf32>,
    %114 = vector.extract_strided_slice %97 {offsets = [0, 512], sizes = [32, 256], strides = [1, 1]} : vector<32x1024xbf16> to vector<32x256xbf16>
    %cst_93 = arith.constant dense<0.000000e+00> : vector<32x128xf32>
    %115 = tpu.matmul %114, %98, %cst_93 {dimension_numbers = #tpu.dot_dimension_numbers<[1], [0], [0], [1], [0, 0, 1, 1], [], []>} : vector<32x256xbf16>, vector<256x128xbf16>, vector<32x128xf32> -> vector<32x128xf32>
    %116 = vector.broadcast %99 : vector<1x128xf32> to vector<32x128xf32>
    %117 = arith.addf %115, %116 : vector<32x128xf32>
    %c0_94 = arith.constant 0 : index
    %c2_95 = arith.constant 2 : index
    %c0_96 = arith.constant 0 : index
    %c0_97 = arith.constant 0 : index
    %118 = vector.load %arg15[%c0_94, %c2_95, %c0_96, %c0_97] : memref<1x4x32x128xf32, #tpu.memory_space<vmem>>, vector<1x1x32x128xf32>
    %119 = vector.shape_cast %118 : vector<1x1x32x128xf32> to vector<32x128xf32>
    %120 = vector.shape_cast %117 : vector<32x128xf32> to vector<1x1x32x128xf32>
    tpu.vector_store %arg15[%c0_94, %c2_95, %c0_96, %c0_97], %120 {strides = array<i32>} : memref<1x4x32x128xf32, #tpu.memory_space<vmem>>, vector<1x1x32x128xf32>,
    %121 = vector.extract_strided_slice %97 {offsets = [0, 768], sizes = [32, 256], strides = [1, 1]} : vector<32x1024xbf16> to vector<32x256xbf16>
    %cst_98 = arith.constant dense<0.000000e+00> : vector<32x128xf32>
    %122 = tpu.matmul %121, %98, %cst_98 {dimension_numbers = #tpu.dot_dimension_numbers<[1], [0], [0], [1], [0, 0, 1, 1], [], []>} : vector<32x256xbf16>, vector<256x128xbf16>, vector<32x128xf32> -> vector<32x128xf32>
    %123 = vector.broadcast %99 : vector<1x128xf32> to vector<32x128xf32>
    %124 = arith.addf %122, %123 : vector<32x128xf32>
    %c0_99 = arith.constant 0 : index
    %c3 = arith.constant 3 : index
    %c0_100 = arith.constant 0 : index
    %c0_101 = arith.constant 0 : index
    %125 = vector.load %arg15[%c0_99, %c3, %c0_100, %c0_101] : memref<1x4x32x128xf32, #tpu.memory_space<vmem>>, vector<1x1x32x128xf32>
    %126 = vector.shape_cast %125 : vector<1x1x32x128xf32> to vector<32x128xf32>
    %127 = vector.shape_cast %124 : vector<32x128xf32> to vector<1x1x32x128xf32>
    tpu.vector_store %arg15[%c0_99, %c3, %c0_100, %c0_101], %127 {strides = array<i32>} : memref<1x4x32x128xf32, #tpu.memory_space<vmem>>, vector<1x1x32x128xf32>,
    return
  }
  func.func @transform_0(%arg0: i32) -> (i32, i32, i32) {
    %c0_i32 = arith.constant 0 : i32
    %c0_i32_0 = arith.constant 0 : i32
    %c0_i32_1 = arith.constant 0 : i32
    return %arg0, %c0_i32, %c0_i32_0 : i32, i32, i32
  }
  func.func @transform_1(%arg0: i32) -> (i32, i32, i32) {
    %c0_i32 = arith.constant 0 : i32
    %c0_i32_0 = arith.constant 0 : i32
    %c0_i32_1 = arith.constant 0 : i32
    %c0_i32_2 = arith.constant 0 : i32
    return %c0_i32, %c0_i32_0, %c0_i32_1 : i32, i32, i32
  }
  func.func @transform_2(%arg0: i32) -> (i32, i32, i32) {
    %c0_i32 = arith.constant 0 : i32
    %c0_i32_0 = arith.constant 0 : i32
    %c0_i32_1 = arith.constant 0 : i32
    %c0_i32_2 = arith.constant 0 : i32
    return %c0_i32, %c0_i32_0, %c0_i32_1 : i32, i32, i32
  }
  func.func @transform_3(%arg0: i32) -> (i32, i32) {
    %c0_i32 = arith.constant 0 : i32
    %c0_i32_0 = arith.constant 0 : i32
    %c0_i32_1 = arith.constant 0 : i32
    return %c0_i32, %c0_i32_0 : i32, i32
  }
  func.func @transform_4(%arg0: i32) -> (i32, i32, i32) {
    %c0_i32 = arith.constant 0 : i32
    %c0_i32_0 = arith.constant 0 : i32
    %c0_i32_1 = arith.constant 0 : i32
    %c0_i32_2 = arith.constant 0 : i32
    return %c0_i32, %c0_i32_0, %c0_i32_1 : i32, i32, i32
  }
  func.func @transform_5(%arg0: i32) -> (i32, i32) {
    %c0_i32 = arith.constant 0 : i32
    %c0_i32_0 = arith.constant 0 : i32
    %c0_i32_1 = arith.constant 0 : i32
    return %c0_i32, %c0_i32_0 : i32, i32
  }
  func.func @transform_6(%arg0: i32) -> (i32, i32, i32) {
    %c0_i32 = arith.constant 0 : i32
    %c0_i32_0 = arith.constant 0 : i32
    %c0_i32_1 = arith.constant 0 : i32
    %c0_i32_2 = arith.constant 0 : i32
    return %c0_i32, %c0_i32_0, %c0_i32_1 : i32, i32, i32
  }
  func.func @transform_7(%arg0: i32) -> (i32, i32) {
    %c0_i32 = arith.constant 0 : i32
    %c0_i32_0 = arith.constant 0 : i32
    %c0_i32_1 = arith.constant 0 : i32
    return %c0_i32, %c0_i32_0 : i32, i32
  }
  func.func @transform_8(%arg0: i32) -> (i32, i32, i32) {
    %c0_i32 = arith.constant 0 : i32
    %c0_i32_0 = arith.constant 0 : i32
    %c0_i32_1 = arith.constant 0 : i32
    %c0_i32_2 = arith.constant 0 : i32
    return %c0_i32, %c0_i32_0, %c0_i32_1 : i32, i32, i32
  }
  func.func @transform_9(%arg0: i32) -> (i32, i32) {
    %c0_i32 = arith.constant 0 : i32
    %c0_i32_0 = arith.constant 0 : i32
    %c0_i32_1 = arith.constant 0 : i32
    return %c0_i32, %c0_i32_0 : i32, i32
  }
  func.func @transform_10(%arg0: i32) -> (i32, i32) {
    %c0_i32 = arith.constant 0 : i32
    %c0_i32_0 = arith.constant 0 : i32
    %c0_i32_1 = arith.constant 0 : i32
    return %c0_i32, %c0_i32_0 : i32, i32
  }
  func.func @transform_11(%arg0: i32) -> (i32, i32) {
    %c0_i32 = arith.constant 0 : i32
    %c0_i32_0 = arith.constant 0 : i32
    %c0_i32_1 = arith.constant 0 : i32
    return %c0_i32, %c0_i32_0 : i32, i32
  }
  func.func @transform_12(%arg0: i32) -> (i32, i32) {
    %c0_i32 = arith.constant 0 : i32
    %c0_i32_0 = arith.constant 0 : i32
    %c0_i32_1 = arith.constant 0 : i32
    return %c0_i32, %c0_i32_0 : i32, i32
  }
  func.func @transform_13(%arg0: i32) -> (i32, i32) {
    %c0_i32 = arith.constant 0 : i32
    %c0_i32_0 = arith.constant 0 : i32
    %c0_i32_1 = arith.constant 0 : i32
    return %c0_i32, %c0_i32_0 : i32, i32
  }
  func.func @transform_14(%arg0: i32) -> (i32, i32, i32, i32) {
    %c0_i32 = arith.constant 0 : i32
    %c0_i32_0 = arith.constant 0 : i32
    %c0_i32_1 = arith.constant 0 : i32
    %c0_i32_2 = arith.constant 0 : i32
    return %arg0, %c0_i32, %c0_i32_0, %c0_i32_1 : i32, i32, i32, i32
  }
}

</mosaic_0001>

<llo_original>
// kernel: tpu_custom_call.1
$region0: #{tpu_custom_call.1}
  #allocation0 [shape = 'u32[]', space=smem, size = 0x4, offset = 0x4, fixed_abs, tag = 'smem constant byte address 0x4 - core index']
  #allocation1 [shape = 'u32[72,128]{1,0:T(1,128)}', space=vmem, size = 0x9000, scoped, tag = 'internal scratch']
  %s0 = inlined_call_operand.hbm [shape: bf16[1,32,128], index: 0, kind: input, shape index: {}]
  %s1 = inlined_call_operand.hbm [shape: bf16[2,32,32], index: 1, kind: input, shape index: {}]
  %s2 = inlined_call_operand.hbm [shape: bf16[3,128,256], index: 2, kind: input, shape index: {}]
  %s3 = inlined_call_operand.vmem [shape: f32[1,256], index: 3, kind: input, shape index: {}]
  %s4 = inlined_call_operand.hbm [shape: bf16[3,256,256], index: 4, kind: input, shape index: {}]
  %s5 = inlined_call_operand.hbm [shape: f32[1,256], index: 5, kind: input, shape index: {}]
  %s6 = inlined_call_operand.hbm [shape: bf16[3,256,256], index: 6, kind: input, shape index: {}]
  %s7 = inlined_call_operand.hbm [shape: f32[1,256], index: 7, kind: input, shape index: {}]
  %s8 = inlined_call_operand.hbm [shape: bf16[3,256,256], index: 8, kind: input, shape index: {}]
  %s9 = inlined_call_operand.hbm [shape: f32[1,256], index: 9, kind: input, shape index: {}]
  %s10 = inlined_call_operand.hbm [shape: bf16[256,1024], index: 10, kind: input, shape index: {}]
  %s11 = inlined_call_operand.vmem [shape: f32[1,1024], index: 11, kind: input, shape index: {}]
  %s12 = inlined_call_operand.hbm [shape: bf16[256,128], index: 12, kind: input, shape index: {}]
  %s13 = inlined_call_operand.vmem [shape: f32[1,128], index: 13, kind: input, shape index: {}]
  %s14 = inlined_call_operand.hbm [shape: f32[1,4,32,128], index: 14, kind: output, shape index: {}]
  %s15 = sld [smem:[#allocation0]]
  $region110: #{tpu_custom_call.1} parent=0
    _
  %s17 = ssub.s32 1, %s15
  %s18 = scalar_select 0, %s17, %s15
  $region1: #{tpu_custom_call.1} parent=0
    #allocation2 [shape = 'u8[8192]{0}', space=vmem, size = 0x2000, scoped, tag = 'input window, operand 0, single buffered']
    #allocation3 [shape = 's32[1]{0}', space=sflag, size = 0x4, scoped, tag = 'scoped memory for tpu_custom_call.1']
    #allocation4 [shape = 's32[1]{0}', space=sflag, size = 0x4, scoped, tag = 'scoped memory for tpu_custom_call.1']
    #allocation5 [shape = 'u8[16384]{0}', space=vmem, size = 0x4000, scoped, tag = 'input window, operand 1, single buffered']
    #allocation6 [shape = 's32[1]{0}', space=sflag, size = 0x4, scoped, tag = 'scoped memory for tpu_custom_call.1']
    #allocation7 [shape = 'u8[196608]{0}', space=vmem, size = 0x30000, scoped, tag = 'input window, operand 2, single buffered']
    #allocation8 [shape = 'u8[393216]{0}', space=vmem, size = 0x60000, scoped, tag = 'input window, operand 4, single buffered']
    #allocation9 [shape = 's32[1]{0}', space=sflag, size = 0x4, scoped, tag = 'scoped memory for tpu_custom_call.1']
    #allocation10 [shape = 'u8[1024]{0}', space=vmem, size = 0x400, scoped, tag = 'input window, operand 5, single buffered']
    #allocation11 [shape = 'u8[393216]{0}', space=vmem, size = 0x60000, scoped, tag = 'input window, operand 6, single buffered']
    #allocation12 [shape = 's32[1]{0}', space=sflag, size = 0x4, scoped, tag = 'scoped memory for tpu_custom_call.1']
    #allocation13 [shape = 'u8[1024]{0}', space=vmem, size = 0x400, scoped, tag = 'input window, operand 7, single buffered']
    #allocation14 [shape = 'u8[393216]{0}', space=vmem, size = 0x60000, scoped, tag = 'input window, operand 8, single buffered']
    #allocation15 [shape = 's32[1]{0}', space=sflag, size = 0x4, scoped, tag = 'scoped memory for tpu_custom_call.1']
    #allocation16 [shape = 'u8[1024]{0}', space=vmem, size = 0x400, scoped, tag = 'input window, operand 9, single buffered']
    #allocation17 [shape = 'u8[524288]{0}', space=vmem, size = 0x80000, scoped, tag = 'input window, operand 10, single buffered']
    #allocation18 [shape = 's32[1]{0}', space=sflag, size = 0x4, scoped, tag = 'scoped memory for tpu_custom_call.1']
    #allocation19 [shape = 'u8[65536]{0}', space=vmem, size = 0x10000, scoped, tag = 'input window, operand 12, single buffered']
    #allocation20 [shape = 'u8[65536]{0}', space=vmem, size = 0x10000, scoped, tag = 'output window, operand 0, single buffered']
    %19 = vsyncpa [#allocation3], 0
    %20 = vsyncpa [#allocation6], 0
    %21 = vsyncpa [#allocation9], 0
    %22 = vsyncpa [#allocation12], 0
    %23 = vsyncpa [#allocation15], 0
    %24 = vsyncpa [#allocation18], 0
    %25 = vsyncpa [#allocation4], 0
    // Predicated region
    $region2: #{tpu_custom_call.1} parent=1 // pred_check
      _
    $region3: #{tpu_custom_call.1} parent=1 // pred_check_branch
      %27 = sbr.rel (0) target = $region5
    $region4: #{tpu_custom_call.1} parent=1 // pred_region
      %29 = vsyncadd [#allocation3], 0
      %s30 = sshll.u32 %s0, 4
      %s31 = int_to_ptr.hbm [resolvable:$true] %s30
      %s32 = sshll.u32 [#allocation2], 4
      %s33 = int_to_ptr.vmem [resolvable:$true] %s32
      %38 = dma.hbm_to_vmem [thread:$0]  %s31, 256, %s33, [#allocation3], 64, 64, 4
    $region5: #{tpu_custom_call.1} parent=1 // pred_fallthru
      _
    // Predicated region
    $region6: #{tpu_custom_call.1} parent=1 // pred_check
      _
    $region7: #{tpu_custom_call.1} parent=1 // pred_check_branch
      %40 = sbr.rel (0) target = $region9
    $region8: #{tpu_custom_call.1} parent=1 // pred_region
      %42 = vsyncadd [#allocation6], 0
      %s43 = sshll.u32 %s1, 4
      %s44 = int_to_ptr.hbm [resolvable:$true] %s43
      %s45 = sshll.u32 [#allocation5], 4
      %s46 = int_to_ptr.vmem [resolvable:$true] %s45
      %51 = dma.hbm_to_vmem [thread:$0]  %s44, 512, %s46, [#allocation6], 64, 64, 4
    $region9: #{tpu_custom_call.1} parent=1 // pred_fallthru
      _
    // Predicated region
    $region10: #{tpu_custom_call.1} parent=1 // pred_check
      _
    $region11: #{tpu_custom_call.1} parent=1 // pred_check_branch
      %53 = sbr.rel (0) target = $region13
    $region12: #{tpu_custom_call.1} parent=1 // pred_region
      %55 = vsyncadd [#allocation6], 0
      %s56 = sshll.u32 %s2, 4
      %s57 = int_to_ptr.hbm [resolvable:$true] %s56
      %s58 = sshll.u32 [#allocation7], 4
      %s59 = int_to_ptr.vmem [resolvable:$true] %s58
      %64 = dma.hbm_to_vmem [thread:$0]  %s57, 6144, %s59, [#allocation6], 128, 128, 8
    $region13: #{tpu_custom_call.1} parent=1 // pred_fallthru
      _
    // Predicated region
    $region14: #{tpu_custom_call.1} parent=1 // pred_check
      _
    $region15: #{tpu_custom_call.1} parent=1 // pred_check_branch
      %66 = sbr.rel (0) target = $region17
    $region16: #{tpu_custom_call.1} parent=1 // pred_region
      _
    $region17: #{tpu_custom_call.1} parent=1 // pred_fallthru
      _
    // Predicated region
    $region18: #{tpu_custom_call.1} parent=1 // pred_check
      _
    $region19: #{tpu_custom_call.1} parent=1 // pred_check_branch
      %68 = sbr.rel (0) target = $region21
    $region20: #{tpu_custom_call.1} parent=1 // pred_region
      %70 = vsyncadd [#allocation9], 0
      %s71 = sshll.u32 %s4, 4
      %s72 = int_to_ptr.hbm [resolvable:$true] %s71
      %s73 = sshll.u32 [#allocation8], 4
      %s74 = int_to_ptr.vmem [resolvable:$true] %s73
      %79 = dma.hbm_to_vmem [thread:$0]  %s72, 12288, %s74, [#allocation9], 128, 128, 8
    $region21: #{tpu_custom_call.1} parent=1 // pred_fallthru
      _
    // Predicated region
    $region22: #{tpu_custom_call.1} parent=1 // pred_check
      _
    $region23: #{tpu_custom_call.1} parent=1 // pred_check_branch
      %81 = sbr.rel (0) target = $region25
    $region24: #{tpu_custom_call.1} parent=1 // pred_region
      %83 = vsyncadd [#allocation9], 0
      %s85 = sshll.u32 %s5, 4
      %s86 = int_to_ptr.hbm [resolvable:$true] %s85
      %s87 = sshll.u32 [#allocation10], 4
      %s88 = int_to_ptr.vmem [resolvable:$true] %s87
      %90 = dma.hbm_to_vmem [thread:$0]  %s86, 32, %s88, [#allocation9]
    $region25: #{tpu_custom_call.1} parent=1 // pred_fallthru
      _
    // Predicated region
    $region26: #{tpu_custom_call.1} parent=1 // pred_check
      _
    $region27: #{tpu_custom_call.1} parent=1 // pred_check_branch
      %92 = sbr.rel (0) target = $region29
    $region28: #{tpu_custom_call.1} parent=1 // pred_region
      %94 = vsyncadd [#allocation12], 0
      %s95 = sshll.u32 %s6, 4
      %s96 = int_to_ptr.hbm [resolvable:$true] %s95
      %s97 = sshll.u32 [#allocation11], 4
      %s98 = int_to_ptr.vmem [resolvable:$true] %s97
      %103 = dma.hbm_to_vmem [thread:$0]  %s96, 12288, %s98, [#allocation12], 128, 128, 8
    $region29: #{tpu_custom_call.1} parent=1 // pred_fallthru
      _
    // Predicated region
    $region30: #{tpu_custom_call.1} parent=1 // pred_check
      _
    $region31: #{tpu_custom_call.1} parent=1 // pred_check_branch
      %105 = sbr.rel (0) target = $region33
    $region32: #{tpu_custom_call.1} parent=1 // pred_region
      %107 = vsyncadd [#allocation12], 0
      %s109 = sshll.u32 %s7, 4
      %s110 = int_to_ptr.hbm [resolvable:$true] %s109
      %s111 = sshll.u32 [#allocation13], 4
      %s112 = int_to_ptr.vmem [resolvable:$true] %s111
      %114 = dma.hbm_to_vmem [thread:$0]  %s110, 32, %s112, [#allocation12]
    $region33: #{tpu_custom_call.1} parent=1 // pred_fallthru
      _
    // Predicated region
    $region34: #{tpu_custom_call.1} parent=1 // pred_check
      _
    $region35: #{tpu_custom_call.1} parent=1 // pred_check_branch
      %116 = sbr.rel (0) target = $region37
    $region36: #{tpu_custom_call.1} parent=1 // pred_region
      %118 = vsyncadd [#allocation15], 0
      %s119 = sshll.u32 %s8, 4
      %s120 = int_to_ptr.hbm [resolvable:$true] %s119
      %s121 = sshll.u32 [#allocation14], 4
      %s122 = int_to_ptr.vmem [resolvable:$true] %s121
      %127 = dma.hbm_to_vmem [thread:$0]  %s120, 12288, %s122, [#allocation15], 128, 128, 8
    $region37: #{tpu_custom_call.1} parent=1 // pred_fallthru
      _
    // Predicated region
    $region38: #{tpu_custom_call.1} parent=1 // pred_check
      _
    $region39: #{tpu_custom_call.1} parent=1 // pred_check_branch
      %129 = sbr.rel (0) target = $region41
    $region40: #{tpu_custom_call.1} parent=1 // pred_region
      %131 = vsyncadd [#allocation15], 0
      %s133 = sshll.u32 %s9, 4
      %s134 = int_to_ptr.hbm [resolvable:$true] %s133
      %s135 = sshll.u32 [#allocation16], 4
      %s136 = int_to_ptr.vmem [resolvable:$true] %s135
      %138 = dma.hbm_to_vmem [thread:$0]  %s134, 32, %s136, [#allocation15]
    $region41: #{tpu_custom_call.1} parent=1 // pred_fallthru
      _
    // Predicated region
    $region42: #{tpu_custom_call.1} parent=1 // pred_check
      _
    $region43: #{tpu_custom_call.1} parent=1 // pred_check_branch
      %140 = sbr.rel (0) target = $region45
    $region44: #{tpu_custom_call.1} parent=1 // pred_region
      %142 = vsyncadd [#allocation18], 0
      %s143 = sshll.u32 %s10, 4
      %s144 = int_to_ptr.hbm [resolvable:$true] %s143
      %s145 = sshll.u32 [#allocation17], 4
      %s146 = int_to_ptr.vmem [resolvable:$true] %s145
      %151 = dma.hbm_to_vmem [thread:$0]  %s144, 16384, %s146, [#allocation18], 512, 512, 32
    $region45: #{tpu_custom_call.1} parent=1 // pred_fallthru
      _
    // Predicated region
    $region46: #{tpu_custom_call.1} parent=1 // pred_check
      _
    $region47: #{tpu_custom_call.1} parent=1 // pred_check_branch
      %153 = sbr.rel (0) target = $region49
    $region48: #{tpu_custom_call.1} parent=1 // pred_region
      _
    $region49: #{tpu_custom_call.1} parent=1 // pred_fallthru
      _
    // Predicated region
    $region50: #{tpu_custom_call.1} parent=1 // pred_check
      _
    $region51: #{tpu_custom_call.1} parent=1 // pred_check_branch
      %155 = sbr.rel (0) target = $region53
    $region52: #{tpu_custom_call.1} parent=1 // pred_region
      %157 = vsyncadd [#allocation18], 0
      %s158 = sshll.u32 %s12, 4
      %s159 = int_to_ptr.hbm [resolvable:$true] %s158
      %s160 = sshll.u32 [#allocation19], 4
      %s161 = int_to_ptr.vmem [resolvable:$true] %s160
      %166 = dma.hbm_to_vmem [thread:$0]  %s159, 2048, %s161, [#allocation18], 64, 64, 4
    $region53: #{tpu_custom_call.1} parent=1 // pred_fallthru
      _
    // Predicated region
    $region54: #{tpu_custom_call.1} parent=1 // pred_check
      _
    $region55: #{tpu_custom_call.1} parent=1 // pred_check_branch
      %168 = sbr.rel (0) target = $region57
    $region56: #{tpu_custom_call.1} parent=1 // pred_region
      _
    $region57: #{tpu_custom_call.1} parent=1 // pred_fallthru
      _
    // Predicated region
    $region58: #{tpu_custom_call.1} parent=1 // pred_check
      _
    $region59: #{tpu_custom_call.1} parent=1 // pred_check_branch
      %170 = sbr.rel (0) target = $region61
    $region60: #{tpu_custom_call.1} parent=1 // pred_region
      %172 = dma.done [#allocation3], 256
    $region61: #{tpu_custom_call.1} parent=1 // pred_fallthru
      _
    // Predicated region
    $region62: #{tpu_custom_call.1} parent=1 // pred_check
      _
    $region63: #{tpu_custom_call.1} parent=1 // pred_check_branch
      %174 = sbr.rel (0) target = $region65
    $region64: #{tpu_custom_call.1} parent=1 // pred_region
      %176 = dma.done [#allocation6], 512
    $region65: #{tpu_custom_call.1} parent=1 // pred_fallthru
      _
    // Predicated region
    $region66: #{tpu_custom_call.1} parent=1 // pred_check
      _
    $region67: #{tpu_custom_call.1} parent=1 // pred_check_branch
      %178 = sbr.rel (0) target = $region69
    $region68: #{tpu_custom_call.1} parent=1 // pred_region
      %180 = dma.done [#allocation6], 6144
    $region69: #{tpu_custom_call.1} parent=1 // pred_fallthru
      _
    // Predicated region
    $region70: #{tpu_custom_call.1} parent=1 // pred_check
      _
    $region71: #{tpu_custom_call.1} parent=1 // pred_check_branch
      %182 = sbr.rel (0) target = $region73
    $region72: #{tpu_custom_call.1} parent=1 // pred_region
      %184 = dma.done [#allocation9], 12288
    $region73: #{tpu_custom_call.1} parent=1 // pred_fallthru
      _
    // Predicated region
    $region74: #{tpu_custom_call.1} parent=1 // pred_check
      _
    $region75: #{tpu_custom_call.1} parent=1 // pred_check_branch
      %186 = sbr.rel (0) target = $region77
    $region76: #{tpu_custom_call.1} parent=1 // pred_region
      %188 = dma.done [#allocation9], 32
    $region77: #{tpu_custom_call.1} parent=1 // pred_fallthru
      _
    // Predicated region
    $region78: #{tpu_custom_call.1} parent=1 // pred_check
      _
    $region79: #{tpu_custom_call.1} parent=1 // pred_check_branch
      %190 = sbr.rel (0) target = $region81
    $region80: #{tpu_custom_call.1} parent=1 // pred_region
      %192 = dma.done [#allocation12], 12288
    $region81: #{tpu_custom_call.1} parent=1 // pred_fallthru
      _
    // Predicated region
    $region82: #{tpu_custom_call.1} parent=1 // pred_check
      _
    $region83: #{tpu_custom_call.1} parent=1 // pred_check_branch
      %194 = sbr.rel (0) target = $region85
    $region84: #{tpu_custom_call.1} parent=1 // pred_region
      %196 = dma.done [#allocation12], 32
    $region85: #{tpu_custom_call.1} parent=1 // pred_fallthru
      _
    // Predicated region
    $region86: #{tpu_custom_call.1} parent=1 // pred_check
      _
    $region87: #{tpu_custom_call.1} parent=1 // pred_check_branch
      %198 = sbr.rel (0) target = $region89
    $region88: #{tpu_custom_call.1} parent=1 // pred_region
      %200 = dma.done [#allocation15], 12288
    $region89: #{tpu_custom_call.1} parent=1 // pred_fallthru
      _
    // Predicated region
    $region90: #{tpu_custom_call.1} parent=1 // pred_check
      _
    $region91: #{tpu_custom_call.1} parent=1 // pred_check_branch
      %202 = sbr.rel (0) target = $region93
    $region92: #{tpu_custom_call.1} parent=1 // pred_region
      %204 = dma.done [#allocation15], 32
    $region93: #{tpu_custom_call.1} parent=1 // pred_fallthru
      _
    // Predicated region
    $region94: #{tpu_custom_call.1} parent=1 // pred_check
      _
    $region95: #{tpu_custom_call.1} parent=1 // pred_check_branch
      %206 = sbr.rel (0) target = $region97
    $region96: #{tpu_custom_call.1} parent=1 // pred_region
      %208 = dma.done [#allocation18], 16384
    $region97: #{tpu_custom_call.1} parent=1 // pred_fallthru
      _
    // Predicated region
    $region98: #{tpu_custom_call.1} parent=1 // pred_check
      _
    $region99: #{tpu_custom_call.1} parent=1 // pred_check_branch
      %210 = sbr.rel (0) target = $region101
    $region100: #{tpu_custom_call.1} parent=1 // pred_region
      %212 = dma.done [#allocation18], 2048
    $region101: #{tpu_custom_call.1} parent=1 // pred_fallthru
      _
    %v214 = vld [vmem:[#allocation5] sm:$0xf]
    %v215 = vld [vmem:[#allocation5 + $0x4] sm:$0xf]
    %v216 = vld [vmem:[#allocation5 + $0x8] sm:$0xf]
    %v217 = vld [vmem:[#allocation5 + $0xc] sm:$0xf]
    %s218 = scalar_lea.vmem [#allocation5], 16
    %v219 = vld [vmem:[%s218] sm:$0xf]
    %v220 = vld [vmem:[%s218 + $0x4] sm:$0xf]
    %v221 = vld [vmem:[%s218 + $0x8] sm:$0xf]
    %v222 = vld [vmem:[%s218 + $0xc] sm:$0xf]
    %v223 = vld [vmem:[#allocation2] sm:$0xf]
    %v224 = vld [vmem:[#allocation2 + $0x4] sm:$0xf]
    %v225 = vld [vmem:[#allocation2 + $0x8] sm:$0xf]
    %v226 = vld [vmem:[#allocation2 + $0xc] sm:$0xf]
    %v231 = vunpack.c.l.b16 %v214
    %v232 = vunpack.c.l.b16 %v215
    %v233 = vunpack.c.l.b16 %v216
    %v234 = vunpack.c.l.b16 %v217
    %v235 = vpack.c.b16 %v232, %v231
    %v236 = vpack.c.b16 %v234, %v233
    %v241 = vunpack.c.l.b16 %v223
    %v242 = vunpack.c.l.b16 %v224
    %v243 = vunpack.c.l.b16 %v225
    %v244 = vunpack.c.l.b16 %v226
    %v245 = vpack.c.b16 %v242, %v241
    %v246 = vpack.c.b16 %v244, %v243
    %vm249 = vcmask 261120
    %v251 = vsel %vm249, %v235, 0
    %v254 = vsel %vm249, %v236, 0
    %256 = vmatpush.bf16.msra.mxu0 0
    %257 = vmatpush.bf16.msra.mxu0 0
    %258 = vmatpush.bf16.msra.mxu0 0
    %259 = vmatpush.bf16.msra.mxu0 0
    %260 = vmatpush.bf16.msra.mxu0 0
    %261 = vmatpush.bf16.msra.mxu0 0
    %262 = vmatpush.bf16.msra.mxu0 %v246
    %263 = vmatpush.bf16.msra.mxu0 %v245
    %264 = vmatmul.bf16.gmra.mxu0 %v251
    %v265 = vpop.f32.mrf.mxu0
    %v266 = vadd.f32 0.0, %v265
    %v267 = vpop.f32.mrf.mxu0
    %v268 = vadd.f32 0.0, %v267
    %269 = vmatmul.bf16.gmra.mxu0 %v254
    %v270 = vpop.f32.mrf.mxu0
    %v271 = vadd.f32 0.0, %v270
    %v272 = vpop.f32.mrf.mxu0
    %v273 = vadd.f32 0.0, %v272
    %274 = vdwg.mxu0
    %v275 = vpack.c.bf16 %v268, %v266
    %v276 = vpack.c.bf16 %v273, %v271
    %v281 = vunpack.c.l.b16 %v219
    %v282 = vunpack.c.l.b16 %v220
    %v283 = vunpack.c.l.b16 %v221
    %v284 = vunpack.c.l.b16 %v222
    %v285 = vpack.c.b16 %v282, %v281
    %v286 = vpack.c.b16 %v284, %v283
    %v288 = vsel %vm249, %v285, 0
    %v291 = vsel %vm249, %v286, 0
    %293 = vmatpush.bf16.msra.mxu0 0
    %294 = vmatpush.bf16.msra.mxu0 0
    %295 = vmatpush.bf16.msra.mxu0 0
    %296 = vmatpush.bf16.msra.mxu0 0
    %297 = vmatpush.bf16.msra.mxu0 0
    %298 = vmatpush.bf16.msra.mxu0 0
    %299 = vmatpush.bf16.msra.mxu0 %v246
    %300 = vmatpush.bf16.msra.mxu0 %v245
    %301 = vmatmul.bf16.gmra.mxu0 %v288
    %v302 = vpop.f32.mrf.mxu0
    %v303 = vadd.f32 0.0, %v302
    %v304 = vpop.f32.mrf.mxu0
    %v305 = vadd.f32 0.0, %v304
    %306 = vmatmul.bf16.gmra.mxu0 %v291
    %v307 = vpop.f32.mrf.mxu0
    %v308 = vadd.f32 0.0, %v307
    %v309 = vpop.f32.mrf.mxu0
    %v310 = vadd.f32 0.0, %v309
    %311 = vdwg.mxu0
    %v312 = vpack.c.bf16 %v305, %v303
    %v313 = vpack.c.bf16 %v310, %v308
    %v314 = vld [vmem:[#allocation7] sm:$0xff]
    %v315 = vld [vmem:[#allocation7 + $0x8] sm:$0xff]
    %v316 = vld [vmem:[#allocation7 + $0x10] sm:$0xff]
    %v317 = vld [vmem:[#allocation7 + $0x18] sm:$0xff]
    %v318 = vld [vmem:[#allocation7 + $0x20] sm:$0xff]
    %v319 = vld [vmem:[#allocation7 + $0x28] sm:$0xff]
    %v320 = vld [vmem:[#allocation7 + $0x30] sm:$0xff]
    %v321 = vld [vmem:[#allocation7 + $0x38] sm:$0xff]
    %v322 = vld [vmem:[#allocation7 + $0x40] sm:$0xff]
    %v323 = vld [vmem:[#allocation7 + $0x48] sm:$0xff]
    %v324 = vld [vmem:[#allocation7 + $0x50] sm:$0xff]
    %v325 = vld [vmem:[#allocation7 + $0x58] sm:$0xff]
    %v326 = vld [vmem:[#allocation7 + $0x60] sm:$0xff]
    %v327 = vld [vmem:[#allocation7 + $0x68] sm:$0xff]
    %v328 = vld [vmem:[#allocation7 + $0x70] sm:$0xff]
    %v329 = vld [vmem:[#allocation7 + $0x78] sm:$0xff]
    %s330 = scalar_lea.vmem [#allocation7], 128
    %v331 = vld [vmem:[%s330] sm:$0xff]
    %v332 = vld [vmem:[%s330 + $0x8] sm:$0xff]
    %v333 = vld [vmem:[%s330 + $0x10] sm:$0xff]
    %v334 = vld [vmem:[%s330 + $0x18] sm:$0xff]
    %v335 = vld [vmem:[%s330 + $0x20] sm:$0xff]
    %v336 = vld [vmem:[%s330 + $0x28] sm:$0xff]
    %v337 = vld [vmem:[%s330 + $0x30] sm:$0xff]
    %v338 = vld [vmem:[%s330 + $0x38] sm:$0xff]
    %v339 = vld [vmem:[%s330 + $0x40] sm:$0xff]
    %v340 = vld [vmem:[%s330 + $0x48] sm:$0xff]
    %v341 = vld [vmem:[%s330 + $0x50] sm:$0xff]
    %v342 = vld [vmem:[%s330 + $0x58] sm:$0xff]
    %v343 = vld [vmem:[%s330 + $0x60] sm:$0xff]
    %v344 = vld [vmem:[%s330 + $0x68] sm:$0xff]
    %v345 = vld [vmem:[%s330 + $0x70] sm:$0xff]
    %v346 = vld [vmem:[%s330 + $0x78] sm:$0xff]
    %v363 = vunpack.c.l.b16 %v331
    %v364 = vunpack.c.h.b16 %v331
    %v365 = vunpack.c.l.b16 %v332
    %v366 = vunpack.c.h.b16 %v332
    %v367 = vunpack.c.l.b16 %v333
    %v368 = vunpack.c.h.b16 %v333
    %v369 = vunpack.c.l.b16 %v334
    %v370 = vunpack.c.h.b16 %v334
    %v371 = vunpack.c.l.b16 %v335
    %v372 = vunpack.c.h.b16 %v335
    %v373 = vunpack.c.l.b16 %v336
    %v374 = vunpack.c.h.b16 %v336
    %v375 = vunpack.c.l.b16 %v337
    %v376 = vunpack.c.h.b16 %v337
    %v377 = vunpack.c.l.b16 %v338
    %v378 = vunpack.c.h.b16 %v338
    %v379 = vunpack.c.l.b16 %v339
    %v380 = vunpack.c.h.b16 %v339
    %v381 = vunpack.c.l.b16 %v340
    %v382 = vunpack.c.h.b16 %v340
    %v383 = vunpack.c.l.b16 %v341
    %v384 = vunpack.c.h.b16 %v341
    %v385 = vunpack.c.l.b16 %v342
    %v386 = vunpack.c.h.b16 %v342
    %v387 = vunpack.c.l.b16 %v343
    %v388 = vunpack.c.h.b16 %v343
    %v389 = vunpack.c.l.b16 %v344
    %v390 = vunpack.c.h.b16 %v344
    %v391 = vunpack.c.l.b16 %v345
    %v392 = vunpack.c.h.b16 %v345
    %v393 = vunpack.c.l.b16 %v346
    %v394 = vunpack.c.h.b16 %v346
    %v395 = vpack.c.b16 %v365, %v363
    %v396 = vpack.c.b16 %v366, %v364
    %v397 = vpack.c.b16 %v369, %v367
    %v398 = vpack.c.b16 %v370, %v368
    %v399 = vpack.c.b16 %v373, %v371
    %v400 = vpack.c.b16 %v374, %v372
    %v401 = vpack.c.b16 %v377, %v375
    %v402 = vpack.c.b16 %v378, %v376
    %v403 = vpack.c.b16 %v381, %v379
    %v404 = vpack.c.b16 %v382, %v380
    %v405 = vpack.c.b16 %v385, %v383
    %v406 = vpack.c.b16 %v386, %v384
    %v407 = vpack.c.b16 %v389, %v387
    %v408 = vpack.c.b16 %v390, %v388
    %v409 = vpack.c.b16 %v393, %v391
    %v410 = vpack.c.b16 %v394, %v392
    %427 = vmatpush.bf16.msra.mxu0 %v409
    %428 = vmatpush.bf16.msra.mxu0 %v407
    %429 = vmatpush.bf16.msra.mxu0 %v405
    %430 = vmatpush.bf16.msra.mxu0 %v403
    %431 = vmatpush.bf16.msra.mxu0 %v401
    %432 = vmatpush.bf16.msra.mxu0 %v399
    %433 = vmatpush.bf16.msra.mxu0 %v397
    %434 = vmatpush.bf16.msra.mxu0 %v395
    %435 = vmatmul.bf16.gmra.mxu0 %v245
    %v436 = vpop.f32.mrf.mxu0
    %v437 = vadd.f32 0.0, %v436
    %v438 = vpop.f32.mrf.mxu0
    %v439 = vadd.f32 0.0, %v438
    %440 = vmatmul.bf16.gmra.mxu0 %v246
    %v441 = vpop.f32.mrf.mxu0
    %v442 = vadd.f32 0.0, %v441
    %v443 = vpop.f32.mrf.mxu0
    %v444 = vadd.f32 0.0, %v443
    %445 = vdwg.mxu0
    %446 = vmatpush.bf16.msra.mxu0 %v410
    %447 = vmatpush.bf16.msra.mxu0 %v408
    %448 = vmatpush.bf16.msra.mxu0 %v406
    %449 = vmatpush.bf16.msra.mxu0 %v404
    %450 = vmatpush.bf16.msra.mxu0 %v402
    %451 = vmatpush.bf16.msra.mxu0 %v400
    %452 = vmatpush.bf16.msra.mxu0 %v398
    %453 = vmatpush.bf16.msra.mxu0 %v396
    %454 = vmatmul.bf16.gmra.mxu0 %v245
    %v455 = vpop.f32.mrf.mxu0
    %v456 = vadd.f32 0.0, %v455
    %v457 = vpop.f32.mrf.mxu0
    %v458 = vadd.f32 0.0, %v457
    %459 = vmatmul.bf16.gmra.mxu0 %v246
    %v460 = vpop.f32.mrf.mxu0
    %v461 = vadd.f32 0.0, %v460
    %v462 = vpop.f32.mrf.mxu0
    %v463 = vadd.f32 0.0, %v462
    %464 = vdwg.mxu0
    %v481 = vunpack.c.l.b16 %v314
    %v482 = vunpack.c.h.b16 %v314
    %v483 = vunpack.c.l.b16 %v315
    %v484 = vunpack.c.h.b16 %v315
    %v485 = vunpack.c.l.b16 %v316
    %v486 = vunpack.c.h.b16 %v316
    %v487 = vunpack.c.l.b16 %v317
    %v488 = vunpack.c.h.b16 %v317
    %v489 = vunpack.c.l.b16 %v318
    %v490 = vunpack.c.h.b16 %v318
    %v491 = vunpack.c.l.b16 %v319
    %v492 = vunpack.c.h.b16 %v319
    %v493 = vunpack.c.l.b16 %v320
    %v494 = vunpack.c.h.b16 %v320
    %v495 = vunpack.c.l.b16 %v321
    %v496 = vunpack.c.h.b16 %v321
    %v497 = vunpack.c.l.b16 %v322
    %v498 = vunpack.c.h.b16 %v322
    %v499 = vunpack.c.l.b16 %v323
    %v500 = vunpack.c.h.b16 %v323
    %v501 = vunpack.c.l.b16 %v324
    %v502 = vunpack.c.h.b16 %v324
    %v503 = vunpack.c.l.b16 %v325
    %v504 = vunpack.c.h.b16 %v325
    %v505 = vunpack.c.l.b16 %v326
    %v506 = vunpack.c.h.b16 %v326
    %v507 = vunpack.c.l.b16 %v327
    %v508 = vunpack.c.h.b16 %v327
    %v509 = vunpack.c.l.b16 %v328
    %v510 = vunpack.c.h.b16 %v328
    %v511 = vunpack.c.l.b16 %v329
    %v512 = vunpack.c.h.b16 %v329
    %v513 = vpack.c.b16 %v483, %v481
    %v514 = vpack.c.b16 %v484, %v482
    %v515 = vpack.c.b16 %v487, %v485
    %v516 = vpack.c.b16 %v488, %v486
    %v517 = vpack.c.b16 %v491, %v489
    %v518 = vpack.c.b16 %v492, %v490
    %v519 = vpack.c.b16 %v495, %v493
    %v520 = vpack.c.b16 %v496, %v494
    %v521 = vpack.c.b16 %v499, %v497
    %v522 = vpack.c.b16 %v500, %v498
    %v523 = vpack.c.b16 %v503, %v501
    %v524 = vpack.c.b16 %v504, %v502
    %v525 = vpack.c.b16 %v507, %v505
    %v526 = vpack.c.b16 %v508, %v506
    %v527 = vpack.c.b16 %v511, %v509
    %v528 = vpack.c.b16 %v512, %v510
    %545 = vmatpush.bf16.msra.mxu0 %v527
    %546 = vmatpush.bf16.msra.mxu0 %v525
    %547 = vmatpush.bf16.msra.mxu0 %v523
    %548 = vmatpush.bf16.msra.mxu0 %v521
    %549 = vmatpush.bf16.msra.mxu0 %v519
    %550 = vmatpush.bf16.msra.mxu0 %v517
    %551 = vmatpush.bf16.msra.mxu0 %v515
    %552 = vmatpush.bf16.msra.mxu0 %v513
    %553 = vmatmul.bf16.gmra.mxu0 %v275
    %v554 = vpop.f32.mrf.mxu0
    %v555 = vadd.f32 %v437, %v554
    %v556 = vpop.f32.mrf.mxu0
    %v557 = vadd.f32 %v439, %v556
    %558 = vmatmul.bf16.gmra.mxu0 %v276
    %v559 = vpop.f32.mrf.mxu0
    %v560 = vadd.f32 %v442, %v559
    %v561 = vpop.f32.mrf.mxu0
    %v562 = vadd.f32 %v444, %v561
    %563 = vdwg.mxu0
    %564 = vmatpush.bf16.msra.mxu0 %v528
    %565 = vmatpush.bf16.msra.mxu0 %v526
    %566 = vmatpush.bf16.msra.mxu0 %v524
    %567 = vmatpush.bf16.msra.mxu0 %v522
    %568 = vmatpush.bf16.msra.mxu0 %v520
    %569 = vmatpush.bf16.msra.mxu0 %v518
    %570 = vmatpush.bf16.msra.mxu0 %v516
    %571 = vmatpush.bf16.msra.mxu0 %v514
    %572 = vmatmul.bf16.gmra.mxu0 %v275
    %v573 = vpop.f32.mrf.mxu0
    %v574 = vadd.f32 %v456, %v573
    %v575 = vpop.f32.mrf.mxu0
    %v576 = vadd.f32 %v458, %v575
    %577 = vmatmul.bf16.gmra.mxu0 %v276
    %v578 = vpop.f32.mrf.mxu0
    %v579 = vadd.f32 %v461, %v578
    %v580 = vpop.f32.mrf.mxu0
    %v581 = vadd.f32 %v463, %v580
    %582 = vdwg.mxu0
    %s583 = scalar_lea.vmem [#allocation7], 256
    %v584 = vld [vmem:[%s583] sm:$0xff]
    %v585 = vld [vmem:[%s583 + $0x8] sm:$0xff]
    %v586 = vld [vmem:[%s583 + $0x10] sm:$0xff]
    %v587 = vld [vmem:[%s583 + $0x18] sm:$0xff]
    %v588 = vld [vmem:[%s583 + $0x20] sm:$0xff]
    %v589 = vld [vmem:[%s583 + $0x28] sm:$0xff]
    %v590 = vld [vmem:[%s583 + $0x30] sm:$0xff]
    %v591 = vld [vmem:[%s583 + $0x38] sm:$0xff]
    %v592 = vld [vmem:[%s583 + $0x40] sm:$0xff]
    %v593 = vld [vmem:[%s583 + $0x48] sm:$0xff]
    %v594 = vld [vmem:[%s583 + $0x50] sm:$0xff]
    %v595 = vld [vmem:[%s583 + $0x58] sm:$0xff]
    %v596 = vld [vmem:[%s583 + $0x60] sm:$0xff]
    %v597 = vld [vmem:[%s583 + $0x68] sm:$0xff]
    %v598 = vld [vmem:[%s583 + $0x70] sm:$0xff]
    %v599 = vld [vmem:[%s583 + $0x78] sm:$0xff]
    %v616 = vunpack.c.l.b16 %v584
    %v617 = vunpack.c.h.b16 %v584
    %v618 = vunpack.c.l.b16 %v585
    %v619 = vunpack.c.h.b16 %v585
    %v620 = vunpack.c.l.b16 %v586
    %v621 = vunpack.c.h.b16 %v586
    %v622 = vunpack.c.l.b16 %v587
    %v623 = vunpack.c.h.b16 %v587
    %v624 = vunpack.c.l.b16 %v588
    %v625 = vunpack.c.h.b16 %v588
    %v626 = vunpack.c.l.b16 %v589
    %v627 = vunpack.c.h.b16 %v589
    %v628 = vunpack.c.l.b16 %v590
    %v629 = vunpack.c.h.b16 %v590
    %v630 = vunpack.c.l.b16 %v591
    %v631 = vunpack.c.h.b16 %v591
    %v632 = vunpack.c.l.b16 %v592
    %v633 = vunpack.c.h.b16 %v592
    %v634 = vunpack.c.l.b16 %v593
    %v635 = vunpack.c.h.b16 %v593
    %v636 = vunpack.c.l.b16 %v594
    %v637 = vunpack.c.h.b16 %v594
    %v638 = vunpack.c.l.b16 %v595
    %v639 = vunpack.c.h.b16 %v595
    %v640 = vunpack.c.l.b16 %v596
    %v641 = vunpack.c.h.b16 %v596
    %v642 = vunpack.c.l.b16 %v597
    %v643 = vunpack.c.h.b16 %v597
    %v644 = vunpack.c.l.b16 %v598
    %v645 = vunpack.c.h.b16 %v598
    %v646 = vunpack.c.l.b16 %v599
    %v647 = vunpack.c.h.b16 %v599
    %v648 = vpack.c.b16 %v618, %v616
    %v649 = vpack.c.b16 %v619, %v617
    %v650 = vpack.c.b16 %v622, %v620
    %v651 = vpack.c.b16 %v623, %v621
    %v652 = vpack.c.b16 %v626, %v624
    %v653 = vpack.c.b16 %v627, %v625
    %v654 = vpack.c.b16 %v630, %v628
    %v655 = vpack.c.b16 %v631, %v629
    %v656 = vpack.c.b16 %v634, %v632
    %v657 = vpack.c.b16 %v635, %v633
    %v658 = vpack.c.b16 %v638, %v636
    %v659 = vpack.c.b16 %v639, %v637
    %v660 = vpack.c.b16 %v642, %v640
    %v661 = vpack.c.b16 %v643, %v641
    %v662 = vpack.c.b16 %v646, %v644
    %v663 = vpack.c.b16 %v647, %v645
    %680 = vmatpush.bf16.msra.mxu0 %v662
    %681 = vmatpush.bf16.msra.mxu0 %v660
    %682 = vmatpush.bf16.msra.mxu0 %v658
    %683 = vmatpush.bf16.msra.mxu0 %v656
    %684 = vmatpush.bf16.msra.mxu0 %v654
    %685 = vmatpush.bf16.msra.mxu0 %v652
    %686 = vmatpush.bf16.msra.mxu0 %v650
    %687 = vmatpush.bf16.msra.mxu0 %v648
    %688 = vmatmul.bf16.gmra.mxu0 %v312
    %v689 = vpop.f32.mrf.mxu0
    %v690 = vadd.f32 0.0, %v689
    %v691 = vpop.f32.mrf.mxu0
    %v692 = vadd.f32 0.0, %v691
    %693 = vmatmul.bf16.gmra.mxu0 %v313
    %v694 = vpop.f32.mrf.mxu0
    %v695 = vadd.f32 0.0, %v694
    %v696 = vpop.f32.mrf.mxu0
    %v697 = vadd.f32 0.0, %v696
    %698 = vdwg.mxu0
    %699 = vmatpush.bf16.msra.mxu0 %v663
    %700 = vmatpush.bf16.msra.mxu0 %v661
    %701 = vmatpush.bf16.msra.mxu0 %v659
    %702 = vmatpush.bf16.msra.mxu0 %v657
    %703 = vmatpush.bf16.msra.mxu0 %v655
    %704 = vmatpush.bf16.msra.mxu0 %v653
    %705 = vmatpush.bf16.msra.mxu0 %v651
    %706 = vmatpush.bf16.msra.mxu0 %v649
    %707 = vmatmul.bf16.gmra.mxu0 %v312
    %v708 = vpop.f32.mrf.mxu0
    %v709 = vadd.f32 0.0, %v708
    %v710 = vpop.f32.mrf.mxu0
    %v711 = vadd.f32 0.0, %v710
    %712 = vmatmul.bf16.gmra.mxu0 %v313
    %v713 = vpop.f32.mrf.mxu0
    %v714 = vadd.f32 0.0, %v713
    %v715 = vpop.f32.mrf.mxu0
    %v716 = vadd.f32 0.0, %v715
    %717 = vdwg.mxu0
    %v718 = vadd.f32 %v555, %v690
    %v719 = vadd.f32 %v574, %v709
    %v720 = vadd.f32 %v557, %v692
    %v721 = vadd.f32 %v576, %v711
    %v722 = vadd.f32 %v560, %v695
    %v723 = vadd.f32 %v579, %v714
    %v724 = vadd.f32 %v562, %v697
    %v725 = vadd.f32 %v581, %v716
    %v726 = vld [vmem:[%s3] sm:$0x3]
    %v728 = vperm.slane %v726, 0
    %v729 = vperm.slane %v726, 1
    %v732 = vadd.f32 %v718, %v728
    %v733 = vadd.f32 %v719, %v729
    %v734 = vadd.f32 %v720, %v728
    %v735 = vadd.f32 %v721, %v729
    %v736 = vadd.f32 %v722, %v728
    %v737 = vadd.f32 %v723, %v729
    %v738 = vadd.f32 %v724, %v728
    %v739 = vadd.f32 %v725, %v729
    %v740 = vmax.f32 %v732, 0.0
    %v741 = vmax.f32 %v733, 0.0
    %v742 = vmax.f32 %v734, 0.0
    %v743 = vmax.f32 %v735, 0.0
    %v744 = vmax.f32 %v736, 0.0
    %v745 = vmax.f32 %v737, 0.0
    %v746 = vmax.f32 %v738, 0.0
    %v747 = vmax.f32 %v739, 0.0
    %v748 = vpack.c.bf16 %v742, %v740
    %v749 = vpack.c.bf16 %v743, %v741
    %v750 = vpack.c.bf16 %v746, %v744
    %v751 = vpack.c.bf16 %v747, %v745
    %752 = vmatpush.bf16.msra.mxu0 0
    %753 = vmatpush.bf16.msra.mxu0 0
    %754 = vmatpush.bf16.msra.mxu0 0
    %755 = vmatpush.bf16.msra.mxu0 0
    %756 = vmatpush.bf16.msra.mxu0 0
    %757 = vmatpush.bf16.msra.mxu0 0
    %758 = vmatpush.bf16.msra.mxu0 %v750
    %759 = vmatpush.bf16.msra.mxu0 %v748
    %760 = vmatmul.bf16.gmra.mxu0 %v251
    %v761 = vpop.f32.mrf.mxu0
    %v762 = vadd.f32 0.0, %v761
    %v763 = vpop.f32.mrf.mxu0
    %v764 = vadd.f32 0.0, %v763
    %765 = vmatmul.bf16.gmra.mxu0 %v254
    %v766 = vpop.f32.mrf.mxu0
    %v767 = vadd.f32 0.0, %v766
    %v768 = vpop.f32.mrf.mxu0
    %v769 = vadd.f32 0.0, %v768
    %770 = vdwg.mxu0
    %771 = vmatpush.bf16.msra.mxu0 0
    %772 = vmatpush.bf16.msra.mxu0 0
    %773 = vmatpush.bf16.msra.mxu0 0
    %774 = vmatpush.bf16.msra.mxu0 0
    %775 = vmatpush.bf16.msra.mxu0 0
    %776 = vmatpush.bf16.msra.mxu0 0
    %777 = vmatpush.bf16.msra.mxu0 %v751
    %778 = vmatpush.bf16.msra.mxu0 %v749
    %779 = vmatmul.bf16.gmra.mxu0 %v251
    %v780 = vpop.f32.mrf.mxu0
    %v781 = vadd.f32 0.0, %v780
    %v782 = vpop.f32.mrf.mxu0
    %v783 = vadd.f32 0.0, %v782
    %784 = vmatmul.bf16.gmra.mxu0 %v254
    %v785 = vpop.f32.mrf.mxu0
    %v786 = vadd.f32 0.0, %v785
    %v787 = vpop.f32.mrf.mxu0
    %v788 = vadd.f32 0.0, %v787
    %789 = vdwg.mxu0
    %v790 = vpack.c.bf16 %v764, %v762
    %v791 = vpack.c.bf16 %v783, %v781
    %v792 = vpack.c.bf16 %v769, %v767
    %v793 = vpack.c.bf16 %v788, %v786
    %794 = vmatpush.bf16.msra.mxu0 0
    %795 = vmatpush.bf16.msra.mxu0 0
    %796 = vmatpush.bf16.msra.mxu0 0
    %797 = vmatpush.bf16.msra.mxu0 0
    %798 = vmatpush.bf16.msra.mxu0 0
    %799 = vmatpush.bf16.msra.mxu0 0
    %800 = vmatpush.bf16.msra.mxu0 %v750
    %801 = vmatpush.bf16.msra.mxu0 %v748
    %802 = vmatmul.bf16.gmra.mxu0 %v288
    %v803 = vpop.f32.mrf.mxu0
    %v804 = vadd.f32 0.0, %v803
    %v805 = vpop.f32.mrf.mxu0
    %v806 = vadd.f32 0.0, %v805
    %807 = vmatmul.bf16.gmra.mxu0 %v291
    %v808 = vpop.f32.mrf.mxu0
    %v809 = vadd.f32 0.0, %v808
    %v810 = vpop.f32.mrf.mxu0
    %v811 = vadd.f32 0.0, %v810
    %812 = vdwg.mxu0
    %813 = vmatpush.bf16.msra.mxu0 0
    %814 = vmatpush.bf16.msra.mxu0 0
    %815 = vmatpush.bf16.msra.mxu0 0
    %816 = vmatpush.bf16.msra.mxu0 0
    %817 = vmatpush.bf16.msra.mxu0 0
    %818 = vmatpush.bf16.msra.mxu0 0
    %819 = vmatpush.bf16.msra.mxu0 %v751
    %820 = vmatpush.bf16.msra.mxu0 %v749
    %821 = vmatmul.bf16.gmra.mxu0 %v288
    %v822 = vpop.f32.mrf.mxu0
    %v823 = vadd.f32 0.0, %v822
    %v824 = vpop.f32.mrf.mxu0
    %v825 = vadd.f32 0.0, %v824
    %826 = vmatmul.bf16.gmra.mxu0 %v291
    %v827 = vpop.f32.mrf.mxu0
    %v828 = vadd.f32 0.0, %v827
    %v829 = vpop.f32.mrf.mxu0
    %v830 = vadd.f32 0.0, %v829
    %831 = vdwg.mxu0
    %v832 = vpack.c.bf16 %v806, %v804
    %v833 = vpack.c.bf16 %v825, %v823
    %v834 = vpack.c.bf16 %v811, %v809
    %v835 = vpack.c.bf16 %v830, %v828
    %v836 = vld [vmem:[#allocation8] sm:$0xff]
    %v837 = vld [vmem:[#allocation8 + $0x8] sm:$0xff]
    %v838 = vld [vmem:[#allocation8 + $0x10] sm:$0xff]
    %v839 = vld [vmem:[#allocation8 + $0x18] sm:$0xff]
    %v840 = vld [vmem:[#allocation8 + $0x20] sm:$0xff]
    %v841 = vld [vmem:[#allocation8 + $0x28] sm:$0xff]
    %v842 = vld [vmem:[#allocation8 + $0x30] sm:$0xff]
    %v843 = vld [vmem:[#allocation8 + $0x38] sm:$0xff]
    %v844 = vld [vmem:[#allocation8 + $0x40] sm:$0xff]
    %v845 = vld [vmem:[#allocation8 + $0x48] sm:$0xff]
    %v846 = vld [vmem:[#allocation8 + $0x50] sm:$0xff]
    %v847 = vld [vmem:[#allocation8 + $0x58] sm:$0xff]
    %v848 = vld [vmem:[#allocation8 + $0x60] sm:$0xff]
    %v849 = vld [vmem:[#allocation8 + $0x68] sm:$0xff]
    %v850 = vld [vmem:[#allocation8 + $0x70] sm:$0xff]
    %v851 = vld [vmem:[#allocation8 + $0x78] sm:$0xff]
    %v852 = vld [vmem:[#allocation8 + $0x80] sm:$0xff]
    %v853 = vld [vmem:[#allocation8 + $0x88] sm:$0xff]
    %v854 = vld [vmem:[#allocation8 + $0x90] sm:$0xff]
    %v855 = vld [vmem:[#allocation8 + $0x98] sm:$0xff]
    %v856 = vld [vmem:[#allocation8 + $0xa0] sm:$0xff]
    %v857 = vld [vmem:[#allocation8 + $0xa8] sm:$0xff]
    %v858 = vld [vmem:[#allocation8 + $0xb0] sm:$0xff]
    %v859 = vld [vmem:[#allocation8 + $0xb8] sm:$0xff]
    %v860 = vld [vmem:[#allocation8 + $0xc0] sm:$0xff]
    %v861 = vld [vmem:[#allocation8 + $0xc8] sm:$0xff]
    %v862 = vld [vmem:[#allocation8 + $0xd0] sm:$0xff]
    %v863 = vld [vmem:[#allocation8 + $0xd8] sm:$0xff]
    %v864 = vld [vmem:[#allocation8 + $0xe0] sm:$0xff]
    %v865 = vld [vmem:[#allocation8 + $0xe8] sm:$0xff]
    %v866 = vld [vmem:[#allocation8 + $0xf0] sm:$0xff]
    %v867 = vld [vmem:[#allocation8 + $0xf8] sm:$0xff]
    %s868 = scalar_lea.vmem [#allocation8], 256
    %v869 = vld [vmem:[%s868] sm:$0xff]
    %v870 = vld [vmem:[%s868 + $0x8] sm:$0xff]
    %v871 = vld [vmem:[%s868 + $0x10] sm:$0xff]
    %v872 = vld [vmem:[%s868 + $0x18] sm:$0xff]
    %v873 = vld [vmem:[%s868 + $0x20] sm:$0xff]
    %v874 = vld [vmem:[%s868 + $0x28] sm:$0xff]
    %v875 = vld [vmem:[%s868 + $0x30] sm:$0xff]
    %v876 = vld [vmem:[%s868 + $0x38] sm:$0xff]
    %v877 = vld [vmem:[%s868 + $0x40] sm:$0xff]
    %v878 = vld [vmem:[%s868 + $0x48] sm:$0xff]
    %v879 = vld [vmem:[%s868 + $0x50] sm:$0xff]
    %v880 = vld [vmem:[%s868 + $0x58] sm:$0xff]
    %v881 = vld [vmem:[%s868 + $0x60] sm:$0xff]
    %v882 = vld [vmem:[%s868 + $0x68] sm:$0xff]
    %v883 = vld [vmem:[%s868 + $0x70] sm:$0xff]
    %v884 = vld [vmem:[%s868 + $0x78] sm:$0xff]
    %v885 = vld [vmem:[%s868 + $0x80] sm:$0xff]
    %v886 = vld [vmem:[%s868 + $0x88] sm:$0xff]
    %v887 = vld [vmem:[%s868 + $0x90] sm:$0xff]
    %v888 = vld [vmem:[%s868 + $0x98] sm:$0xff]
    %v889 = vld [vmem:[%s868 + $0xa0] sm:$0xff]
    %v890 = vld [vmem:[%s868 + $0xa8] sm:$0xff]
    %v891 = vld [vmem:[%s868 + $0xb0] sm:$0xff]
    %v892 = vld [vmem:[%s868 + $0xb8] sm:$0xff]
    %v893 = vld [vmem:[%s868 + $0xc0] sm:$0xff]
    %v894 = vld [vmem:[%s868 + $0xc8] sm:$0xff]
    %v895 = vld [vmem:[%s868 + $0xd0] sm:$0xff]
    %v896 = vld [vmem:[%s868 + $0xd8] sm:$0xff]
    %v897 = vld [vmem:[%s868 + $0xe0] sm:$0xff]
    %v898 = vld [vmem:[%s868 + $0xe8] sm:$0xff]
    %v899 = vld [vmem:[%s868 + $0xf0] sm:$0xff]
    %v900 = vld [vmem:[%s868 + $0xf8] sm:$0xff]
    %v933 = vunpack.c.l.b16 %v869
    %v934 = vunpack.c.h.b16 %v869
    %v935 = vunpack.c.l.b16 %v870
    %v936 = vunpack.c.h.b16 %v870
    %v937 = vunpack.c.l.b16 %v871
    %v938 = vunpack.c.h.b16 %v871
    %v939 = vunpack.c.l.b16 %v872
    %v940 = vunpack.c.h.b16 %v872
    %v941 = vunpack.c.l.b16 %v873
    %v942 = vunpack.c.h.b16 %v873
    %v943 = vunpack.c.l.b16 %v874
    %v944 = vunpack.c.h.b16 %v874
    %v945 = vunpack.c.l.b16 %v875
    %v946 = vunpack.c.h.b16 %v875
    %v947 = vunpack.c.l.b16 %v876
    %v948 = vunpack.c.h.b16 %v876
    %v949 = vunpack.c.l.b16 %v877
    %v950 = vunpack.c.h.b16 %v877
    %v951 = vunpack.c.l.b16 %v878
    %v952 = vunpack.c.h.b16 %v878
    %v953 = vunpack.c.l.b16 %v879
    %v954 = vunpack.c.h.b16 %v879
    %v955 = vunpack.c.l.b16 %v880
    %v956 = vunpack.c.h.b16 %v880
    %v957 = vunpack.c.l.b16 %v881
    %v958 = vunpack.c.h.b16 %v881
    %v959 = vunpack.c.l.b16 %v882
    %v960 = vunpack.c.h.b16 %v882
    %v961 = vunpack.c.l.b16 %v883
    %v962 = vunpack.c.h.b16 %v883
    %v963 = vunpack.c.l.b16 %v884
    %v964 = vunpack.c.h.b16 %v884
    %v965 = vunpack.c.l.b16 %v885
    %v966 = vunpack.c.h.b16 %v885
    %v967 = vunpack.c.l.b16 %v886
    %v968 = vunpack.c.h.b16 %v886
    %v969 = vunpack.c.l.b16 %v887
    %v970 = vunpack.c.h.b16 %v887
    %v971 = vunpack.c.l.b16 %v888
    %v972 = vunpack.c.h.b16 %v888
    %v973 = vunpack.c.l.b16 %v889
    %v974 = vunpack.c.h.b16 %v889
    %v975 = vunpack.c.l.b16 %v890
    %v976 = vunpack.c.h.b16 %v890
    %v977 = vunpack.c.l.b16 %v891
    %v978 = vunpack.c.h.b16 %v891
    %v979 = vunpack.c.l.b16 %v892
    %v980 = vunpack.c.h.b16 %v892
    %v981 = vunpack.c.l.b16 %v893
    %v982 = vunpack.c.h.b16 %v893
    %v983 = vunpack.c.l.b16 %v894
    %v984 = vunpack.c.h.b16 %v894
    %v985 = vunpack.c.l.b16 %v895
    %v986 = vunpack.c.h.b16 %v895
    %v987 = vunpack.c.l.b16 %v896
    %v988 = vunpack.c.h.b16 %v896
    %v989 = vunpack.c.l.b16 %v897
    %v990 = vunpack.c.h.b16 %v897
    %v991 = vunpack.c.l.b16 %v898
    %v992 = vunpack.c.h.b16 %v898
    %v993 = vunpack.c.l.b16 %v899
    %v994 = vunpack.c.h.b16 %v899
    %v995 = vunpack.c.l.b16 %v900
    %v996 = vunpack.c.h.b16 %v900
    %v997 = vpack.c.b16 %v935, %v933
    %v998 = vpack.c.b16 %v936, %v934
    %v999 = vpack.c.b16 %v939, %v937
    %v1000 = vpack.c.b16 %v940, %v938
    %v1001 = vpack.c.b16 %v943, %v941
    %v1002 = vpack.c.b16 %v944, %v942
    %v1003 = vpack.c.b16 %v947, %v945
    %v1004 = vpack.c.b16 %v948, %v946
    %v1005 = vpack.c.b16 %v951, %v949
    %v1006 = vpack.c.b16 %v952, %v950
    %v1007 = vpack.c.b16 %v955, %v953
    %v1008 = vpack.c.b16 %v956, %v954
    %v1009 = vpack.c.b16 %v959, %v957
    %v1010 = vpack.c.b16 %v960, %v958
    %v1011 = vpack.c.b16 %v963, %v961
    %v1012 = vpack.c.b16 %v964, %v962
    %v1013 = vpack.c.b16 %v967, %v965
    %v1014 = vpack.c.b16 %v968, %v966
    %v1015 = vpack.c.b16 %v971, %v969
    %v1016 = vpack.c.b16 %v972, %v970
    %v1017 = vpack.c.b16 %v975, %v973
    %v1018 = vpack.c.b16 %v976, %v974
    %v1019 = vpack.c.b16 %v979, %v977
    %v1020 = vpack.c.b16 %v980, %v978
    %v1021 = vpack.c.b16 %v983, %v981
    %v1022 = vpack.c.b16 %v984, %v982
    %v1023 = vpack.c.b16 %v987, %v985
    %v1024 = vpack.c.b16 %v988, %v986
    %v1025 = vpack.c.b16 %v991, %v989
    %v1026 = vpack.c.b16 %v992, %v990
    %v1027 = vpack.c.b16 %v995, %v993
    %v1028 = vpack.c.b16 %v996, %v994
    %1061 = vmatpush.bf16.msra.mxu0 %v1011
    %1062 = vmatpush.bf16.msra.mxu0 %v1009
    %1063 = vmatpush.bf16.msra.mxu0 %v1007
    %1064 = vmatpush.bf16.msra.mxu0 %v1005
    %1065 = vmatpush.bf16.msra.mxu0 %v1003
    %1066 = vmatpush.bf16.msra.mxu0 %v1001
    %1067 = vmatpush.bf16.msra.mxu0 %v999
    %1068 = vmatpush.bf16.msra.mxu0 %v997
    %1069 = vmatmul.bf16.gmra.mxu0 %v748
    %v1070 = vpop.f32.mrf.mxu0
    %v1071 = vadd.f32 0.0, %v1070
    %v1072 = vpop.f32.mrf.mxu0
    %v1073 = vadd.f32 0.0, %v1072
    %1074 = vmatmul.bf16.gmra.mxu0 %v750
    %v1075 = vpop.f32.mrf.mxu0
    %v1076 = vadd.f32 0.0, %v1075
    %v1077 = vpop.f32.mrf.mxu0
    %v1078 = vadd.f32 0.0, %v1077
    %1079 = vdwg.mxu0
    %1080 = vmatpush.bf16.msra.mxu0 %v1027
    %1081 = vmatpush.bf16.msra.mxu0 %v1025
    %1082 = vmatpush.bf16.msra.mxu0 %v1023
    %1083 = vmatpush.bf16.msra.mxu0 %v1021
    %1084 = vmatpush.bf16.msra.mxu0 %v1019
    %1085 = vmatpush.bf16.msra.mxu0 %v1017
    %1086 = vmatpush.bf16.msra.mxu0 %v1015
    %1087 = vmatpush.bf16.msra.mxu0 %v1013
    %1088 = vmatmul.bf16.gmra.mxu0 %v749
    %v1089 = vpop.f32.mrf.mxu0
    %v1090 = vadd.f32 %v1071, %v1089
    %v1091 = vpop.f32.mrf.mxu0
    %v1092 = vadd.f32 %v1073, %v1091
    %1093 = vmatmul.bf16.gmra.mxu0 %v751
    %v1094 = vpop.f32.mrf.mxu0
    %v1095 = vadd.f32 %v1076, %v1094
    %v1096 = vpop.f32.mrf.mxu0
    %v1097 = vadd.f32 %v1078, %v1096
    %1098 = vdwg.mxu0
    %1099 = vmatpush.bf16.msra.mxu0 %v1012
    %1100 = vmatpush.bf16.msra.mxu0 %v1010
    %1101 = vmatpush.bf16.msra.mxu0 %v1008
    %1102 = vmatpush.bf16.msra.mxu0 %v1006
    %1103 = vmatpush.bf16.msra.mxu0 %v1004
    %1104 = vmatpush.bf16.msra.mxu0 %v1002
    %1105 = vmatpush.bf16.msra.mxu0 %v1000
    %1106 = vmatpush.bf16.msra.mxu0 %v998
    %1107 = vmatmul.bf16.gmra.mxu0 %v748
    %v1108 = vpop.f32.mrf.mxu0
    %v1109 = vadd.f32 0.0, %v1108
    %v1110 = vpop.f32.mrf.mxu0
    %v1111 = vadd.f32 0.0, %v1110
    %1112 = vmatmul.bf16.gmra.mxu0 %v750
    %v1113 = vpop.f32.mrf.mxu0
    %v1114 = vadd.f32 0.0, %v1113
    %v1115 = vpop.f32.mrf.mxu0
    %v1116 = vadd.f32 0.0, %v1115
    %1117 = vdwg.mxu0
    %1118 = vmatpush.bf16.msra.mxu0 %v1028
    %1119 = vmatpush.bf16.msra.mxu0 %v1026
    %1120 = vmatpush.bf16.msra.mxu0 %v1024
    %1121 = vmatpush.bf16.msra.mxu0 %v1022
    %1122 = vmatpush.bf16.msra.mxu0 %v1020
    %1123 = vmatpush.bf16.msra.mxu0 %v1018
    %1124 = vmatpush.bf16.msra.mxu0 %v1016
    %1125 = vmatpush.bf16.msra.mxu0 %v1014
    %1126 = vmatmul.bf16.gmra.mxu0 %v749
    %v1127 = vpop.f32.mrf.mxu0
    %v1128 = vadd.f32 %v1109, %v1127
    %v1129 = vpop.f32.mrf.mxu0
    %v1130 = vadd.f32 %v1111, %v1129
    %1131 = vmatmul.bf16.gmra.mxu0 %v751
    %v1132 = vpop.f32.mrf.mxu0
    %v1133 = vadd.f32 %v1114, %v1132
    %v1134 = vpop.f32.mrf.mxu0
    %v1135 = vadd.f32 %v1116, %v1134
    %1136 = vdwg.mxu0
    %v1169 = vunpack.c.l.b16 %v836
    %v1170 = vunpack.c.h.b16 %v836
    %v1171 = vunpack.c.l.b16 %v837
    %v1172 = vunpack.c.h.b16 %v837
    %v1173 = vunpack.c.l.b16 %v838
    %v1174 = vunpack.c.h.b16 %v838
    %v1175 = vunpack.c.l.b16 %v839
    %v1176 = vunpack.c.h.b16 %v839
    %v1177 = vunpack.c.l.b16 %v840
    %v1178 = vunpack.c.h.b16 %v840
    %v1179 = vunpack.c.l.b16 %v841
    %v1180 = vunpack.c.h.b16 %v841
    %v1181 = vunpack.c.l.b16 %v842
    %v1182 = vunpack.c.h.b16 %v842
    %v1183 = vunpack.c.l.b16 %v843
    %v1184 = vunpack.c.h.b16 %v843
    %v1185 = vunpack.c.l.b16 %v844
    %v1186 = vunpack.c.h.b16 %v844
    %v1187 = vunpack.c.l.b16 %v845
    %v1188 = vunpack.c.h.b16 %v845
    %v1189 = vunpack.c.l.b16 %v846
    %v1190 = vunpack.c.h.b16 %v846
    %v1191 = vunpack.c.l.b16 %v847
    %v1192 = vunpack.c.h.b16 %v847
    %v1193 = vunpack.c.l.b16 %v848
    %v1194 = vunpack.c.h.b16 %v848
    %v1195 = vunpack.c.l.b16 %v849
    %v1196 = vunpack.c.h.b16 %v849
    %v1197 = vunpack.c.l.b16 %v850
    %v1198 = vunpack.c.h.b16 %v850
    %v1199 = vunpack.c.l.b16 %v851
    %v1200 = vunpack.c.h.b16 %v851
    %v1201 = vunpack.c.l.b16 %v852
    %v1202 = vunpack.c.h.b16 %v852
    %v1203 = vunpack.c.l.b16 %v853
    %v1204 = vunpack.c.h.b16 %v853
    %v1205 = vunpack.c.l.b16 %v854
    %v1206 = vunpack.c.h.b16 %v854
    %v1207 = vunpack.c.l.b16 %v855
    %v1208 = vunpack.c.h.b16 %v855
    %v1209 = vunpack.c.l.b16 %v856
    %v1210 = vunpack.c.h.b16 %v856
    %v1211 = vunpack.c.l.b16 %v857
    %v1212 = vunpack.c.h.b16 %v857
    %v1213 = vunpack.c.l.b16 %v858
    %v1214 = vunpack.c.h.b16 %v858
    %v1215 = vunpack.c.l.b16 %v859
    %v1216 = vunpack.c.h.b16 %v859
    %v1217 = vunpack.c.l.b16 %v860
    %v1218 = vunpack.c.h.b16 %v860
    %v1219 = vunpack.c.l.b16 %v861
    %v1220 = vunpack.c.h.b16 %v861
    %v1221 = vunpack.c.l.b16 %v862
    %v1222 = vunpack.c.h.b16 %v862
    %v1223 = vunpack.c.l.b16 %v863
    %v1224 = vunpack.c.h.b16 %v863
    %v1225 = vunpack.c.l.b16 %v864
    %v1226 = vunpack.c.h.b16 %v864
    %v1227 = vunpack.c.l.b16 %v865
    %v1228 = vunpack.c.h.b16 %v865
    %v1229 = vunpack.c.l.b16 %v866
    %v1230 = vunpack.c.h.b16 %v866
    %v1231 = vunpack.c.l.b16 %v867
    %v1232 = vunpack.c.h.b16 %v867
    %v1233 = vpack.c.b16 %v1171, %v1169
    %v1234 = vpack.c.b16 %v1172, %v1170
    %v1235 = vpack.c.b16 %v1175, %v1173
    %v1236 = vpack.c.b16 %v1176, %v1174
    %v1237 = vpack.c.b16 %v1179, %v1177
    %v1238 = vpack.c.b16 %v1180, %v1178
    %v1239 = vpack.c.b16 %v1183, %v1181
    %v1240 = vpack.c.b16 %v1184, %v1182
    %v1241 = vpack.c.b16 %v1187, %v1185
    %v1242 = vpack.c.b16 %v1188, %v1186
    %v1243 = vpack.c.b16 %v1191, %v1189
    %v1244 = vpack.c.b16 %v1192, %v1190
    %v1245 = vpack.c.b16 %v1195, %v1193
    %v1246 = vpack.c.b16 %v1196, %v1194
    %v1247 = vpack.c.b16 %v1199, %v1197
    %v1248 = vpack.c.b16 %v1200, %v1198
    %v1249 = vpack.c.b16 %v1203, %v1201
    %v1250 = vpack.c.b16 %v1204, %v1202
    %v1251 = vpack.c.b16 %v1207, %v1205
    %v1252 = vpack.c.b16 %v1208, %v1206
    %v1253 = vpack.c.b16 %v1211, %v1209
    %v1254 = vpack.c.b16 %v1212, %v1210
    %v1255 = vpack.c.b16 %v1215, %v1213
    %v1256 = vpack.c.b16 %v1216, %v1214
    %v1257 = vpack.c.b16 %v1219, %v1217
    %v1258 = vpack.c.b16 %v1220, %v1218
    %v1259 = vpack.c.b16 %v1223, %v1221
    %v1260 = vpack.c.b16 %v1224, %v1222
    %v1261 = vpack.c.b16 %v1227, %v1225
    %v1262 = vpack.c.b16 %v1228, %v1226
    %v1263 = vpack.c.b16 %v1231, %v1229
    %v1264 = vpack.c.b16 %v1232, %v1230
    %1297 = vmatpush.bf16.msra.mxu0 %v1247
    %1298 = vmatpush.bf16.msra.mxu0 %v1245
    %1299 = vmatpush.bf16.msra.mxu0 %v1243
    %1300 = vmatpush.bf16.msra.mxu0 %v1241
    %1301 = vmatpush.bf16.msra.mxu0 %v1239
    %1302 = vmatpush.bf16.msra.mxu0 %v1237
    %1303 = vmatpush.bf16.msra.mxu0 %v1235
    %1304 = vmatpush.bf16.msra.mxu0 %v1233
    %1305 = vmatmul.bf16.gmra.mxu0 %v790
    %v1306 = vpop.f32.mrf.mxu0
    %v1307 = vadd.f32 %v1090, %v1306
    %v1308 = vpop.f32.mrf.mxu0
    %v1309 = vadd.f32 %v1092, %v1308
    %1310 = vmatmul.bf16.gmra.mxu0 %v792
    %v1311 = vpop.f32.mrf.mxu0
    %v1312 = vadd.f32 %v1095, %v1311
    %v1313 = vpop.f32.mrf.mxu0
    %v1314 = vadd.f32 %v1097, %v1313
    %1315 = vdwg.mxu0
    %1316 = vmatpush.bf16.msra.mxu0 %v1263
    %1317 = vmatpush.bf16.msra.mxu0 %v1261
    %1318 = vmatpush.bf16.msra.mxu0 %v1259
    %1319 = vmatpush.bf16.msra.mxu0 %v1257
    %1320 = vmatpush.bf16.msra.mxu0 %v1255
    %1321 = vmatpush.bf16.msra.mxu0 %v1253
    %1322 = vmatpush.bf16.msra.mxu0 %v1251
    %1323 = vmatpush.bf16.msra.mxu0 %v1249
    %1324 = vmatmul.bf16.gmra.mxu0 %v791
    %v1325 = vpop.f32.mrf.mxu0
    %v1326 = vadd.f32 %v1307, %v1325
    %v1327 = vpop.f32.mrf.mxu0
    %v1328 = vadd.f32 %v1309, %v1327
    %1329 = vmatmul.bf16.gmra.mxu0 %v793
    %v1330 = vpop.f32.mrf.mxu0
    %v1331 = vadd.f32 %v1312, %v1330
    %v1332 = vpop.f32.mrf.mxu0
    %v1333 = vadd.f32 %v1314, %v1332
    %1334 = vdwg.mxu0
    %1335 = vmatpush.bf16.msra.mxu0 %v1248
    %1336 = vmatpush.bf16.msra.mxu0 %v1246
    %1337 = vmatpush.bf16.msra.mxu0 %v1244
    %1338 = vmatpush.bf16.msra.mxu0 %v1242
    %1339 = vmatpush.bf16.msra.mxu0 %v1240
    %1340 = vmatpush.bf16.msra.mxu0 %v1238
    %1341 = vmatpush.bf16.msra.mxu0 %v1236
    %1342 = vmatpush.bf16.msra.mxu0 %v1234
    %1343 = vmatmul.bf16.gmra.mxu0 %v790
    %v1344 = vpop.f32.mrf.mxu0
    %v1345 = vadd.f32 %v1128, %v1344
    %v1346 = vpop.f32.mrf.mxu0
    %v1347 = vadd.f32 %v1130, %v1346
    %1348 = vmatmul.bf16.gmra.mxu0 %v792
    %v1349 = vpop.f32.mrf.mxu0
    %v1350 = vadd.f32 %v1133, %v1349
    %v1351 = vpop.f32.mrf.mxu0
    %v1352 = vadd.f32 %v1135, %v1351
    %1353 = vdwg.mxu0
    %1354 = vmatpush.bf16.msra.mxu0 %v1264
    %1355 = vmatpush.bf16.msra.mxu0 %v1262
    %1356 = vmatpush.bf16.msra.mxu0 %v1260
    %1357 = vmatpush.bf16.msra.mxu0 %v1258
    %1358 = vmatpush.bf16.msra.mxu0 %v1256
    %1359 = vmatpush.bf16.msra.mxu0 %v1254
    %1360 = vmatpush.bf16.msra.mxu0 %v1252
    %1361 = vmatpush.bf16.msra.mxu0 %v1250
    %1362 = vmatmul.bf16.gmra.mxu0 %v791
    %v1363 = vpop.f32.mrf.mxu0
    %v1364 = vadd.f32 %v1345, %v1363
    %v1365 = vpop.f32.mrf.mxu0
    %v1366 = vadd.f32 %v1347, %v1365
    %1367 = vmatmul.bf16.gmra.mxu0 %v793
    %v1368 = vpop.f32.mrf.mxu0
    %v1369 = vadd.f32 %v1350, %v1368
    %v1370 = vpop.f32.mrf.mxu0
    %v1371 = vadd.f32 %v1352, %v1370
    %1372 = vdwg.mxu0
    %s1373 = scalar_lea.vmem [#allocation8], 512
    %v1374 = vld [vmem:[%s1373] sm:$0xff]
    %v1375 = vld [vmem:[%s1373 + $0x8] sm:$0xff]
    %v1376 = vld [vmem:[%s1373 + $0x10] sm:$0xff]
    %v1377 = vld [vmem:[%s1373 + $0x18] sm:$0xff]
    %v1378 = vld [vmem:[%s1373 + $0x20] sm:$0xff]
    %v1379 = vld [vmem:[%s1373 + $0x28] sm:$0xff]
    %v1380 = vld [vmem:[%s1373 + $0x30] sm:$0xff]
    %v1381 = vld [vmem:[%s1373 + $0x38] sm:$0xff]
    %v1382 = vld [vmem:[%s1373 + $0x40] sm:$0xff]
    %v1383 = vld [vmem:[%s1373 + $0x48] sm:$0xff]
    %v1384 = vld [vmem:[%s1373 + $0x50] sm:$0xff]
    %v1385 = vld [vmem:[%s1373 + $0x58] sm:$0xff]
    %v1386 = vld [vmem:[%s1373 + $0x60] sm:$0xff]
    %v1387 = vld [vmem:[%s1373 + $0x68] sm:$0xff]
    %v1388 = vld [vmem:[%s1373 + $0x70] sm:$0xff]
    %v1389 = vld [vmem:[%s1373 + $0x78] sm:$0xff]
    %v1390 = vld [vmem:[%s1373 + $0x80] sm:$0xff]
    %v1391 = vld [vmem:[%s1373 + $0x88] sm:$0xff]
    %v1392 = vld [vmem:[%s1373 + $0x90] sm:$0xff]
    %v1393 = vld [vmem:[%s1373 + $0x98] sm:$0xff]
    %v1394 = vld [vmem:[%s1373 + $0xa0] sm:$0xff]
    %v1395 = vld [vmem:[%s1373 + $0xa8] sm:$0xff]
    %v1396 = vld [vmem:[%s1373 + $0xb0] sm:$0xff]
    %v1397 = vld [vmem:[%s1373 + $0xb8] sm:$0xff]
    %v1398 = vld [vmem:[%s1373 + $0xc0] sm:$0xff]
    %v1399 = vld [vmem:[%s1373 + $0xc8] sm:$0xff]
    %v1400 = vld [vmem:[%s1373 + $0xd0] sm:$0xff]
    %v1401 = vld [vmem:[%s1373 + $0xd8] sm:$0xff]
    %v1402 = vld [vmem:[%s1373 + $0xe0] sm:$0xff]
    %v1403 = vld [vmem:[%s1373 + $0xe8] sm:$0xff]
    %v1404 = vld [vmem:[%s1373 + $0xf0] sm:$0xff]
    %v1405 = vld [vmem:[%s1373 + $0xf8] sm:$0xff]
    %v1438 = vunpack.c.l.b16 %v1374
    %v1439 = vunpack.c.h.b16 %v1374
    %v1440 = vunpack.c.l.b16 %v1375
    %v1441 = vunpack.c.h.b16 %v1375
    %v1442 = vunpack.c.l.b16 %v1376
    %v1443 = vunpack.c.h.b16 %v1376
    %v1444 = vunpack.c.l.b16 %v1377
    %v1445 = vunpack.c.h.b16 %v1377
    %v1446 = vunpack.c.l.b16 %v1378
    %v1447 = vunpack.c.h.b16 %v1378
    %v1448 = vunpack.c.l.b16 %v1379
    %v1449 = vunpack.c.h.b16 %v1379
    %v1450 = vunpack.c.l.b16 %v1380
    %v1451 = vunpack.c.h.b16 %v1380
    %v1452 = vunpack.c.l.b16 %v1381
    %v1453 = vunpack.c.h.b16 %v1381
    %v1454 = vunpack.c.l.b16 %v1382
    %v1455 = vunpack.c.h.b16 %v1382
    %v1456 = vunpack.c.l.b16 %v1383
    %v1457 = vunpack.c.h.b16 %v1383
    %v1458 = vunpack.c.l.b16 %v1384
    %v1459 = vunpack.c.h.b16 %v1384
    %v1460 = vunpack.c.l.b16 %v1385
    %v1461 = vunpack.c.h.b16 %v1385
    %v1462 = vunpack.c.l.b16 %v1386
    %v1463 = vunpack.c.h.b16 %v1386
    %v1464 = vunpack.c.l.b16 %v1387
    %v1465 = vunpack.c.h.b16 %v1387
    %v1466 = vunpack.c.l.b16 %v1388
    %v1467 = vunpack.c.h.b16 %v1388
    %v1468 = vunpack.c.l.b16 %v1389
    %v1469 = vunpack.c.h.b16 %v1389
    %v1470 = vunpack.c.l.b16 %v1390
    %v1471 = vunpack.c.h.b16 %v1390
    %v1472 = vunpack.c.l.b16 %v1391
    %v1473 = vunpack.c.h.b16 %v1391
    %v1474 = vunpack.c.l.b16 %v1392
    %v1475 = vunpack.c.h.b16 %v1392
    %v1476 = vunpack.c.l.b16 %v1393
    %v1477 = vunpack.c.h.b16 %v1393
    %v1478 = vunpack.c.l.b16 %v1394
    %v1479 = vunpack.c.h.b16 %v1394
    %v1480 = vunpack.c.l.b16 %v1395
    %v1481 = vunpack.c.h.b16 %v1395
    %v1482 = vunpack.c.l.b16 %v1396
    %v1483 = vunpack.c.h.b16 %v1396
    %v1484 = vunpack.c.l.b16 %v1397
    %v1485 = vunpack.c.h.b16 %v1397
    %v1486 = vunpack.c.l.b16 %v1398
    %v1487 = vunpack.c.h.b16 %v1398
    %v1488 = vunpack.c.l.b16 %v1399
    %v1489 = vunpack.c.h.b16 %v1399
    %v1490 = vunpack.c.l.b16 %v1400
    %v1491 = vunpack.c.h.b16 %v1400
    %v1492 = vunpack.c.l.b16 %v1401
    %v1493 = vunpack.c.h.b16 %v1401
    %v1494 = vunpack.c.l.b16 %v1402
    %v1495 = vunpack.c.h.b16 %v1402
    %v1496 = vunpack.c.l.b16 %v1403
    %v1497 = vunpack.c.h.b16 %v1403
    %v1498 = vunpack.c.l.b16 %v1404
    %v1499 = vunpack.c.h.b16 %v1404
    %v1500 = vunpack.c.l.b16 %v1405
    %v1501 = vunpack.c.h.b16 %v1405
    %v1502 = vpack.c.b16 %v1440, %v1438
    %v1503 = vpack.c.b16 %v1441, %v1439
    %v1504 = vpack.c.b16 %v1444, %v1442
    %v1505 = vpack.c.b16 %v1445, %v1443
    %v1506 = vpack.c.b16 %v1448, %v1446
    %v1507 = vpack.c.b16 %v1449, %v1447
    %v1508 = vpack.c.b16 %v1452, %v1450
    %v1509 = vpack.c.b16 %v1453, %v1451
    %v1510 = vpack.c.b16 %v1456, %v1454
    %v1511 = vpack.c.b16 %v1457, %v1455
    %v1512 = vpack.c.b16 %v1460, %v1458
    %v1513 = vpack.c.b16 %v1461, %v1459
    %v1514 = vpack.c.b16 %v1464, %v1462
    %v1515 = vpack.c.b16 %v1465, %v1463
    %v1516 = vpack.c.b16 %v1468, %v1466
    %v1517 = vpack.c.b16 %v1469, %v1467
    %v1518 = vpack.c.b16 %v1472, %v1470
    %v1519 = vpack.c.b16 %v1473, %v1471
    %v1520 = vpack.c.b16 %v1476, %v1474
    %v1521 = vpack.c.b16 %v1477, %v1475
    %v1522 = vpack.c.b16 %v1480, %v1478
    %v1523 = vpack.c.b16 %v1481, %v1479
    %v1524 = vpack.c.b16 %v1484, %v1482
    %v1525 = vpack.c.b16 %v1485, %v1483
    %v1526 = vpack.c.b16 %v1488, %v1486
    %v1527 = vpack.c.b16 %v1489, %v1487
    %v1528 = vpack.c.b16 %v1492, %v1490
    %v1529 = vpack.c.b16 %v1493, %v1491
    %v1530 = vpack.c.b16 %v1496, %v1494
    %v1531 = vpack.c.b16 %v1497, %v1495
    %v1532 = vpack.c.b16 %v1500, %v1498
    %v1533 = vpack.c.b16 %v1501, %v1499
    %1566 = vmatpush.bf16.msra.mxu0 %v1516
    %1567 = vmatpush.bf16.msra.mxu0 %v1514
    %1568 = vmatpush.bf16.msra.mxu0 %v1512
    %1569 = vmatpush.bf16.msra.mxu0 %v1510
    %1570 = vmatpush.bf16.msra.mxu0 %v1508
    %1571 = vmatpush.bf16.msra.mxu0 %v1506
    %1572 = vmatpush.bf16.msra.mxu0 %v1504
    %1573 = vmatpush.bf16.msra.mxu0 %v1502
    %1574 = vmatmul.bf16.gmra.mxu0 %v832
    %v1575 = vpop.f32.mrf.mxu0
    %v1576 = vadd.f32 0.0, %v1575
    %v1577 = vpop.f32.mrf.mxu0
    %v1578 = vadd.f32 0.0, %v1577
    %1579 = vmatmul.bf16.gmra.mxu0 %v834
    %v1580 = vpop.f32.mrf.mxu0
    %v1581 = vadd.f32 0.0, %v1580
    %v1582 = vpop.f32.mrf.mxu0
    %v1583 = vadd.f32 0.0, %v1582
    %1584 = vdwg.mxu0
    %1585 = vmatpush.bf16.msra.mxu0 %v1532
    %1586 = vmatpush.bf16.msra.mxu0 %v1530
    %1587 = vmatpush.bf16.msra.mxu0 %v1528
    %1588 = vmatpush.bf16.msra.mxu0 %v1526
    %1589 = vmatpush.bf16.msra.mxu0 %v1524
    %1590 = vmatpush.bf16.msra.mxu0 %v1522
    %1591 = vmatpush.bf16.msra.mxu0 %v1520
    %1592 = vmatpush.bf16.msra.mxu0 %v1518
    %1593 = vmatmul.bf16.gmra.mxu0 %v833
    %v1594 = vpop.f32.mrf.mxu0
    %v1595 = vadd.f32 %v1576, %v1594
    %v1596 = vpop.f32.mrf.mxu0
    %v1597 = vadd.f32 %v1578, %v1596
    %1598 = vmatmul.bf16.gmra.mxu0 %v835
    %v1599 = vpop.f32.mrf.mxu0
    %v1600 = vadd.f32 %v1581, %v1599
    %v1601 = vpop.f32.mrf.mxu0
    %v1602 = vadd.f32 %v1583, %v1601
    %1603 = vdwg.mxu0
    %1604 = vmatpush.bf16.msra.mxu0 %v1517
    %1605 = vmatpush.bf16.msra.mxu0 %v1515
    %1606 = vmatpush.bf16.msra.mxu0 %v1513
    %1607 = vmatpush.bf16.msra.mxu0 %v1511
    %1608 = vmatpush.bf16.msra.mxu0 %v1509
    %1609 = vmatpush.bf16.msra.mxu0 %v1507
    %1610 = vmatpush.bf16.msra.mxu0 %v1505
    %1611 = vmatpush.bf16.msra.mxu0 %v1503
    %1612 = vmatmul.bf16.gmra.mxu0 %v832
    %v1613 = vpop.f32.mrf.mxu0
    %v1614 = vadd.f32 0.0, %v1613
    %v1615 = vpop.f32.mrf.mxu0
    %v1616 = vadd.f32 0.0, %v1615
    %1617 = vmatmul.bf16.gmra.mxu0 %v834
    %v1618 = vpop.f32.mrf.mxu0
    %v1619 = vadd.f32 0.0, %v1618
    %v1620 = vpop.f32.mrf.mxu0
    %v1621 = vadd.f32 0.0, %v1620
    %1622 = vdwg.mxu0
    %1623 = vmatpush.bf16.msra.mxu0 %v1533
    %1624 = vmatpush.bf16.msra.mxu0 %v1531
    %1625 = vmatpush.bf16.msra.mxu0 %v1529
    %1626 = vmatpush.bf16.msra.mxu0 %v1527
    %1627 = vmatpush.bf16.msra.mxu0 %v1525
    %1628 = vmatpush.bf16.msra.mxu0 %v1523
    %1629 = vmatpush.bf16.msra.mxu0 %v1521
    %1630 = vmatpush.bf16.msra.mxu0 %v1519
    %1631 = vmatmul.bf16.gmra.mxu0 %v833
    %v1632 = vpop.f32.mrf.mxu0
    %v1633 = vadd.f32 %v1614, %v1632
    %v1634 = vpop.f32.mrf.mxu0
    %v1635 = vadd.f32 %v1616, %v1634
    %1636 = vmatmul.bf16.gmra.mxu0 %v835
    %v1637 = vpop.f32.mrf.mxu0
    %v1638 = vadd.f32 %v1619, %v1637
    %v1639 = vpop.f32.mrf.mxu0
    %v1640 = vadd.f32 %v1621, %v1639
    %1641 = vdwg.mxu0
    %v1642 = vadd.f32 %v1326, %v1595
    %v1643 = vadd.f32 %v1364, %v1633
    %v1644 = vadd.f32 %v1328, %v1597
    %v1645 = vadd.f32 %v1366, %v1635
    %v1646 = vadd.f32 %v1331, %v1600
    %v1647 = vadd.f32 %v1369, %v1638
    %v1648 = vadd.f32 %v1333, %v1602
    %v1649 = vadd.f32 %v1371, %v1640
    %v1650 = vld [vmem:[#allocation10] sm:$0x3]
    %v1652 = vperm.slane %v1650, 0
    %v1653 = vperm.slane %v1650, 1
    %v1656 = vadd.f32 %v1642, %v1652
    %v1657 = vadd.f32 %v1643, %v1653
    %v1658 = vadd.f32 %v1644, %v1652
    %v1659 = vadd.f32 %v1645, %v1653
    %v1660 = vadd.f32 %v1646, %v1652
    %v1661 = vadd.f32 %v1647, %v1653
    %v1662 = vadd.f32 %v1648, %v1652
    %v1663 = vadd.f32 %v1649, %v1653
    %v1664 = vmax.f32 %v1656, 0.0
    %v1665 = vmax.f32 %v1657, 0.0
    %v1666 = vmax.f32 %v1658, 0.0
    %v1667 = vmax.f32 %v1659, 0.0
    %v1668 = vmax.f32 %v1660, 0.0
    %v1669 = vmax.f32 %v1661, 0.0
    %v1670 = vmax.f32 %v1662, 0.0
    %v1671 = vmax.f32 %v1663, 0.0
    %v1672 = vpack.c.bf16 %v1666, %v1664
    %v1673 = vpack.c.bf16 %v1667, %v1665
    %v1674 = vpack.c.bf16 %v1670, %v1668
    %v1675 = vpack.c.bf16 %v1671, %v1669
    %1676 = vmatpush.bf16.msra.mxu0 0
    %1677 = vmatpush.bf16.msra.mxu0 0
    %1678 = vmatpush.bf16.msra.mxu0 0
    %1679 = vmatpush.bf16.msra.mxu0 0
    %1680 = vmatpush.bf16.msra.mxu0 0
    %1681 = vmatpush.bf16.msra.mxu0 0
    %1682 = vmatpush.bf16.msra.mxu0 %v1674
    %1683 = vmatpush.bf16.msra.mxu0 %v1672
    %1684 = vmatmul.bf16.gmra.mxu0 %v251
    %v1685 = vpop.f32.mrf.mxu0
    %v1686 = vadd.f32 0.0, %v1685
    %v1687 = vpop.f32.mrf.mxu0
    %v1688 = vadd.f32 0.0, %v1687
    %1689 = vmatmul.bf16.gmra.mxu0 %v254
    %v1690 = vpop.f32.mrf.mxu0
    %v1691 = vadd.f32 0.0, %v1690
    %v1692 = vpop.f32.mrf.mxu0
    %v1693 = vadd.f32 0.0, %v1692
    %1694 = vdwg.mxu0
    %1695 = vmatpush.bf16.msra.mxu0 0
    %1696 = vmatpush.bf16.msra.mxu0 0
    %1697 = vmatpush.bf16.msra.mxu0 0
    %1698 = vmatpush.bf16.msra.mxu0 0
    %1699 = vmatpush.bf16.msra.mxu0 0
    %1700 = vmatpush.bf16.msra.mxu0 0
    %1701 = vmatpush.bf16.msra.mxu0 %v1675
    %1702 = vmatpush.bf16.msra.mxu0 %v1673
    %1703 = vmatmul.bf16.gmra.mxu0 %v251
    %v1704 = vpop.f32.mrf.mxu0
    %v1705 = vadd.f32 0.0, %v1704
    %v1706 = vpop.f32.mrf.mxu0
    %v1707 = vadd.f32 0.0, %v1706
    %1708 = vmatmul.bf16.gmra.mxu0 %v254
    %v1709 = vpop.f32.mrf.mxu0
    %v1710 = vadd.f32 0.0, %v1709
    %v1711 = vpop.f32.mrf.mxu0
    %v1712 = vadd.f32 0.0, %v1711
    %1713 = vdwg.mxu0
    %v1714 = vpack.c.bf16 %v1688, %v1686
    %v1715 = vpack.c.bf16 %v1707, %v1705
    %v1716 = vpack.c.bf16 %v1693, %v1691
    %v1717 = vpack.c.bf16 %v1712, %v1710
    %1718 = vmatpush.bf16.msra.mxu0 0
    %1719 = vmatpush.bf16.msra.mxu0 0
    %1720 = vmatpush.bf16.msra.mxu0 0
    %1721 = vmatpush.bf16.msra.mxu0 0
    %1722 = vmatpush.bf16.msra.mxu0 0
    %1723 = vmatpush.bf16.msra.mxu0 0
    %1724 = vmatpush.bf16.msra.mxu0 %v1674
    %1725 = vmatpush.bf16.msra.mxu0 %v1672
    %1726 = vmatmul.bf16.gmra.mxu0 %v288
    %v1727 = vpop.f32.mrf.mxu0
    %v1728 = vadd.f32 0.0, %v1727
    %v1729 = vpop.f32.mrf.mxu0
    %v1730 = vadd.f32 0.0, %v1729
    %1731 = vmatmul.bf16.gmra.mxu0 %v291
    %v1732 = vpop.f32.mrf.mxu0
    %v1733 = vadd.f32 0.0, %v1732
    %v1734 = vpop.f32.mrf.mxu0
    %v1735 = vadd.f32 0.0, %v1734
    %1736 = vdwg.mxu0
    %1737 = vmatpush.bf16.msra.mxu0 0
    %1738 = vmatpush.bf16.msra.mxu0 0
    %1739 = vmatpush.bf16.msra.mxu0 0
    %1740 = vmatpush.bf16.msra.mxu0 0
    %1741 = vmatpush.bf16.msra.mxu0 0
    %1742 = vmatpush.bf16.msra.mxu0 0
    %1743 = vmatpush.bf16.msra.mxu0 %v1675
    %1744 = vmatpush.bf16.msra.mxu0 %v1673
    %1745 = vmatmul.bf16.gmra.mxu0 %v288
    %v1746 = vpop.f32.mrf.mxu0
    %v1747 = vadd.f32 0.0, %v1746
    %v1748 = vpop.f32.mrf.mxu0
    %v1749 = vadd.f32 0.0, %v1748
    %1750 = vmatmul.bf16.gmra.mxu0 %v291
    %v1751 = vpop.f32.mrf.mxu0
    %v1752 = vadd.f32 0.0, %v1751
    %v1753 = vpop.f32.mrf.mxu0
    %v1754 = vadd.f32 0.0, %v1753
    %1755 = vdwg.mxu0
    %v1756 = vpack.c.bf16 %v1730, %v1728
    %v1757 = vpack.c.bf16 %v1749, %v1747
    %v1758 = vpack.c.bf16 %v1735, %v1733
    %v1759 = vpack.c.bf16 %v1754, %v1752
    %v1760 = vld [vmem:[#allocation11] sm:$0xff]
    %v1761 = vld [vmem:[#allocation11 + $0x8] sm:$0xff]
    %v1762 = vld [vmem:[#allocation11 + $0x10] sm:$0xff]
    %v1763 = vld [vmem:[#allocation11 + $0x18] sm:$0xff]
    %v1764 = vld [vmem:[#allocation11 + $0x20] sm:$0xff]
    %v1765 = vld [vmem:[#allocation11 + $0x28] sm:$0xff]
    %v1766 = vld [vmem:[#allocation11 + $0x30] sm:$0xff]
    %v1767 = vld [vmem:[#allocation11 + $0x38] sm:$0xff]
    %v1768 = vld [vmem:[#allocation11 + $0x40] sm:$0xff]
    %v1769 = vld [vmem:[#allocation11 + $0x48] sm:$0xff]
    %v1770 = vld [vmem:[#allocation11 + $0x50] sm:$0xff]
    %v1771 = vld [vmem:[#allocation11 + $0x58] sm:$0xff]
    %v1772 = vld [vmem:[#allocation11 + $0x60] sm:$0xff]
    %v1773 = vld [vmem:[#allocation11 + $0x68] sm:$0xff]
    %v1774 = vld [vmem:[#allocation11 + $0x70] sm:$0xff]
    %v1775 = vld [vmem:[#allocation11 + $0x78] sm:$0xff]
    %v1776 = vld [vmem:[#allocation11 + $0x80] sm:$0xff]
    %v1777 = vld [vmem:[#allocation11 + $0x88] sm:$0xff]
    %v1778 = vld [vmem:[#allocation11 + $0x90] sm:$0xff]
    %v1779 = vld [vmem:[#allocation11 + $0x98] sm:$0xff]
    %v1780 = vld [vmem:[#allocation11 + $0xa0] sm:$0xff]
    %v1781 = vld [vmem:[#allocation11 + $0xa8] sm:$0xff]
    %v1782 = vld [vmem:[#allocation11 + $0xb0] sm:$0xff]
    %v1783 = vld [vmem:[#allocation11 + $0xb8] sm:$0xff]
    %v1784 = vld [vmem:[#allocation11 + $0xc0] sm:$0xff]
    %v1785 = vld [vmem:[#allocation11 + $0xc8] sm:$0xff]
    %v1786 = vld [vmem:[#allocation11 + $0xd0] sm:$0xff]
    %v1787 = vld [vmem:[#allocation11 + $0xd8] sm:$0xff]
    %v1788 = vld [vmem:[#allocation11 + $0xe0] sm:$0xff]
    %v1789 = vld [vmem:[#allocation11 + $0xe8] sm:$0xff]
    %v1790 = vld [vmem:[#allocation11 + $0xf0] sm:$0xff]
    %v1791 = vld [vmem:[#allocation11 + $0xf8] sm:$0xff]
    %s1792 = scalar_lea.vmem [#allocation11], 256
    %v1793 = vld [vmem:[%s1792] sm:$0xff]
    %v1794 = vld [vmem:[%s1792 + $0x8] sm:$0xff]
    %v1795 = vld [vmem:[%s1792 + $0x10] sm:$0xff]
    %v1796 = vld [vmem:[%s1792 + $0x18] sm:$0xff]
    %v1797 = vld [vmem:[%s1792 + $0x20] sm:$0xff]
    %v1798 = vld [vmem:[%s1792 + $0x28] sm:$0xff]
    %v1799 = vld [vmem:[%s1792 + $0x30] sm:$0xff]
    %v1800 = vld [vmem:[%s1792 + $0x38] sm:$0xff]
    %v1801 = vld [vmem:[%s1792 + $0x40] sm:$0xff]
    %v1802 = vld [vmem:[%s1792 + $0x48] sm:$0xff]
    %v1803 = vld [vmem:[%s1792 + $0x50] sm:$0xff]
    %v1804 = vld [vmem:[%s1792 + $0x58] sm:$0xff]
    %v1805 = vld [vmem:[%s1792 + $0x60] sm:$0xff]
    %v1806 = vld [vmem:[%s1792 + $0x68] sm:$0xff]
    %v1807 = vld [vmem:[%s1792 + $0x70] sm:$0xff]
    %v1808 = vld [vmem:[%s1792 + $0x78] sm:$0xff]
    %v1809 = vld [vmem:[%s1792 + $0x80] sm:$0xff]
    %v1810 = vld [vmem:[%s1792 + $0x88] sm:$0xff]
    %v1811 = vld [vmem:[%s1792 + $0x90] sm:$0xff]
    %v1812 = vld [vmem:[%s1792 + $0x98] sm:$0xff]
    %v1813 = vld [vmem:[%s1792 + $0xa0] sm:$0xff]
    %v1814 = vld [vmem:[%s1792 + $0xa8] sm:$0xff]
    %v1815 = vld [vmem:[%s1792 + $0xb0] sm:$0xff]
    %v1816 = vld [vmem:[%s1792 + $0xb8] sm:$0xff]
    %v1817 = vld [vmem:[%s1792 + $0xc0] sm:$0xff]
    %v1818 = vld [vmem:[%s1792 + $0xc8] sm:$0xff]
    %v1819 = vld [vmem:[%s1792 + $0xd0] sm:$0xff]
    %v1820 = vld [vmem:[%s1792 + $0xd8] sm:$0xff]
    %v1821 = vld [vmem:[%s1792 + $0xe0] sm:$0xff]
    %v1822 = vld [vmem:[%s1792 + $0xe8] sm:$0xff]
    %v1823 = vld [vmem:[%s1792 + $0xf0] sm:$0xff]
    %v1824 = vld [vmem:[%s1792 + $0xf8] sm:$0xff]
    %v1857 = vunpack.c.l.b16 %v1793
    %v1858 = vunpack.c.h.b16 %v1793
    %v1859 = vunpack.c.l.b16 %v1794
    %v1860 = vunpack.c.h.b16 %v1794
    %v1861 = vunpack.c.l.b16 %v1795
    %v1862 = vunpack.c.h.b16 %v1795
    %v1863 = vunpack.c.l.b16 %v1796
    %v1864 = vunpack.c.h.b16 %v1796
    %v1865 = vunpack.c.l.b16 %v1797
    %v1866 = vunpack.c.h.b16 %v1797
    %v1867 = vunpack.c.l.b16 %v1798
    %v1868 = vunpack.c.h.b16 %v1798
    %v1869 = vunpack.c.l.b16 %v1799
    %v1870 = vunpack.c.h.b16 %v1799
    %v1871 = vunpack.c.l.b16 %v1800
    %v1872 = vunpack.c.h.b16 %v1800
    %v1873 = vunpack.c.l.b16 %v1801
    %v1874 = vunpack.c.h.b16 %v1801
    %v1875 = vunpack.c.l.b16 %v1802
    %v1876 = vunpack.c.h.b16 %v1802
    %v1877 = vunpack.c.l.b16 %v1803
    %v1878 = vunpack.c.h.b16 %v1803
    %v1879 = vunpack.c.l.b16 %v1804
    %v1880 = vunpack.c.h.b16 %v1804
    %v1881 = vunpack.c.l.b16 %v1805
    %v1882 = vunpack.c.h.b16 %v1805
    %v1883 = vunpack.c.l.b16 %v1806
    %v1884 = vunpack.c.h.b16 %v1806
    %v1885 = vunpack.c.l.b16 %v1807
    %v1886 = vunpack.c.h.b16 %v1807
    %v1887 = vunpack.c.l.b16 %v1808
    %v1888 = vunpack.c.h.b16 %v1808
    %v1889 = vunpack.c.l.b16 %v1809
    %v1890 = vunpack.c.h.b16 %v1809
    %v1891 = vunpack.c.l.b16 %v1810
    %v1892 = vunpack.c.h.b16 %v1810
    %v1893 = vunpack.c.l.b16 %v1811
    %v1894 = vunpack.c.h.b16 %v1811
    %v1895 = vunpack.c.l.b16 %v1812
    %v1896 = vunpack.c.h.b16 %v1812
    %v1897 = vunpack.c.l.b16 %v1813
    %v1898 = vunpack.c.h.b16 %v1813
    %v1899 = vunpack.c.l.b16 %v1814
    %v1900 = vunpack.c.h.b16 %v1814
    %v1901 = vunpack.c.l.b16 %v1815
    %v1902 = vunpack.c.h.b16 %v1815
    %v1903 = vunpack.c.l.b16 %v1816
    %v1904 = vunpack.c.h.b16 %v1816
    %v1905 = vunpack.c.l.b16 %v1817
    %v1906 = vunpack.c.h.b16 %v1817
    %v1907 = vunpack.c.l.b16 %v1818
    %v1908 = vunpack.c.h.b16 %v1818
    %v1909 = vunpack.c.l.b16 %v1819
    %v1910 = vunpack.c.h.b16 %v1819
    %v1911 = vunpack.c.l.b16 %v1820
    %v1912 = vunpack.c.h.b16 %v1820
    %v1913 = vunpack.c.l.b16 %v1821
    %v1914 = vunpack.c.h.b16 %v1821
    %v1915 = vunpack.c.l.b16 %v1822
    %v1916 = vunpack.c.h.b16 %v1822
    %v1917 = vunpack.c.l.b16 %v1823
    %v1918 = vunpack.c.h.b16 %v1823
    %v1919 = vunpack.c.l.b16 %v1824
    %v1920 = vunpack.c.h.b16 %v1824
    %v1921 = vpack.c.b16 %v1859, %v1857
    %v1922 = vpack.c.b16 %v1860, %v1858
    %v1923 = vpack.c.b16 %v1863, %v1861
    %v1924 = vpack.c.b16 %v1864, %v1862
    %v1925 = vpack.c.b16 %v1867, %v1865
    %v1926 = vpack.c.b16 %v1868, %v1866
    %v1927 = vpack.c.b16 %v1871, %v1869
    %v1928 = vpack.c.b16 %v1872, %v1870
    %v1929 = vpack.c.b16 %v1875, %v1873
    %v1930 = vpack.c.b16 %v1876, %v1874
    %v1931 = vpack.c.b16 %v1879, %v1877
    %v1932 = vpack.c.b16 %v1880, %v1878
    %v1933 = vpack.c.b16 %v1883, %v1881
    %v1934 = vpack.c.b16 %v1884, %v1882
    %v1935 = vpack.c.b16 %v1887, %v1885
    %v1936 = vpack.c.b16 %v1888, %v1886
    %v1937 = vpack.c.b16 %v1891, %v1889
    %v1938 = vpack.c.b16 %v1892, %v1890
    %v1939 = vpack.c.b16 %v1895, %v1893
    %v1940 = vpack.c.b16 %v1896, %v1894
    %v1941 = vpack.c.b16 %v1899, %v1897
    %v1942 = vpack.c.b16 %v1900, %v1898
    %v1943 = vpack.c.b16 %v1903, %v1901
    %v1944 = vpack.c.b16 %v1904, %v1902
    %v1945 = vpack.c.b16 %v1907, %v1905
    %v1946 = vpack.c.b16 %v1908, %v1906
    %v1947 = vpack.c.b16 %v1911, %v1909
    %v1948 = vpack.c.b16 %v1912, %v1910
    %v1949 = vpack.c.b16 %v1915, %v1913
    %v1950 = vpack.c.b16 %v1916, %v1914
    %v1951 = vpack.c.b16 %v1919, %v1917
    %v1952 = vpack.c.b16 %v1920, %v1918
    %1985 = vmatpush.bf16.msra.mxu0 %v1935
    %1986 = vmatpush.bf16.msra.mxu0 %v1933
    %1987 = vmatpush.bf16.msra.mxu0 %v1931
    %1988 = vmatpush.bf16.msra.mxu0 %v1929
    %1989 = vmatpush.bf16.msra.mxu0 %v1927
    %1990 = vmatpush.bf16.msra.mxu0 %v1925
    %1991 = vmatpush.bf16.msra.mxu0 %v1923
    %1992 = vmatpush.bf16.msra.mxu0 %v1921
    %1993 = vmatmul.bf16.gmra.mxu0 %v1672
    %v1994 = vpop.f32.mrf.mxu0
    %v1995 = vadd.f32 0.0, %v1994
    %v1996 = vpop.f32.mrf.mxu0
    %v1997 = vadd.f32 0.0, %v1996
    %1998 = vmatmul.bf16.gmra.mxu0 %v1674
    %v1999 = vpop.f32.mrf.mxu0
    %v2000 = vadd.f32 0.0, %v1999
    %v2001 = vpop.f32.mrf.mxu0
    %v2002 = vadd.f32 0.0, %v2001
    %2003 = vdwg.mxu0
    %2004 = vmatpush.bf16.msra.mxu0 %v1951
    %2005 = vmatpush.bf16.msra.mxu0 %v1949
    %2006 = vmatpush.bf16.msra.mxu0 %v1947
    %2007 = vmatpush.bf16.msra.mxu0 %v1945
    %2008 = vmatpush.bf16.msra.mxu0 %v1943
    %2009 = vmatpush.bf16.msra.mxu0 %v1941
    %2010 = vmatpush.bf16.msra.mxu0 %v1939
    %2011 = vmatpush.bf16.msra.mxu0 %v1937
    %2012 = vmatmul.bf16.gmra.mxu0 %v1673
    %v2013 = vpop.f32.mrf.mxu0
    %v2014 = vadd.f32 %v1995, %v2013
    %v2015 = vpop.f32.mrf.mxu0
    %v2016 = vadd.f32 %v1997, %v2015
    %2017 = vmatmul.bf16.gmra.mxu0 %v1675
    %v2018 = vpop.f32.mrf.mxu0
    %v2019 = vadd.f32 %v2000, %v2018
    %v2020 = vpop.f32.mrf.mxu0
    %v2021 = vadd.f32 %v2002, %v2020
    %2022 = vdwg.mxu0
    %2023 = vmatpush.bf16.msra.mxu0 %v1936
    %2024 = vmatpush.bf16.msra.mxu0 %v1934
    %2025 = vmatpush.bf16.msra.mxu0 %v1932
    %2026 = vmatpush.bf16.msra.mxu0 %v1930
    %2027 = vmatpush.bf16.msra.mxu0 %v1928
    %2028 = vmatpush.bf16.msra.mxu0 %v1926
    %2029 = vmatpush.bf16.msra.mxu0 %v1924
    %2030 = vmatpush.bf16.msra.mxu0 %v1922
    %2031 = vmatmul.bf16.gmra.mxu0 %v1672
    %v2032 = vpop.f32.mrf.mxu0
    %v2033 = vadd.f32 0.0, %v2032
    %v2034 = vpop.f32.mrf.mxu0
    %v2035 = vadd.f32 0.0, %v2034
    %2036 = vmatmul.bf16.gmra.mxu0 %v1674
    %v2037 = vpop.f32.mrf.mxu0
    %v2038 = vadd.f32 0.0, %v2037
    %v2039 = vpop.f32.mrf.mxu0
    %v2040 = vadd.f32 0.0, %v2039
    %2041 = vdwg.mxu0
    %2042 = vmatpush.bf16.msra.mxu0 %v1952
    %2043 = vmatpush.bf16.msra.mxu0 %v1950
    %2044 = vmatpush.bf16.msra.mxu0 %v1948
    %2045 = vmatpush.bf16.msra.mxu0 %v1946
    %2046 = vmatpush.bf16.msra.mxu0 %v1944
    %2047 = vmatpush.bf16.msra.mxu0 %v1942
    %2048 = vmatpush.bf16.msra.mxu0 %v1940
    %2049 = vmatpush.bf16.msra.mxu0 %v1938
    %2050 = vmatmul.bf16.gmra.mxu0 %v1673
    %v2051 = vpop.f32.mrf.mxu0
    %v2052 = vadd.f32 %v2033, %v2051
    %v2053 = vpop.f32.mrf.mxu0
    %v2054 = vadd.f32 %v2035, %v2053
    %2055 = vmatmul.bf16.gmra.mxu0 %v1675
    %v2056 = vpop.f32.mrf.mxu0
    %v2057 = vadd.f32 %v2038, %v2056
    %v2058 = vpop.f32.mrf.mxu0
    %v2059 = vadd.f32 %v2040, %v2058
    %2060 = vdwg.mxu0
    %v2093 = vunpack.c.l.b16 %v1760
    %v2094 = vunpack.c.h.b16 %v1760
    %v2095 = vunpack.c.l.b16 %v1761
    %v2096 = vunpack.c.h.b16 %v1761
    %v2097 = vunpack.c.l.b16 %v1762
    %v2098 = vunpack.c.h.b16 %v1762
    %v2099 = vunpack.c.l.b16 %v1763
    %v2100 = vunpack.c.h.b16 %v1763
    %v2101 = vunpack.c.l.b16 %v1764
    %v2102 = vunpack.c.h.b16 %v1764
    %v2103 = vunpack.c.l.b16 %v1765
    %v2104 = vunpack.c.h.b16 %v1765
    %v2105 = vunpack.c.l.b16 %v1766
    %v2106 = vunpack.c.h.b16 %v1766
    %v2107 = vunpack.c.l.b16 %v1767
    %v2108 = vunpack.c.h.b16 %v1767
    %v2109 = vunpack.c.l.b16 %v1768
    %v2110 = vunpack.c.h.b16 %v1768
    %v2111 = vunpack.c.l.b16 %v1769
    %v2112 = vunpack.c.h.b16 %v1769
    %v2113 = vunpack.c.l.b16 %v1770
    %v2114 = vunpack.c.h.b16 %v1770
    %v2115 = vunpack.c.l.b16 %v1771
    %v2116 = vunpack.c.h.b16 %v1771
    %v2117 = vunpack.c.l.b16 %v1772
    %v2118 = vunpack.c.h.b16 %v1772
    %v2119 = vunpack.c.l.b16 %v1773
    %v2120 = vunpack.c.h.b16 %v1773
    %v2121 = vunpack.c.l.b16 %v1774
    %v2122 = vunpack.c.h.b16 %v1774
    %v2123 = vunpack.c.l.b16 %v1775
    %v2124 = vunpack.c.h.b16 %v1775
    %v2125 = vunpack.c.l.b16 %v1776
    %v2126 = vunpack.c.h.b16 %v1776
    %v2127 = vunpack.c.l.b16 %v1777
    %v2128 = vunpack.c.h.b16 %v1777
    %v2129 = vunpack.c.l.b16 %v1778
    %v2130 = vunpack.c.h.b16 %v1778
    %v2131 = vunpack.c.l.b16 %v1779
    %v2132 = vunpack.c.h.b16 %v1779
    %v2133 = vunpack.c.l.b16 %v1780
    %v2134 = vunpack.c.h.b16 %v1780
    %v2135 = vunpack.c.l.b16 %v1781
    %v2136 = vunpack.c.h.b16 %v1781
    %v2137 = vunpack.c.l.b16 %v1782
    %v2138 = vunpack.c.h.b16 %v1782
    %v2139 = vunpack.c.l.b16 %v1783
    %v2140 = vunpack.c.h.b16 %v1783
    %v2141 = vunpack.c.l.b16 %v1784
    %v2142 = vunpack.c.h.b16 %v1784
    %v2143 = vunpack.c.l.b16 %v1785
    %v2144 = vunpack.c.h.b16 %v1785
    %v2145 = vunpack.c.l.b16 %v1786
    %v2146 = vunpack.c.h.b16 %v1786
    %v2147 = vunpack.c.l.b16 %v1787
    %v2148 = vunpack.c.h.b16 %v1787
    %v2149 = vunpack.c.l.b16 %v1788
    %v2150 = vunpack.c.h.b16 %v1788
    %v2151 = vunpack.c.l.b16 %v1789
    %v2152 = vunpack.c.h.b16 %v1789
    %v2153 = vunpack.c.l.b16 %v1790
    %v2154 = vunpack.c.h.b16 %v1790
    %v2155 = vunpack.c.l.b16 %v1791
    %v2156 = vunpack.c.h.b16 %v1791
    %v2157 = vpack.c.b16 %v2095, %v2093
    %v2158 = vpack.c.b16 %v2096, %v2094
    %v2159 = vpack.c.b16 %v2099, %v2097
    %v2160 = vpack.c.b16 %v2100, %v2098
    %v2161 = vpack.c.b16 %v2103, %v2101
    %v2162 = vpack.c.b16 %v2104, %v2102
    %v2163 = vpack.c.b16 %v2107, %v2105
    %v2164 = vpack.c.b16 %v2108, %v2106
    %v2165 = vpack.c.b16 %v2111, %v2109
    %v2166 = vpack.c.b16 %v2112, %v2110
    %v2167 = vpack.c.b16 %v2115, %v2113
    %v2168 = vpack.c.b16 %v2116, %v2114
    %v2169 = vpack.c.b16 %v2119, %v2117
    %v2170 = vpack.c.b16 %v2120, %v2118
    %v2171 = vpack.c.b16 %v2123, %v2121
    %v2172 = vpack.c.b16 %v2124, %v2122
    %v2173 = vpack.c.b16 %v2127, %v2125
    %v2174 = vpack.c.b16 %v2128, %v2126
    %v2175 = vpack.c.b16 %v2131, %v2129
    %v2176 = vpack.c.b16 %v2132, %v2130
    %v2177 = vpack.c.b16 %v2135, %v2133
    %v2178 = vpack.c.b16 %v2136, %v2134
    %v2179 = vpack.c.b16 %v2139, %v2137
    %v2180 = vpack.c.b16 %v2140, %v2138
    %v2181 = vpack.c.b16 %v2143, %v2141
    %v2182 = vpack.c.b16 %v2144, %v2142
    %v2183 = vpack.c.b16 %v2147, %v2145
    %v2184 = vpack.c.b16 %v2148, %v2146
    %v2185 = vpack.c.b16 %v2151, %v2149
    %v2186 = vpack.c.b16 %v2152, %v2150
    %v2187 = vpack.c.b16 %v2155, %v2153
    %v2188 = vpack.c.b16 %v2156, %v2154
    %2221 = vmatpush.bf16.msra.mxu0 %v2171
    %2222 = vmatpush.bf16.msra.mxu0 %v2169
    %2223 = vmatpush.bf16.msra.mxu0 %v2167
    %2224 = vmatpush.bf16.msra.mxu0 %v2165
    %2225 = vmatpush.bf16.msra.mxu0 %v2163
    %2226 = vmatpush.bf16.msra.mxu0 %v2161
    %2227 = vmatpush.bf16.msra.mxu0 %v2159
    %2228 = vmatpush.bf16.msra.mxu0 %v2157
    %2229 = vmatmul.bf16.gmra.mxu0 %v1714
    %v2230 = vpop.f32.mrf.mxu0
    %v2231 = vadd.f32 %v2014, %v2230
    %v2232 = vpop.f32.mrf.mxu0
    %v2233 = vadd.f32 %v2016, %v2232
    %2234 = vmatmul.bf16.gmra.mxu0 %v1716
    %v2235 = vpop.f32.mrf.mxu0
    %v2236 = vadd.f32 %v2019, %v2235
    %v2237 = vpop.f32.mrf.mxu0
    %v2238 = vadd.f32 %v2021, %v2237
    %2239 = vdwg.mxu0
    %2240 = vmatpush.bf16.msra.mxu0 %v2187
    %2241 = vmatpush.bf16.msra.mxu0 %v2185
    %2242 = vmatpush.bf16.msra.mxu0 %v2183
    %2243 = vmatpush.bf16.msra.mxu0 %v2181
    %2244 = vmatpush.bf16.msra.mxu0 %v2179
    %2245 = vmatpush.bf16.msra.mxu0 %v2177
    %2246 = vmatpush.bf16.msra.mxu0 %v2175
    %2247 = vmatpush.bf16.msra.mxu0 %v2173
    %2248 = vmatmul.bf16.gmra.mxu0 %v1715
    %v2249 = vpop.f32.mrf.mxu0
    %v2250 = vadd.f32 %v2231, %v2249
    %v2251 = vpop.f32.mrf.mxu0
    %v2252 = vadd.f32 %v2233, %v2251
    %2253 = vmatmul.bf16.gmra.mxu0 %v1717
    %v2254 = vpop.f32.mrf.mxu0
    %v2255 = vadd.f32 %v2236, %v2254
    %v2256 = vpop.f32.mrf.mxu0
    %v2257 = vadd.f32 %v2238, %v2256
    %2258 = vdwg.mxu0
    %2259 = vmatpush.bf16.msra.mxu0 %v2172
    %2260 = vmatpush.bf16.msra.mxu0 %v2170
    %2261 = vmatpush.bf16.msra.mxu0 %v2168
    %2262 = vmatpush.bf16.msra.mxu0 %v2166
    %2263 = vmatpush.bf16.msra.mxu0 %v2164
    %2264 = vmatpush.bf16.msra.mxu0 %v2162
    %2265 = vmatpush.bf16.msra.mxu0 %v2160
    %2266 = vmatpush.bf16.msra.mxu0 %v2158
    %2267 = vmatmul.bf16.gmra.mxu0 %v1714
    %v2268 = vpop.f32.mrf.mxu0
    %v2269 = vadd.f32 %v2052, %v2268
    %v2270 = vpop.f32.mrf.mxu0
    %v2271 = vadd.f32 %v2054, %v2270
    %2272 = vmatmul.bf16.gmra.mxu0 %v1716
    %v2273 = vpop.f32.mrf.mxu0
    %v2274 = vadd.f32 %v2057, %v2273
    %v2275 = vpop.f32.mrf.mxu0
    %v2276 = vadd.f32 %v2059, %v2275
    %2277 = vdwg.mxu0
    %2278 = vmatpush.bf16.msra.mxu0 %v2188
    %2279 = vmatpush.bf16.msra.mxu0 %v2186
    %2280 = vmatpush.bf16.msra.mxu0 %v2184
    %2281 = vmatpush.bf16.msra.mxu0 %v2182
    %2282 = vmatpush.bf16.msra.mxu0 %v2180
    %2283 = vmatpush.bf16.msra.mxu0 %v2178
    %2284 = vmatpush.bf16.msra.mxu0 %v2176
    %2285 = vmatpush.bf16.msra.mxu0 %v2174
    %2286 = vmatmul.bf16.gmra.mxu0 %v1715
    %v2287 = vpop.f32.mrf.mxu0
    %v2288 = vadd.f32 %v2269, %v2287
    %v2289 = vpop.f32.mrf.mxu0
    %v2290 = vadd.f32 %v2271, %v2289
    %2291 = vmatmul.bf16.gmra.mxu0 %v1717
    %v2292 = vpop.f32.mrf.mxu0
    %v2293 = vadd.f32 %v2274, %v2292
    %v2294 = vpop.f32.mrf.mxu0
    %v2295 = vadd.f32 %v2276, %v2294
    %2296 = vdwg.mxu0
    %s2297 = scalar_lea.vmem [#allocation11], 512
    %v2298 = vld [vmem:[%s2297] sm:$0xff]
    %v2299 = vld [vmem:[%s2297 + $0x8] sm:$0xff]
    %v2300 = vld [vmem:[%s2297 + $0x10] sm:$0xff]
    %v2301 = vld [vmem:[%s2297 + $0x18] sm:$0xff]
    %v2302 = vld [vmem:[%s2297 + $0x20] sm:$0xff]
    %v2303 = vld [vmem:[%s2297 + $0x28] sm:$0xff]
    %v2304 = vld [vmem:[%s2297 + $0x30] sm:$0xff]
    %v2305 = vld [vmem:[%s2297 + $0x38] sm:$0xff]
    %v2306 = vld [vmem:[%s2297 + $0x40] sm:$0xff]
    %v2307 = vld [vmem:[%s2297 + $0x48] sm:$0xff]
    %v2308 = vld [vmem:[%s2297 + $0x50] sm:$0xff]
    %v2309 = vld [vmem:[%s2297 + $0x58] sm:$0xff]
    %v2310 = vld [vmem:[%s2297 + $0x60] sm:$0xff]
    %v2311 = vld [vmem:[%s2297 + $0x68] sm:$0xff]
    %v2312 = vld [vmem:[%s2297 + $0x70] sm:$0xff]
    %v2313 = vld [vmem:[%s2297 + $0x78] sm:$0xff]
    %v2314 = vld [vmem:[%s2297 + $0x80] sm:$0xff]
    %v2315 = vld [vmem:[%s2297 + $0x88] sm:$0xff]
    %v2316 = vld [vmem:[%s2297 + $0x90] sm:$0xff]
    %v2317 = vld [vmem:[%s2297 + $0x98] sm:$0xff]
    %v2318 = vld [vmem:[%s2297 + $0xa0] sm:$0xff]
    %v2319 = vld [vmem:[%s2297 + $0xa8] sm:$0xff]
    %v2320 = vld [vmem:[%s2297 + $0xb0] sm:$0xff]
    %v2321 = vld [vmem:[%s2297 + $0xb8] sm:$0xff]
    %v2322 = vld [vmem:[%s2297 + $0xc0] sm:$0xff]
    %v2323 = vld [vmem:[%s2297 + $0xc8] sm:$0xff]
    %v2324 = vld [vmem:[%s2297 + $0xd0] sm:$0xff]
    %v2325 = vld [vmem:[%s2297 + $0xd8] sm:$0xff]
    %v2326 = vld [vmem:[%s2297 + $0xe0] sm:$0xff]
    %v2327 = vld [vmem:[%s2297 + $0xe8] sm:$0xff]
    %v2328 = vld [vmem:[%s2297 + $0xf0] sm:$0xff]
    %v2329 = vld [vmem:[%s2297 + $0xf8] sm:$0xff]
    %v2362 = vunpack.c.l.b16 %v2298
    %v2363 = vunpack.c.h.b16 %v2298
    %v2364 = vunpack.c.l.b16 %v2299
    %v2365 = vunpack.c.h.b16 %v2299
    %v2366 = vunpack.c.l.b16 %v2300
    %v2367 = vunpack.c.h.b16 %v2300
    %v2368 = vunpack.c.l.b16 %v2301
    %v2369 = vunpack.c.h.b16 %v2301
    %v2370 = vunpack.c.l.b16 %v2302
    %v2371 = vunpack.c.h.b16 %v2302
    %v2372 = vunpack.c.l.b16 %v2303
    %v2373 = vunpack.c.h.b16 %v2303
    %v2374 = vunpack.c.l.b16 %v2304
    %v2375 = vunpack.c.h.b16 %v2304
    %v2376 = vunpack.c.l.b16 %v2305
    %v2377 = vunpack.c.h.b16 %v2305
    %v2378 = vunpack.c.l.b16 %v2306
    %v2379 = vunpack.c.h.b16 %v2306
    %v2380 = vunpack.c.l.b16 %v2307
    %v2381 = vunpack.c.h.b16 %v2307
    %v2382 = vunpack.c.l.b16 %v2308
    %v2383 = vunpack.c.h.b16 %v2308
    %v2384 = vunpack.c.l.b16 %v2309
    %v2385 = vunpack.c.h.b16 %v2309
    %v2386 = vunpack.c.l.b16 %v2310
    %v2387 = vunpack.c.h.b16 %v2310
    %v2388 = vunpack.c.l.b16 %v2311
    %v2389 = vunpack.c.h.b16 %v2311
    %v2390 = vunpack.c.l.b16 %v2312
    %v2391 = vunpack.c.h.b16 %v2312
    %v2392 = vunpack.c.l.b16 %v2313
    %v2393 = vunpack.c.h.b16 %v2313
    %v2394 = vunpack.c.l.b16 %v2314
    %v2395 = vunpack.c.h.b16 %v2314
    %v2396 = vunpack.c.l.b16 %v2315
    %v2397 = vunpack.c.h.b16 %v2315
    %v2398 = vunpack.c.l.b16 %v2316
    %v2399 = vunpack.c.h.b16 %v2316
    %v2400 = vunpack.c.l.b16 %v2317
    %v2401 = vunpack.c.h.b16 %v2317
    %v2402 = vunpack.c.l.b16 %v2318
    %v2403 = vunpack.c.h.b16 %v2318
    %v2404 = vunpack.c.l.b16 %v2319
    %v2405 = vunpack.c.h.b16 %v2319
    %v2406 = vunpack.c.l.b16 %v2320
    %v2407 = vunpack.c.h.b16 %v2320
    %v2408 = vunpack.c.l.b16 %v2321
    %v2409 = vunpack.c.h.b16 %v2321
    %v2410 = vunpack.c.l.b16 %v2322
    %v2411 = vunpack.c.h.b16 %v2322
    %v2412 = vunpack.c.l.b16 %v2323
    %v2413 = vunpack.c.h.b16 %v2323
    %v2414 = vunpack.c.l.b16 %v2324
    %v2415 = vunpack.c.h.b16 %v2324
    %v2416 = vunpack.c.l.b16 %v2325
    %v2417 = vunpack.c.h.b16 %v2325
    %v2418 = vunpack.c.l.b16 %v2326
    %v2419 = vunpack.c.h.b16 %v2326
    %v2420 = vunpack.c.l.b16 %v2327
    %v2421 = vunpack.c.h.b16 %v2327
    %v2422 = vunpack.c.l.b16 %v2328
    %v2423 = vunpack.c.h.b16 %v2328
    %v2424 = vunpack.c.l.b16 %v2329
    %v2425 = vunpack.c.h.b16 %v2329
    %v2426 = vpack.c.b16 %v2364, %v2362
    %v2427 = vpack.c.b16 %v2365, %v2363
    %v2428 = vpack.c.b16 %v2368, %v2366
    %v2429 = vpack.c.b16 %v2369, %v2367
    %v2430 = vpack.c.b16 %v2372, %v2370
    %v2431 = vpack.c.b16 %v2373, %v2371
    %v2432 = vpack.c.b16 %v2376, %v2374
    %v2433 = vpack.c.b16 %v2377, %v2375
    %v2434 = vpack.c.b16 %v2380, %v2378
    %v2435 = vpack.c.b16 %v2381, %v2379
    %v2436 = vpack.c.b16 %v2384, %v2382
    %v2437 = vpack.c.b16 %v2385, %v2383
    %v2438 = vpack.c.b16 %v2388, %v2386
    %v2439 = vpack.c.b16 %v2389, %v2387
    %v2440 = vpack.c.b16 %v2392, %v2390
    %v2441 = vpack.c.b16 %v2393, %v2391
    %v2442 = vpack.c.b16 %v2396, %v2394
    %v2443 = vpack.c.b16 %v2397, %v2395
    %v2444 = vpack.c.b16 %v2400, %v2398
    %v2445 = vpack.c.b16 %v2401, %v2399
    %v2446 = vpack.c.b16 %v2404, %v2402
    %v2447 = vpack.c.b16 %v2405, %v2403
    %v2448 = vpack.c.b16 %v2408, %v2406
    %v2449 = vpack.c.b16 %v2409, %v2407
    %v2450 = vpack.c.b16 %v2412, %v2410
    %v2451 = vpack.c.b16 %v2413, %v2411
    %v2452 = vpack.c.b16 %v2416, %v2414
    %v2453 = vpack.c.b16 %v2417, %v2415
    %v2454 = vpack.c.b16 %v2420, %v2418
    %v2455 = vpack.c.b16 %v2421, %v2419
    %v2456 = vpack.c.b16 %v2424, %v2422
    %v2457 = vpack.c.b16 %v2425, %v2423
    %2490 = vmatpush.bf16.msra.mxu0 %v2440
    %2491 = vmatpush.bf16.msra.mxu0 %v2438
    %2492 = vmatpush.bf16.msra.mxu0 %v2436
    %2493 = vmatpush.bf16.msra.mxu0 %v2434
    %2494 = vmatpush.bf16.msra.mxu0 %v2432
    %2495 = vmatpush.bf16.msra.mxu0 %v2430
    %2496 = vmatpush.bf16.msra.mxu0 %v2428
    %2497 = vmatpush.bf16.msra.mxu0 %v2426
    %2498 = vmatmul.bf16.gmra.mxu0 %v1756
    %v2499 = vpop.f32.mrf.mxu0
    %v2500 = vadd.f32 0.0, %v2499
    %v2501 = vpop.f32.mrf.mxu0
    %v2502 = vadd.f32 0.0, %v2501
    %2503 = vmatmul.bf16.gmra.mxu0 %v1758
    %v2504 = vpop.f32.mrf.mxu0
    %v2505 = vadd.f32 0.0, %v2504
    %v2506 = vpop.f32.mrf.mxu0
    %v2507 = vadd.f32 0.0, %v2506
    %2508 = vdwg.mxu0
    %2509 = vmatpush.bf16.msra.mxu0 %v2456
    %2510 = vmatpush.bf16.msra.mxu0 %v2454
    %2511 = vmatpush.bf16.msra.mxu0 %v2452
    %2512 = vmatpush.bf16.msra.mxu0 %v2450
    %2513 = vmatpush.bf16.msra.mxu0 %v2448
    %2514 = vmatpush.bf16.msra.mxu0 %v2446
    %2515 = vmatpush.bf16.msra.mxu0 %v2444
    %2516 = vmatpush.bf16.msra.mxu0 %v2442
    %2517 = vmatmul.bf16.gmra.mxu0 %v1757
    %v2518 = vpop.f32.mrf.mxu0
    %v2519 = vadd.f32 %v2500, %v2518
    %v2520 = vpop.f32.mrf.mxu0
    %v2521 = vadd.f32 %v2502, %v2520
    %2522 = vmatmul.bf16.gmra.mxu0 %v1759
    %v2523 = vpop.f32.mrf.mxu0
    %v2524 = vadd.f32 %v2505, %v2523
    %v2525 = vpop.f32.mrf.mxu0
    %v2526 = vadd.f32 %v2507, %v2525
    %2527 = vdwg.mxu0
    %2528 = vmatpush.bf16.msra.mxu0 %v2441
    %2529 = vmatpush.bf16.msra.mxu0 %v2439
    %2530 = vmatpush.bf16.msra.mxu0 %v2437
    %2531 = vmatpush.bf16.msra.mxu0 %v2435
    %2532 = vmatpush.bf16.msra.mxu0 %v2433
    %2533 = vmatpush.bf16.msra.mxu0 %v2431
    %2534 = vmatpush.bf16.msra.mxu0 %v2429
    %2535 = vmatpush.bf16.msra.mxu0 %v2427
    %2536 = vmatmul.bf16.gmra.mxu0 %v1756
    %v2537 = vpop.f32.mrf.mxu0
    %v2538 = vadd.f32 0.0, %v2537
    %v2539 = vpop.f32.mrf.mxu0
    %v2540 = vadd.f32 0.0, %v2539
    %2541 = vmatmul.bf16.gmra.mxu0 %v1758
    %v2542 = vpop.f32.mrf.mxu0
    %v2543 = vadd.f32 0.0, %v2542
    %v2544 = vpop.f32.mrf.mxu0
    %v2545 = vadd.f32 0.0, %v2544
    %2546 = vdwg.mxu0
    %2547 = vmatpush.bf16.msra.mxu0 %v2457
    %2548 = vmatpush.bf16.msra.mxu0 %v2455
    %2549 = vmatpush.bf16.msra.mxu0 %v2453
    %2550 = vmatpush.bf16.msra.mxu0 %v2451
    %2551 = vmatpush.bf16.msra.mxu0 %v2449
    %2552 = vmatpush.bf16.msra.mxu0 %v2447
    %2553 = vmatpush.bf16.msra.mxu0 %v2445
    %2554 = vmatpush.bf16.msra.mxu0 %v2443
    %2555 = vmatmul.bf16.gmra.mxu0 %v1757
    %v2556 = vpop.f32.mrf.mxu0
    %v2557 = vadd.f32 %v2538, %v2556
    %v2558 = vpop.f32.mrf.mxu0
    %v2559 = vadd.f32 %v2540, %v2558
    %2560 = vmatmul.bf16.gmra.mxu0 %v1759
    %v2561 = vpop.f32.mrf.mxu0
    %v2562 = vadd.f32 %v2543, %v2561
    %v2563 = vpop.f32.mrf.mxu0
    %v2564 = vadd.f32 %v2545, %v2563
    %2565 = vdwg.mxu0
    %v2566 = vadd.f32 %v2250, %v2519
    %v2567 = vadd.f32 %v2288, %v2557
    %v2568 = vadd.f32 %v2252, %v2521
    %v2569 = vadd.f32 %v2290, %v2559
    %v2570 = vadd.f32 %v2255, %v2524
    %v2571 = vadd.f32 %v2293, %v2562
    %v2572 = vadd.f32 %v2257, %v2526
    %v2573 = vadd.f32 %v2295, %v2564
    %v2574 = vld [vmem:[#allocation13] sm:$0x3]
    %v2576 = vperm.slane %v2574, 0
    %v2577 = vperm.slane %v2574, 1
    %v2580 = vadd.f32 %v2566, %v2576
    %v2581 = vadd.f32 %v2567, %v2577
    %v2582 = vadd.f32 %v2568, %v2576
    %v2583 = vadd.f32 %v2569, %v2577
    %v2584 = vadd.f32 %v2570, %v2576
    %v2585 = vadd.f32 %v2571, %v2577
    %v2586 = vadd.f32 %v2572, %v2576
    %v2587 = vadd.f32 %v2573, %v2577
    %v2588 = vmax.f32 %v2580, 0.0
    %v2589 = vmax.f32 %v2581, 0.0
    %v2590 = vmax.f32 %v2582, 0.0
    %v2591 = vmax.f32 %v2583, 0.0
    %v2592 = vmax.f32 %v2584, 0.0
    %v2593 = vmax.f32 %v2585, 0.0
    %v2594 = vmax.f32 %v2586, 0.0
    %v2595 = vmax.f32 %v2587, 0.0
    %v2596 = vpack.c.bf16 %v2590, %v2588
    %v2597 = vpack.c.bf16 %v2591, %v2589
    %v2598 = vpack.c.bf16 %v2594, %v2592
    %v2599 = vpack.c.bf16 %v2595, %v2593
    %2600 = vmatpush.bf16.msra.mxu0 0
    %2601 = vmatpush.bf16.msra.mxu0 0
    %2602 = vmatpush.bf16.msra.mxu0 0
    %2603 = vmatpush.bf16.msra.mxu0 0
    %2604 = vmatpush.bf16.msra.mxu0 0
    %2605 = vmatpush.bf16.msra.mxu0 0
    %2606 = vmatpush.bf16.msra.mxu0 %v2598
    %2607 = vmatpush.bf16.msra.mxu0 %v2596
    %2608 = vmatmul.bf16.gmra.mxu0 %v251
    %v2609 = vpop.f32.mrf.mxu0
    %v2610 = vadd.f32 0.0, %v2609
    %v2611 = vpop.f32.mrf.mxu0
    %v2612 = vadd.f32 0.0, %v2611
    %2613 = vmatmul.bf16.gmra.mxu0 %v254
    %v2614 = vpop.f32.mrf.mxu0
    %v2615 = vadd.f32 0.0, %v2614
    %v2616 = vpop.f32.mrf.mxu0
    %v2617 = vadd.f32 0.0, %v2616
    %2618 = vdwg.mxu0
    %2619 = vmatpush.bf16.msra.mxu0 0
    %2620 = vmatpush.bf16.msra.mxu0 0
    %2621 = vmatpush.bf16.msra.mxu0 0
    %2622 = vmatpush.bf16.msra.mxu0 0
    %2623 = vmatpush.bf16.msra.mxu0 0
    %2624 = vmatpush.bf16.msra.mxu0 0
    %2625 = vmatpush.bf16.msra.mxu0 %v2599
    %2626 = vmatpush.bf16.msra.mxu0 %v2597
    %2627 = vmatmul.bf16.gmra.mxu0 %v251
    %v2628 = vpop.f32.mrf.mxu0
    %v2629 = vadd.f32 0.0, %v2628
    %v2630 = vpop.f32.mrf.mxu0
    %v2631 = vadd.f32 0.0, %v2630
    %2632 = vmatmul.bf16.gmra.mxu0 %v254
    %v2633 = vpop.f32.mrf.mxu0
    %v2634 = vadd.f32 0.0, %v2633
    %v2635 = vpop.f32.mrf.mxu0
    %v2636 = vadd.f32 0.0, %v2635
    %2637 = vdwg.mxu0
    %v2638 = vpack.c.bf16 %v2612, %v2610
    %v2639 = vpack.c.bf16 %v2631, %v2629
    %v2640 = vpack.c.bf16 %v2617, %v2615
    %v2641 = vpack.c.bf16 %v2636, %v2634
    %2642 = vmatpush.bf16.msra.mxu0 0
    %2643 = vmatpush.bf16.msra.mxu0 0
    %2644 = vmatpush.bf16.msra.mxu0 0
    %2645 = vmatpush.bf16.msra.mxu0 0
    %2646 = vmatpush.bf16.msra.mxu0 0
    %2647 = vmatpush.bf16.msra.mxu0 0
    %2648 = vmatpush.bf16.msra.mxu0 %v2598
    %2649 = vmatpush.bf16.msra.mxu0 %v2596
    %2650 = vmatmul.bf16.gmra.mxu0 %v288
    %v2651 = vpop.f32.mrf.mxu0
    %v2652 = vadd.f32 0.0, %v2651
    %v2653 = vpop.f32.mrf.mxu0
    %v2654 = vadd.f32 0.0, %v2653
    %2655 = vmatmul.bf16.gmra.mxu0 %v291
    %v2656 = vpop.f32.mrf.mxu0
    %v2657 = vadd.f32 0.0, %v2656
    %v2658 = vpop.f32.mrf.mxu0
    %v2659 = vadd.f32 0.0, %v2658
    %2660 = vdwg.mxu0
    %2661 = vmatpush.bf16.msra.mxu0 0
    %2662 = vmatpush.bf16.msra.mxu0 0
    %2663 = vmatpush.bf16.msra.mxu0 0
    %2664 = vmatpush.bf16.msra.mxu0 0
    %2665 = vmatpush.bf16.msra.mxu0 0
    %2666 = vmatpush.bf16.msra.mxu0 0
    %2667 = vmatpush.bf16.msra.mxu0 %v2599
    %2668 = vmatpush.bf16.msra.mxu0 %v2597
    %2669 = vmatmul.bf16.gmra.mxu0 %v288
    %v2670 = vpop.f32.mrf.mxu0
    %v2671 = vadd.f32 0.0, %v2670
    %v2672 = vpop.f32.mrf.mxu0
    %v2673 = vadd.f32 0.0, %v2672
    %2674 = vmatmul.bf16.gmra.mxu0 %v291
    %v2675 = vpop.f32.mrf.mxu0
    %v2676 = vadd.f32 0.0, %v2675
    %v2677 = vpop.f32.mrf.mxu0
    %v2678 = vadd.f32 0.0, %v2677
    %2679 = vdwg.mxu0
    %v2680 = vpack.c.bf16 %v2654, %v2652
    %v2681 = vpack.c.bf16 %v2673, %v2671
    %v2682 = vpack.c.bf16 %v2659, %v2657
    %v2683 = vpack.c.bf16 %v2678, %v2676
    %v2684 = vld [vmem:[#allocation14] sm:$0xff]
    %v2685 = vld [vmem:[#allocation14 + $0x8] sm:$0xff]
    %v2686 = vld [vmem:[#allocation14 + $0x10] sm:$0xff]
    %v2687 = vld [vmem:[#allocation14 + $0x18] sm:$0xff]
    %v2688 = vld [vmem:[#allocation14 + $0x20] sm:$0xff]
    %v2689 = vld [vmem:[#allocation14 + $0x28] sm:$0xff]
    %v2690 = vld [vmem:[#allocation14 + $0x30] sm:$0xff]
    %v2691 = vld [vmem:[#allocation14 + $0x38] sm:$0xff]
    %v2692 = vld [vmem:[#allocation14 + $0x40] sm:$0xff]
    %v2693 = vld [vmem:[#allocation14 + $0x48] sm:$0xff]
    %v2694 = vld [vmem:[#allocation14 + $0x50] sm:$0xff]
    %v2695 = vld [vmem:[#allocation14 + $0x58] sm:$0xff]
    %v2696 = vld [vmem:[#allocation14 + $0x60] sm:$0xff]
    %v2697 = vld [vmem:[#allocation14 + $0x68] sm:$0xff]
    %v2698 = vld [vmem:[#allocation14 + $0x70] sm:$0xff]
    %v2699 = vld [vmem:[#allocation14 + $0x78] sm:$0xff]
    %v2700 = vld [vmem:[#allocation14 + $0x80] sm:$0xff]
    %v2701 = vld [vmem:[#allocation14 + $0x88] sm:$0xff]
    %v2702 = vld [vmem:[#allocation14 + $0x90] sm:$0xff]
    %v2703 = vld [vmem:[#allocation14 + $0x98] sm:$0xff]
    %v2704 = vld [vmem:[#allocation14 + $0xa0] sm:$0xff]
    %v2705 = vld [vmem:[#allocation14 + $0xa8] sm:$0xff]
    %v2706 = vld [vmem:[#allocation14 + $0xb0] sm:$0xff]
    %v2707 = vld [vmem:[#allocation14 + $0xb8] sm:$0xff]
    %v2708 = vld [vmem:[#allocation14 + $0xc0] sm:$0xff]
    %v2709 = vld [vmem:[#allocation14 + $0xc8] sm:$0xff]
    %v2710 = vld [vmem:[#allocation14 + $0xd0] sm:$0xff]
    %v2711 = vld [vmem:[#allocation14 + $0xd8] sm:$0xff]
    %v2712 = vld [vmem:[#allocation14 + $0xe0] sm:$0xff]
    %v2713 = vld [vmem:[#allocation14 + $0xe8] sm:$0xff]
    %v2714 = vld [vmem:[#allocation14 + $0xf0] sm:$0xff]
    %v2715 = vld [vmem:[#allocation14 + $0xf8] sm:$0xff]
    %s2716 = scalar_lea.vmem [#allocation14], 256
    %v2717 = vld [vmem:[%s2716] sm:$0xff]
    %v2718 = vld [vmem:[%s2716 + $0x8] sm:$0xff]
    %v2719 = vld [vmem:[%s2716 + $0x10] sm:$0xff]
    %v2720 = vld [vmem:[%s2716 + $0x18] sm:$0xff]
    %v2721 = vld [vmem:[%s2716 + $0x20] sm:$0xff]
    %v2722 = vld [vmem:[%s2716 + $0x28] sm:$0xff]
    %v2723 = vld [vmem:[%s2716 + $0x30] sm:$0xff]
    %v2724 = vld [vmem:[%s2716 + $0x38] sm:$0xff]
    %v2725 = vld [vmem:[%s2716 + $0x40] sm:$0xff]
    %v2726 = vld [vmem:[%s2716 + $0x48] sm:$0xff]
    %v2727 = vld [vmem:[%s2716 + $0x50] sm:$0xff]
    %v2728 = vld [vmem:[%s2716 + $0x58] sm:$0xff]
    %v2729 = vld [vmem:[%s2716 + $0x60] sm:$0xff]
    %v2730 = vld [vmem:[%s2716 + $0x68] sm:$0xff]
    %v2731 = vld [vmem:[%s2716 + $0x70] sm:$0xff]
    %v2732 = vld [vmem:[%s2716 + $0x78] sm:$0xff]
    %v2733 = vld [vmem:[%s2716 + $0x80] sm:$0xff]
    %v2734 = vld [vmem:[%s2716 + $0x88] sm:$0xff]
    %v2735 = vld [vmem:[%s2716 + $0x90] sm:$0xff]
    %v2736 = vld [vmem:[%s2716 + $0x98] sm:$0xff]
    %v2737 = vld [vmem:[%s2716 + $0xa0] sm:$0xff]
    %v2738 = vld [vmem:[%s2716 + $0xa8] sm:$0xff]
    %v2739 = vld [vmem:[%s2716 + $0xb0] sm:$0xff]
    %v2740 = vld [vmem:[%s2716 + $0xb8] sm:$0xff]
    %v2741 = vld [vmem:[%s2716 + $0xc0] sm:$0xff]
    %v2742 = vld [vmem:[%s2716 + $0xc8] sm:$0xff]
    %v2743 = vld [vmem:[%s2716 + $0xd0] sm:$0xff]
    %v2744 = vld [vmem:[%s2716 + $0xd8] sm:$0xff]
    %v2745 = vld [vmem:[%s2716 + $0xe0] sm:$0xff]
    %v2746 = vld [vmem:[%s2716 + $0xe8] sm:$0xff]
    %v2747 = vld [vmem:[%s2716 + $0xf0] sm:$0xff]
    %v2748 = vld [vmem:[%s2716 + $0xf8] sm:$0xff]
    %v2781 = vunpack.c.l.b16 %v2717
    %v2782 = vunpack.c.h.b16 %v2717
    %v2783 = vunpack.c.l.b16 %v2718
    %v2784 = vunpack.c.h.b16 %v2718
    %v2785 = vunpack.c.l.b16 %v2719
    %v2786 = vunpack.c.h.b16 %v2719
    %v2787 = vunpack.c.l.b16 %v2720
    %v2788 = vunpack.c.h.b16 %v2720
    %v2789 = vunpack.c.l.b16 %v2721
    %v2790 = vunpack.c.h.b16 %v2721
    %v2791 = vunpack.c.l.b16 %v2722
    %v2792 = vunpack.c.h.b16 %v2722
    %v2793 = vunpack.c.l.b16 %v2723
    %v2794 = vunpack.c.h.b16 %v2723
    %v2795 = vunpack.c.l.b16 %v2724
    %v2796 = vunpack.c.h.b16 %v2724
    %v2797 = vunpack.c.l.b16 %v2725
    %v2798 = vunpack.c.h.b16 %v2725
    %v2799 = vunpack.c.l.b16 %v2726
    %v2800 = vunpack.c.h.b16 %v2726
    %v2801 = vunpack.c.l.b16 %v2727
    %v2802 = vunpack.c.h.b16 %v2727
    %v2803 = vunpack.c.l.b16 %v2728
    %v2804 = vunpack.c.h.b16 %v2728
    %v2805 = vunpack.c.l.b16 %v2729
    %v2806 = vunpack.c.h.b16 %v2729
    %v2807 = vunpack.c.l.b16 %v2730
    %v2808 = vunpack.c.h.b16 %v2730
    %v2809 = vunpack.c.l.b16 %v2731
    %v2810 = vunpack.c.h.b16 %v2731
    %v2811 = vunpack.c.l.b16 %v2732
    %v2812 = vunpack.c.h.b16 %v2732
    %v2813 = vunpack.c.l.b16 %v2733
    %v2814 = vunpack.c.h.b16 %v2733
    %v2815 = vunpack.c.l.b16 %v2734
    %v2816 = vunpack.c.h.b16 %v2734
    %v2817 = vunpack.c.l.b16 %v2735
    %v2818 = vunpack.c.h.b16 %v2735
    %v2819 = vunpack.c.l.b16 %v2736
    %v2820 = vunpack.c.h.b16 %v2736
    %v2821 = vunpack.c.l.b16 %v2737
    %v2822 = vunpack.c.h.b16 %v2737
    %v2823 = vunpack.c.l.b16 %v2738
    %v2824 = vunpack.c.h.b16 %v2738
    %v2825 = vunpack.c.l.b16 %v2739
    %v2826 = vunpack.c.h.b16 %v2739
    %v2827 = vunpack.c.l.b16 %v2740
    %v2828 = vunpack.c.h.b16 %v2740
    %v2829 = vunpack.c.l.b16 %v2741
    %v2830 = vunpack.c.h.b16 %v2741
    %v2831 = vunpack.c.l.b16 %v2742
    %v2832 = vunpack.c.h.b16 %v2742
    %v2833 = vunpack.c.l.b16 %v2743
    %v2834 = vunpack.c.h.b16 %v2743
    %v2835 = vunpack.c.l.b16 %v2744
    %v2836 = vunpack.c.h.b16 %v2744
    %v2837 = vunpack.c.l.b16 %v2745
    %v2838 = vunpack.c.h.b16 %v2745
    %v2839 = vunpack.c.l.b16 %v2746
    %v2840 = vunpack.c.h.b16 %v2746
    %v2841 = vunpack.c.l.b16 %v2747
    %v2842 = vunpack.c.h.b16 %v2747
    %v2843 = vunpack.c.l.b16 %v2748
    %v2844 = vunpack.c.h.b16 %v2748
    %v2845 = vpack.c.b16 %v2783, %v2781
    %v2846 = vpack.c.b16 %v2784, %v2782
    %v2847 = vpack.c.b16 %v2787, %v2785
    %v2848 = vpack.c.b16 %v2788, %v2786
    %v2849 = vpack.c.b16 %v2791, %v2789
    %v2850 = vpack.c.b16 %v2792, %v2790
    %v2851 = vpack.c.b16 %v2795, %v2793
    %v2852 = vpack.c.b16 %v2796, %v2794
    %v2853 = vpack.c.b16 %v2799, %v2797
    %v2854 = vpack.c.b16 %v2800, %v2798
    %v2855 = vpack.c.b16 %v2803, %v2801
    %v2856 = vpack.c.b16 %v2804, %v2802
    %v2857 = vpack.c.b16 %v2807, %v2805
    %v2858 = vpack.c.b16 %v2808, %v2806
    %v2859 = vpack.c.b16 %v2811, %v2809
    %v2860 = vpack.c.b16 %v2812, %v2810
    %v2861 = vpack.c.b16 %v2815, %v2813
    %v2862 = vpack.c.b16 %v2816, %v2814
    %v2863 = vpack.c.b16 %v2819, %v2817
    %v2864 = vpack.c.b16 %v2820, %v2818
    %v2865 = vpack.c.b16 %v2823, %v2821
    %v2866 = vpack.c.b16 %v2824, %v2822
    %v2867 = vpack.c.b16 %v2827, %v2825
    %v2868 = vpack.c.b16 %v2828, %v2826
    %v2869 = vpack.c.b16 %v2831, %v2829
    %v2870 = vpack.c.b16 %v2832, %v2830
    %v2871 = vpack.c.b16 %v2835, %v2833
    %v2872 = vpack.c.b16 %v2836, %v2834
    %v2873 = vpack.c.b16 %v2839, %v2837
    %v2874 = vpack.c.b16 %v2840, %v2838
    %v2875 = vpack.c.b16 %v2843, %v2841
    %v2876 = vpack.c.b16 %v2844, %v2842
    %2909 = vmatpush.bf16.msra.mxu0 %v2859
    %2910 = vmatpush.bf16.msra.mxu0 %v2857
    %2911 = vmatpush.bf16.msra.mxu0 %v2855
    %2912 = vmatpush.bf16.msra.mxu0 %v2853
    %2913 = vmatpush.bf16.msra.mxu0 %v2851
    %2914 = vmatpush.bf16.msra.mxu0 %v2849
    %2915 = vmatpush.bf16.msra.mxu0 %v2847
    %2916 = vmatpush.bf16.msra.mxu0 %v2845
    %2917 = vmatmul.bf16.gmra.mxu0 %v2596
    %v2918 = vpop.f32.mrf.mxu0
    %v2919 = vadd.f32 0.0, %v2918
    %v2920 = vpop.f32.mrf.mxu0
    %v2921 = vadd.f32 0.0, %v2920
    %2922 = vmatmul.bf16.gmra.mxu0 %v2598
    %v2923 = vpop.f32.mrf.mxu0
    %v2924 = vadd.f32 0.0, %v2923
    %v2925 = vpop.f32.mrf.mxu0
    %v2926 = vadd.f32 0.0, %v2925
    %2927 = vdwg.mxu0
    %2928 = vmatpush.bf16.msra.mxu0 %v2875
    %2929 = vmatpush.bf16.msra.mxu0 %v2873
    %2930 = vmatpush.bf16.msra.mxu0 %v2871
    %2931 = vmatpush.bf16.msra.mxu0 %v2869
    %2932 = vmatpush.bf16.msra.mxu0 %v2867
    %2933 = vmatpush.bf16.msra.mxu0 %v2865
    %2934 = vmatpush.bf16.msra.mxu0 %v2863
    %2935 = vmatpush.bf16.msra.mxu0 %v2861
    %2936 = vmatmul.bf16.gmra.mxu0 %v2597
    %v2937 = vpop.f32.mrf.mxu0
    %v2938 = vadd.f32 %v2919, %v2937
    %v2939 = vpop.f32.mrf.mxu0
    %v2940 = vadd.f32 %v2921, %v2939
    %2941 = vmatmul.bf16.gmra.mxu0 %v2599
    %v2942 = vpop.f32.mrf.mxu0
    %v2943 = vadd.f32 %v2924, %v2942
    %v2944 = vpop.f32.mrf.mxu0
    %v2945 = vadd.f32 %v2926, %v2944
    %2946 = vdwg.mxu0
    %2947 = vmatpush.bf16.msra.mxu0 %v2860
    %2948 = vmatpush.bf16.msra.mxu0 %v2858
    %2949 = vmatpush.bf16.msra.mxu0 %v2856
    %2950 = vmatpush.bf16.msra.mxu0 %v2854
    %2951 = vmatpush.bf16.msra.mxu0 %v2852
    %2952 = vmatpush.bf16.msra.mxu0 %v2850
    %2953 = vmatpush.bf16.msra.mxu0 %v2848
    %2954 = vmatpush.bf16.msra.mxu0 %v2846
    %2955 = vmatmul.bf16.gmra.mxu0 %v2596
    %v2956 = vpop.f32.mrf.mxu0
    %v2957 = vadd.f32 0.0, %v2956
    %v2958 = vpop.f32.mrf.mxu0
    %v2959 = vadd.f32 0.0, %v2958
    %2960 = vmatmul.bf16.gmra.mxu0 %v2598
    %v2961 = vpop.f32.mrf.mxu0
    %v2962 = vadd.f32 0.0, %v2961
    %v2963 = vpop.f32.mrf.mxu0
    %v2964 = vadd.f32 0.0, %v2963
    %2965 = vdwg.mxu0
    %2966 = vmatpush.bf16.msra.mxu0 %v2876
    %2967 = vmatpush.bf16.msra.mxu0 %v2874
    %2968 = vmatpush.bf16.msra.mxu0 %v2872
    %2969 = vmatpush.bf16.msra.mxu0 %v2870
    %2970 = vmatpush.bf16.msra.mxu0 %v2868
    %2971 = vmatpush.bf16.msra.mxu0 %v2866
    %2972 = vmatpush.bf16.msra.mxu0 %v2864
    %2973 = vmatpush.bf16.msra.mxu0 %v2862
    %2974 = vmatmul.bf16.gmra.mxu0 %v2597
    %v2975 = vpop.f32.mrf.mxu0
    %v2976 = vadd.f32 %v2957, %v2975
    %v2977 = vpop.f32.mrf.mxu0
    %v2978 = vadd.f32 %v2959, %v2977
    %2979 = vmatmul.bf16.gmra.mxu0 %v2599
    %v2980 = vpop.f32.mrf.mxu0
    %v2981 = vadd.f32 %v2962, %v2980
    %v2982 = vpop.f32.mrf.mxu0
    %v2983 = vadd.f32 %v2964, %v2982
    %2984 = vdwg.mxu0
    %v3017 = vunpack.c.l.b16 %v2684
    %v3018 = vunpack.c.h.b16 %v2684
    %v3019 = vunpack.c.l.b16 %v2685
    %v3020 = vunpack.c.h.b16 %v2685
    %v3021 = vunpack.c.l.b16 %v2686
    %v3022 = vunpack.c.h.b16 %v2686
    %v3023 = vunpack.c.l.b16 %v2687
    %v3024 = vunpack.c.h.b16 %v2687
    %v3025 = vunpack.c.l.b16 %v2688
    %v3026 = vunpack.c.h.b16 %v2688
    %v3027 = vunpack.c.l.b16 %v2689
    %v3028 = vunpack.c.h.b16 %v2689
    %v3029 = vunpack.c.l.b16 %v2690
    %v3030 = vunpack.c.h.b16 %v2690
    %v3031 = vunpack.c.l.b16 %v2691
    %v3032 = vunpack.c.h.b16 %v2691
    %v3033 = vunpack.c.l.b16 %v2692
    %v3034 = vunpack.c.h.b16 %v2692
    %v3035 = vunpack.c.l.b16 %v2693
    %v3036 = vunpack.c.h.b16 %v2693
    %v3037 = vunpack.c.l.b16 %v2694
    %v3038 = vunpack.c.h.b16 %v2694
    %v3039 = vunpack.c.l.b16 %v2695
    %v3040 = vunpack.c.h.b16 %v2695
    %v3041 = vunpack.c.l.b16 %v2696
    %v3042 = vunpack.c.h.b16 %v2696
    %v3043 = vunpack.c.l.b16 %v2697
    %v3044 = vunpack.c.h.b16 %v2697
    %v3045 = vunpack.c.l.b16 %v2698
    %v3046 = vunpack.c.h.b16 %v2698
    %v3047 = vunpack.c.l.b16 %v2699
    %v3048 = vunpack.c.h.b16 %v2699
    %v3049 = vunpack.c.l.b16 %v2700
    %v3050 = vunpack.c.h.b16 %v2700
    %v3051 = vunpack.c.l.b16 %v2701
    %v3052 = vunpack.c.h.b16 %v2701
    %v3053 = vunpack.c.l.b16 %v2702
    %v3054 = vunpack.c.h.b16 %v2702
    %v3055 = vunpack.c.l.b16 %v2703
    %v3056 = vunpack.c.h.b16 %v2703
    %v3057 = vunpack.c.l.b16 %v2704
    %v3058 = vunpack.c.h.b16 %v2704
    %v3059 = vunpack.c.l.b16 %v2705
    %v3060 = vunpack.c.h.b16 %v2705
    %v3061 = vunpack.c.l.b16 %v2706
    %v3062 = vunpack.c.h.b16 %v2706
    %v3063 = vunpack.c.l.b16 %v2707
    %v3064 = vunpack.c.h.b16 %v2707
    %v3065 = vunpack.c.l.b16 %v2708
    %v3066 = vunpack.c.h.b16 %v2708
    %v3067 = vunpack.c.l.b16 %v2709
    %v3068 = vunpack.c.h.b16 %v2709
    %v3069 = vunpack.c.l.b16 %v2710
    %v3070 = vunpack.c.h.b16 %v2710
    %v3071 = vunpack.c.l.b16 %v2711
    %v3072 = vunpack.c.h.b16 %v2711
    %v3073 = vunpack.c.l.b16 %v2712
    %v3074 = vunpack.c.h.b16 %v2712
    %v3075 = vunpack.c.l.b16 %v2713
    %v3076 = vunpack.c.h.b16 %v2713
    %v3077 = vunpack.c.l.b16 %v2714
    %v3078 = vunpack.c.h.b16 %v2714
    %v3079 = vunpack.c.l.b16 %v2715
    %v3080 = vunpack.c.h.b16 %v2715
    %v3081 = vpack.c.b16 %v3019, %v3017
    %v3082 = vpack.c.b16 %v3020, %v3018
    %v3083 = vpack.c.b16 %v3023, %v3021
    %v3084 = vpack.c.b16 %v3024, %v3022
    %v3085 = vpack.c.b16 %v3027, %v3025
    %v3086 = vpack.c.b16 %v3028, %v3026
    %v3087 = vpack.c.b16 %v3031, %v3029
    %v3088 = vpack.c.b16 %v3032, %v3030
    %v3089 = vpack.c.b16 %v3035, %v3033
    %v3090 = vpack.c.b16 %v3036, %v3034
    %v3091 = vpack.c.b16 %v3039, %v3037
    %v3092 = vpack.c.b16 %v3040, %v3038
    %v3093 = vpack.c.b16 %v3043, %v3041
    %v3094 = vpack.c.b16 %v3044, %v3042
    %v3095 = vpack.c.b16 %v3047, %v3045
    %v3096 = vpack.c.b16 %v3048, %v3046
    %v3097 = vpack.c.b16 %v3051, %v3049
    %v3098 = vpack.c.b16 %v3052, %v3050
    %v3099 = vpack.c.b16 %v3055, %v3053
    %v3100 = vpack.c.b16 %v3056, %v3054
    %v3101 = vpack.c.b16 %v3059, %v3057
    %v3102 = vpack.c.b16 %v3060, %v3058
    %v3103 = vpack.c.b16 %v3063, %v3061
    %v3104 = vpack.c.b16 %v3064, %v3062
    %v3105 = vpack.c.b16 %v3067, %v3065
    %v3106 = vpack.c.b16 %v3068, %v3066
    %v3107 = vpack.c.b16 %v3071, %v3069
    %v3108 = vpack.c.b16 %v3072, %v3070
    %v3109 = vpack.c.b16 %v3075, %v3073
    %v3110 = vpack.c.b16 %v3076, %v3074
    %v3111 = vpack.c.b16 %v3079, %v3077
    %v3112 = vpack.c.b16 %v3080, %v3078
    %3145 = vmatpush.bf16.msra.mxu0 %v3095
    %3146 = vmatpush.bf16.msra.mxu0 %v3093
    %3147 = vmatpush.bf16.msra.mxu0 %v3091
    %3148 = vmatpush.bf16.msra.mxu0 %v3089
    %3149 = vmatpush.bf16.msra.mxu0 %v3087
    %3150 = vmatpush.bf16.msra.mxu0 %v3085
    %3151 = vmatpush.bf16.msra.mxu0 %v3083
    %3152 = vmatpush.bf16.msra.mxu0 %v3081
    %3153 = vmatmul.bf16.gmra.mxu0 %v2638
    %v3154 = vpop.f32.mrf.mxu0
    %v3155 = vadd.f32 %v2938, %v3154
    %v3156 = vpop.f32.mrf.mxu0
    %v3157 = vadd.f32 %v2940, %v3156
    %3158 = vmatmul.bf16.gmra.mxu0 %v2640
    %v3159 = vpop.f32.mrf.mxu0
    %v3160 = vadd.f32 %v2943, %v3159
    %v3161 = vpop.f32.mrf.mxu0
    %v3162 = vadd.f32 %v2945, %v3161
    %3163 = vdwg.mxu0
    %3164 = vmatpush.bf16.msra.mxu0 %v3111
    %3165 = vmatpush.bf16.msra.mxu0 %v3109
    %3166 = vmatpush.bf16.msra.mxu0 %v3107
    %3167 = vmatpush.bf16.msra.mxu0 %v3105
    %3168 = vmatpush.bf16.msra.mxu0 %v3103
    %3169 = vmatpush.bf16.msra.mxu0 %v3101
    %3170 = vmatpush.bf16.msra.mxu0 %v3099
    %3171 = vmatpush.bf16.msra.mxu0 %v3097
    %3172 = vmatmul.bf16.gmra.mxu0 %v2639
    %v3173 = vpop.f32.mrf.mxu0
    %v3174 = vadd.f32 %v3155, %v3173
    %v3175 = vpop.f32.mrf.mxu0
    %v3176 = vadd.f32 %v3157, %v3175
    %3177 = vmatmul.bf16.gmra.mxu0 %v2641
    %v3178 = vpop.f32.mrf.mxu0
    %v3179 = vadd.f32 %v3160, %v3178
    %v3180 = vpop.f32.mrf.mxu0
    %v3181 = vadd.f32 %v3162, %v3180
    %3182 = vdwg.mxu0
    %3183 = vmatpush.bf16.msra.mxu0 %v3096
    %3184 = vmatpush.bf16.msra.mxu0 %v3094
    %3185 = vmatpush.bf16.msra.mxu0 %v3092
    %3186 = vmatpush.bf16.msra.mxu0 %v3090
    %3187 = vmatpush.bf16.msra.mxu0 %v3088
    %3188 = vmatpush.bf16.msra.mxu0 %v3086
    %3189 = vmatpush.bf16.msra.mxu0 %v3084
    %3190 = vmatpush.bf16.msra.mxu0 %v3082
    %3191 = vmatmul.bf16.gmra.mxu0 %v2638
    %v3192 = vpop.f32.mrf.mxu0
    %v3193 = vadd.f32 %v2976, %v3192
    %v3194 = vpop.f32.mrf.mxu0
    %v3195 = vadd.f32 %v2978, %v3194
    %3196 = vmatmul.bf16.gmra.mxu0 %v2640
    %v3197 = vpop.f32.mrf.mxu0
    %v3198 = vadd.f32 %v2981, %v3197
    %v3199 = vpop.f32.mrf.mxu0
    %v3200 = vadd.f32 %v2983, %v3199
    %3201 = vdwg.mxu0
    %3202 = vmatpush.bf16.msra.mxu0 %v3112
    %3203 = vmatpush.bf16.msra.mxu0 %v3110
    %3204 = vmatpush.bf16.msra.mxu0 %v3108
    %3205 = vmatpush.bf16.msra.mxu0 %v3106
    %3206 = vmatpush.bf16.msra.mxu0 %v3104
    %3207 = vmatpush.bf16.msra.mxu0 %v3102
    %3208 = vmatpush.bf16.msra.mxu0 %v3100
    %3209 = vmatpush.bf16.msra.mxu0 %v3098
    %3210 = vmatmul.bf16.gmra.mxu0 %v2639
    %v3211 = vpop.f32.mrf.mxu0
    %v3212 = vadd.f32 %v3193, %v3211
    %v3213 = vpop.f32.mrf.mxu0
    %v3214 = vadd.f32 %v3195, %v3213
    %3215 = vmatmul.bf16.gmra.mxu0 %v2641
    %v3216 = vpop.f32.mrf.mxu0
    %v3217 = vadd.f32 %v3198, %v3216
    %v3218 = vpop.f32.mrf.mxu0
    %v3219 = vadd.f32 %v3200, %v3218
    %3220 = vdwg.mxu0
    %s3221 = scalar_lea.vmem [#allocation14], 512
    %v3222 = vld [vmem:[%s3221] sm:$0xff]
    %v3223 = vld [vmem:[%s3221 + $0x8] sm:$0xff]
    %v3224 = vld [vmem:[%s3221 + $0x10] sm:$0xff]
    %v3225 = vld [vmem:[%s3221 + $0x18] sm:$0xff]
    %v3226 = vld [vmem:[%s3221 + $0x20] sm:$0xff]
    %v3227 = vld [vmem:[%s3221 + $0x28] sm:$0xff]
    %v3228 = vld [vmem:[%s3221 + $0x30] sm:$0xff]
    %v3229 = vld [vmem:[%s3221 + $0x38] sm:$0xff]
    %v3230 = vld [vmem:[%s3221 + $0x40] sm:$0xff]
    %v3231 = vld [vmem:[%s3221 + $0x48] sm:$0xff]
    %v3232 = vld [vmem:[%s3221 + $0x50] sm:$0xff]
    %v3233 = vld [vmem:[%s3221 + $0x58] sm:$0xff]
    %v3234 = vld [vmem:[%s3221 + $0x60] sm:$0xff]
    %v3235 = vld [vmem:[%s3221 + $0x68] sm:$0xff]
    %v3236 = vld [vmem:[%s3221 + $0x70] sm:$0xff]
    %v3237 = vld [vmem:[%s3221 + $0x78] sm:$0xff]
    %v3238 = vld [vmem:[%s3221 + $0x80] sm:$0xff]
    %v3239 = vld [vmem:[%s3221 + $0x88] sm:$0xff]
    %v3240 = vld [vmem:[%s3221 + $0x90] sm:$0xff]
    %v3241 = vld [vmem:[%s3221 + $0x98] sm:$0xff]
    %v3242 = vld [vmem:[%s3221 + $0xa0] sm:$0xff]
    %v3243 = vld [vmem:[%s3221 + $0xa8] sm:$0xff]
    %v3244 = vld [vmem:[%s3221 + $0xb0] sm:$0xff]
    %v3245 = vld [vmem:[%s3221 + $0xb8] sm:$0xff]
    %v3246 = vld [vmem:[%s3221 + $0xc0] sm:$0xff]
    %v3247 = vld [vmem:[%s3221 + $0xc8] sm:$0xff]
    %v3248 = vld [vmem:[%s3221 + $0xd0] sm:$0xff]
    %v3249 = vld [vmem:[%s3221 + $0xd8] sm:$0xff]
    %v3250 = vld [vmem:[%s3221 + $0xe0] sm:$0xff]
    %v3251 = vld [vmem:[%s3221 + $0xe8] sm:$0xff]
    %v3252 = vld [vmem:[%s3221 + $0xf0] sm:$0xff]
    %v3253 = vld [vmem:[%s3221 + $0xf8] sm:$0xff]
    %v3286 = vunpack.c.l.b16 %v3222
    %v3287 = vunpack.c.h.b16 %v3222
    %v3288 = vunpack.c.l.b16 %v3223
    %v3289 = vunpack.c.h.b16 %v3223
    %v3290 = vunpack.c.l.b16 %v3224
    %v3291 = vunpack.c.h.b16 %v3224
    %v3292 = vunpack.c.l.b16 %v3225
    %v3293 = vunpack.c.h.b16 %v3225
    %v3294 = vunpack.c.l.b16 %v3226
    %v3295 = vunpack.c.h.b16 %v3226
    %v3296 = vunpack.c.l.b16 %v3227
    %v3297 = vunpack.c.h.b16 %v3227
    %v3298 = vunpack.c.l.b16 %v3228
    %v3299 = vunpack.c.h.b16 %v3228
    %v3300 = vunpack.c.l.b16 %v3229
    %v3301 = vunpack.c.h.b16 %v3229
    %v3302 = vunpack.c.l.b16 %v3230
    %v3303 = vunpack.c.h.b16 %v3230
    %v3304 = vunpack.c.l.b16 %v3231
    %v3305 = vunpack.c.h.b16 %v3231
    %v3306 = vunpack.c.l.b16 %v3232
    %v3307 = vunpack.c.h.b16 %v3232
    %v3308 = vunpack.c.l.b16 %v3233
    %v3309 = vunpack.c.h.b16 %v3233
    %v3310 = vunpack.c.l.b16 %v3234
    %v3311 = vunpack.c.h.b16 %v3234
    %v3312 = vunpack.c.l.b16 %v3235
    %v3313 = vunpack.c.h.b16 %v3235
    %v3314 = vunpack.c.l.b16 %v3236
    %v3315 = vunpack.c.h.b16 %v3236
    %v3316 = vunpack.c.l.b16 %v3237
    %v3317 = vunpack.c.h.b16 %v3237
    %v3318 = vunpack.c.l.b16 %v3238
    %v3319 = vunpack.c.h.b16 %v3238
    %v3320 = vunpack.c.l.b16 %v3239
    %v3321 = vunpack.c.h.b16 %v3239
    %v3322 = vunpack.c.l.b16 %v3240
    %v3323 = vunpack.c.h.b16 %v3240
    %v3324 = vunpack.c.l.b16 %v3241
    %v3325 = vunpack.c.h.b16 %v3241
    %v3326 = vunpack.c.l.b16 %v3242
    %v3327 = vunpack.c.h.b16 %v3242
    %v3328 = vunpack.c.l.b16 %v3243
    %v3329 = vunpack.c.h.b16 %v3243
    %v3330 = vunpack.c.l.b16 %v3244
    %v3331 = vunpack.c.h.b16 %v3244
    %v3332 = vunpack.c.l.b16 %v3245
    %v3333 = vunpack.c.h.b16 %v3245
    %v3334 = vunpack.c.l.b16 %v3246
    %v3335 = vunpack.c.h.b16 %v3246
    %v3336 = vunpack.c.l.b16 %v3247
    %v3337 = vunpack.c.h.b16 %v3247
    %v3338 = vunpack.c.l.b16 %v3248
    %v3339 = vunpack.c.h.b16 %v3248
    %v3340 = vunpack.c.l.b16 %v3249
    %v3341 = vunpack.c.h.b16 %v3249
    %v3342 = vunpack.c.l.b16 %v3250
    %v3343 = vunpack.c.h.b16 %v3250
    %v3344 = vunpack.c.l.b16 %v3251
    %v3345 = vunpack.c.h.b16 %v3251
    %v3346 = vunpack.c.l.b16 %v3252
    %v3347 = vunpack.c.h.b16 %v3252
    %v3348 = vunpack.c.l.b16 %v3253
    %v3349 = vunpack.c.h.b16 %v3253
    %v3350 = vpack.c.b16 %v3288, %v3286
    %v3351 = vpack.c.b16 %v3289, %v3287
    %v3352 = vpack.c.b16 %v3292, %v3290
    %v3353 = vpack.c.b16 %v3293, %v3291
    %v3354 = vpack.c.b16 %v3296, %v3294
    %v3355 = vpack.c.b16 %v3297, %v3295
    %v3356 = vpack.c.b16 %v3300, %v3298
    %v3357 = vpack.c.b16 %v3301, %v3299
    %v3358 = vpack.c.b16 %v3304, %v3302
    %v3359 = vpack.c.b16 %v3305, %v3303
    %v3360 = vpack.c.b16 %v3308, %v3306
    %v3361 = vpack.c.b16 %v3309, %v3307
    %v3362 = vpack.c.b16 %v3312, %v3310
    %v3363 = vpack.c.b16 %v3313, %v3311
    %v3364 = vpack.c.b16 %v3316, %v3314
    %v3365 = vpack.c.b16 %v3317, %v3315
    %v3366 = vpack.c.b16 %v3320, %v3318
    %v3367 = vpack.c.b16 %v3321, %v3319
    %v3368 = vpack.c.b16 %v3324, %v3322
    %v3369 = vpack.c.b16 %v3325, %v3323
    %v3370 = vpack.c.b16 %v3328, %v3326
    %v3371 = vpack.c.b16 %v3329, %v3327
    %v3372 = vpack.c.b16 %v3332, %v3330
    %v3373 = vpack.c.b16 %v3333, %v3331
    %v3374 = vpack.c.b16 %v3336, %v3334
    %v3375 = vpack.c.b16 %v3337, %v3335
    %v3376 = vpack.c.b16 %v3340, %v3338
    %v3377 = vpack.c.b16 %v3341, %v3339
    %v3378 = vpack.c.b16 %v3344, %v3342
    %v3379 = vpack.c.b16 %v3345, %v3343
    %v3380 = vpack.c.b16 %v3348, %v3346
    %v3381 = vpack.c.b16 %v3349, %v3347
    %3414 = vmatpush.bf16.msra.mxu0 %v3364
    %3415 = vmatpush.bf16.msra.mxu0 %v3362
    %3416 = vmatpush.bf16.msra.mxu0 %v3360
    %3417 = vmatpush.bf16.msra.mxu0 %v3358
    %3418 = vmatpush.bf16.msra.mxu0 %v3356
    %3419 = vmatpush.bf16.msra.mxu0 %v3354
    %3420 = vmatpush.bf16.msra.mxu0 %v3352
    %3421 = vmatpush.bf16.msra.mxu0 %v3350
    %3422 = vmatmul.bf16.gmra.mxu0 %v2680
    %v3423 = vpop.f32.mrf.mxu0
    %v3424 = vadd.f32 0.0, %v3423
    %v3425 = vpop.f32.mrf.mxu0
    %v3426 = vadd.f32 0.0, %v3425
    %3427 = vmatmul.bf16.gmra.mxu0 %v2682
    %v3428 = vpop.f32.mrf.mxu0
    %v3429 = vadd.f32 0.0, %v3428
    %v3430 = vpop.f32.mrf.mxu0
    %v3431 = vadd.f32 0.0, %v3430
    %3432 = vdwg.mxu0
    %3433 = vmatpush.bf16.msra.mxu0 %v3380
    %3434 = vmatpush.bf16.msra.mxu0 %v3378
    %3435 = vmatpush.bf16.msra.mxu0 %v3376
    %3436 = vmatpush.bf16.msra.mxu0 %v3374
    %3437 = vmatpush.bf16.msra.mxu0 %v3372
    %3438 = vmatpush.bf16.msra.mxu0 %v3370
    %3439 = vmatpush.bf16.msra.mxu0 %v3368
    %3440 = vmatpush.bf16.msra.mxu0 %v3366
    %3441 = vmatmul.bf16.gmra.mxu0 %v2681
    %v3442 = vpop.f32.mrf.mxu0
    %v3443 = vadd.f32 %v3424, %v3442
    %v3444 = vpop.f32.mrf.mxu0
    %v3445 = vadd.f32 %v3426, %v3444
    %3446 = vmatmul.bf16.gmra.mxu0 %v2683
    %v3447 = vpop.f32.mrf.mxu0
    %v3448 = vadd.f32 %v3429, %v3447
    %v3449 = vpop.f32.mrf.mxu0
    %v3450 = vadd.f32 %v3431, %v3449
    %3451 = vdwg.mxu0
    %3452 = vmatpush.bf16.msra.mxu0 %v3365
    %3453 = vmatpush.bf16.msra.mxu0 %v3363
    %3454 = vmatpush.bf16.msra.mxu0 %v3361
    %3455 = vmatpush.bf16.msra.mxu0 %v3359
    %3456 = vmatpush.bf16.msra.mxu0 %v3357
    %3457 = vmatpush.bf16.msra.mxu0 %v3355
    %3458 = vmatpush.bf16.msra.mxu0 %v3353
    %3459 = vmatpush.bf16.msra.mxu0 %v3351
    %3460 = vmatmul.bf16.gmra.mxu0 %v2680
    %v3461 = vpop.f32.mrf.mxu0
    %v3462 = vadd.f32 0.0, %v3461
    %v3463 = vpop.f32.mrf.mxu0
    %v3464 = vadd.f32 0.0, %v3463
    %3465 = vmatmul.bf16.gmra.mxu0 %v2682
    %v3466 = vpop.f32.mrf.mxu0
    %v3467 = vadd.f32 0.0, %v3466
    %v3468 = vpop.f32.mrf.mxu0
    %v3469 = vadd.f32 0.0, %v3468
    %3470 = vdwg.mxu0
    %3471 = vmatpush.bf16.msra.mxu0 %v3381
    %3472 = vmatpush.bf16.msra.mxu0 %v3379
    %3473 = vmatpush.bf16.msra.mxu0 %v3377
    %3474 = vmatpush.bf16.msra.mxu0 %v3375
    %3475 = vmatpush.bf16.msra.mxu0 %v3373
    %3476 = vmatpush.bf16.msra.mxu0 %v3371
    %3477 = vmatpush.bf16.msra.mxu0 %v3369
    %3478 = vmatpush.bf16.msra.mxu0 %v3367
    %3479 = vmatmul.bf16.gmra.mxu0 %v2681
    %v3480 = vpop.f32.mrf.mxu0
    %v3481 = vadd.f32 %v3462, %v3480
    %v3482 = vpop.f32.mrf.mxu0
    %v3483 = vadd.f32 %v3464, %v3482
    %3484 = vmatmul.bf16.gmra.mxu0 %v2683
    %v3485 = vpop.f32.mrf.mxu0
    %v3486 = vadd.f32 %v3467, %v3485
    %v3487 = vpop.f32.mrf.mxu0
    %v3488 = vadd.f32 %v3469, %v3487
    %3489 = vdwg.mxu0
    %v3490 = vadd.f32 %v3174, %v3443
    %v3491 = vadd.f32 %v3212, %v3481
    %v3492 = vadd.f32 %v3176, %v3445
    %v3493 = vadd.f32 %v3214, %v3483
    %v3494 = vadd.f32 %v3179, %v3448
    %v3495 = vadd.f32 %v3217, %v3486
    %v3496 = vadd.f32 %v3181, %v3450
    %v3497 = vadd.f32 %v3219, %v3488
    %v3498 = vld [vmem:[#allocation16] sm:$0x3]
    %v3500 = vperm.slane %v3498, 0
    %v3501 = vperm.slane %v3498, 1
    %v3504 = vadd.f32 %v3490, %v3500
    %v3505 = vadd.f32 %v3491, %v3501
    %v3506 = vadd.f32 %v3492, %v3500
    %v3507 = vadd.f32 %v3493, %v3501
    %v3508 = vadd.f32 %v3494, %v3500
    %v3509 = vadd.f32 %v3495, %v3501
    %v3510 = vadd.f32 %v3496, %v3500
    %v3511 = vadd.f32 %v3497, %v3501
    %v3512 = vmax.f32 %v3504, 0.0
    %v3513 = vmax.f32 %v3505, 0.0
    %v3514 = vmax.f32 %v3506, 0.0
    %v3515 = vmax.f32 %v3507, 0.0
    %v3516 = vmax.f32 %v3508, 0.0
    %v3517 = vmax.f32 %v3509, 0.0
    %v3518 = vmax.f32 %v3510, 0.0
    %v3519 = vmax.f32 %v3511, 0.0
    %v3520 = vpack.c.bf16 %v3514, %v3512
    %v3521 = vpack.c.bf16 %v3515, %v3513
    %v3522 = vpack.c.bf16 %v3518, %v3516
    %v3523 = vpack.c.bf16 %v3519, %v3517
    %v3524 = vld [vmem:[#allocation17] sm:$0xff]
    %v3525 = vld [vmem:[#allocation17 + $0x8] sm:$0xff]
    %v3526 = vld [vmem:[#allocation17 + $0x10] sm:$0xff]
    %v3527 = vld [vmem:[#allocation17 + $0x18] sm:$0xff]
    %v3528 = vld [vmem:[#allocation17 + $0x20] sm:$0xff]
    %v3529 = vld [vmem:[#allocation17 + $0x28] sm:$0xff]
    %v3530 = vld [vmem:[#allocation17 + $0x30] sm:$0xff]
    %v3531 = vld [vmem:[#allocation17 + $0x38] sm:$0xff]
    %v3532 = vld [vmem:[#allocation17 + $0x40] sm:$0xff]
    %v3533 = vld [vmem:[#allocation17 + $0x48] sm:$0xff]
    %v3534 = vld [vmem:[#allocation17 + $0x50] sm:$0xff]
    %v3535 = vld [vmem:[#allocation17 + $0x58] sm:$0xff]
    %v3536 = vld [vmem:[#allocation17 + $0x60] sm:$0xff]
    %v3537 = vld [vmem:[#allocation17 + $0x68] sm:$0xff]
    %v3538 = vld [vmem:[#allocation17 + $0x70] sm:$0xff]
    %v3539 = vld [vmem:[#allocation17 + $0x78] sm:$0xff]
    %v3540 = vld [vmem:[#allocation17 + $0x80] sm:$0xff]
    %v3541 = vld [vmem:[#allocation17 + $0x88] sm:$0xff]
    %v3542 = vld [vmem:[#allocation17 + $0x90] sm:$0xff]
    %v3543 = vld [vmem:[#allocation17 + $0x98] sm:$0xff]
    %v3544 = vld [vmem:[#allocation17 + $0xa0] sm:$0xff]
    %v3545 = vld [vmem:[#allocation17 + $0xa8] sm:$0xff]
    %v3546 = vld [vmem:[#allocation17 + $0xb0] sm:$0xff]
    %v3547 = vld [vmem:[#allocation17 + $0xb8] sm:$0xff]
    %v3548 = vld [vmem:[#allocation17 + $0xc0] sm:$0xff]
    %v3549 = vld [vmem:[#allocation17 + $0xc8] sm:$0xff]
    %v3550 = vld [vmem:[#allocation17 + $0xd0] sm:$0xff]
    %v3551 = vld [vmem:[#allocation17 + $0xd8] sm:$0xff]
    %v3552 = vld [vmem:[#allocation17 + $0xe0] sm:$0xff]
    %v3553 = vld [vmem:[#allocation17 + $0xe8] sm:$0xff]
    %v3554 = vld [vmem:[#allocation17 + $0xf0] sm:$0xff]
    %v3555 = vld [vmem:[#allocation17 + $0xf8] sm:$0xff]
    %v3556 = vld [vmem:[#allocation17 + $0x100] sm:$0xff]
    %v3557 = vld [vmem:[#allocation17 + $0x108] sm:$0xff]
    %v3558 = vld [vmem:[#allocation17 + $0x110] sm:$0xff]
    %v3559 = vld [vmem:[#allocation17 + $0x118] sm:$0xff]
    %v3560 = vld [vmem:[#allocation17 + $0x120] sm:$0xff]
    %v3561 = vld [vmem:[#allocation17 + $0x128] sm:$0xff]
    %v3562 = vld [vmem:[#allocation17 + $0x130] sm:$0xff]
    %v3563 = vld [vmem:[#allocation17 + $0x138] sm:$0xff]
    %v3564 = vld [vmem:[#allocation17 + $0x140] sm:$0xff]
    %v3565 = vld [vmem:[#allocation17 + $0x148] sm:$0xff]
    %v3566 = vld [vmem:[#allocation17 + $0x150] sm:$0xff]
    %v3567 = vld [vmem:[#allocation17 + $0x158] sm:$0xff]
    %v3568 = vld [vmem:[#allocation17 + $0x160] sm:$0xff]
    %v3569 = vld [vmem:[#allocation17 + $0x168] sm:$0xff]
    %v3570 = vld [vmem:[#allocation17 + $0x170] sm:$0xff]
    %v3571 = vld [vmem:[#allocation17 + $0x178] sm:$0xff]
    %v3572 = vld [vmem:[#allocation17 + $0x180] sm:$0xff]
    %v3573 = vld [vmem:[#allocation17 + $0x188] sm:$0xff]
    %v3574 = vld [vmem:[#allocation17 + $0x190] sm:$0xff]
    %v3575 = vld [vmem:[#allocation17 + $0x198] sm:$0xff]
    %v3576 = vld [vmem:[#allocation17 + $0x1a0] sm:$0xff]
    %v3577 = vld [vmem:[#allocation17 + $0x1a8] sm:$0xff]
    %v3578 = vld [vmem:[#allocation17 + $0x1b0] sm:$0xff]
    %v3579 = vld [vmem:[#allocation17 + $0x1b8] sm:$0xff]
    %v3580 = vld [vmem:[#allocation17 + $0x1c0] sm:$0xff]
    %v3581 = vld [vmem:[#allocation17 + $0x1c8] sm:$0xff]
    %v3582 = vld [vmem:[#allocation17 + $0x1d0] sm:$0xff]
    %v3583 = vld [vmem:[#allocation17 + $0x1d8] sm:$0xff]
    %v3584 = vld [vmem:[#allocation17 + $0x1e0] sm:$0xff]
    %v3585 = vld [vmem:[#allocation17 + $0x1e8] sm:$0xff]
    %v3586 = vld [vmem:[#allocation17 + $0x1f0] sm:$0xff]
    %v3587 = vld [vmem:[#allocation17 + $0x1f8] sm:$0xff]
    %v3588 = vld [vmem:[#allocation17 + $0x200] sm:$0xff]
    %v3589 = vld [vmem:[#allocation17 + $0x208] sm:$0xff]
    %v3590 = vld [vmem:[#allocation17 + $0x210] sm:$0xff]
    %v3591 = vld [vmem:[#allocation17 + $0x218] sm:$0xff]
    %v3592 = vld [vmem:[#allocation17 + $0x220] sm:$0xff]
    %v3593 = vld [vmem:[#allocation17 + $0x228] sm:$0xff]
    %v3594 = vld [vmem:[#allocation17 + $0x230] sm:$0xff]
    %v3595 = vld [vmem:[#allocation17 + $0x238] sm:$0xff]
    %v3596 = vld [vmem:[#allocation17 + $0x240] sm:$0xff]
    %v3597 = vld [vmem:[#allocation17 + $0x248] sm:$0xff]
    %v3598 = vld [vmem:[#allocation17 + $0x250] sm:$0xff]
    %v3599 = vld [vmem:[#allocation17 + $0x258] sm:$0xff]
    %v3600 = vld [vmem:[#allocation17 + $0x260] sm:$0xff]
    %v3601 = vld [vmem:[#allocation17 + $0x268] sm:$0xff]
    %v3602 = vld [vmem:[#allocation17 + $0x270] sm:$0xff]
    %v3603 = vld [vmem:[#allocation17 + $0x278] sm:$0xff]
    %v3604 = vld [vmem:[#allocation17 + $0x280] sm:$0xff]
    %v3605 = vld [vmem:[#allocation17 + $0x288] sm:$0xff]
    %v3606 = vld [vmem:[#allocation17 + $0x290] sm:$0xff]
    %v3607 = vld [vmem:[#allocation17 + $0x298] sm:$0xff]
    %v3608 = vld [vmem:[#allocation17 + $0x2a0] sm:$0xff]
    %v3609 = vld [vmem:[#allocation17 + $0x2a8] sm:$0xff]
    %v3610 = vld [vmem:[#allocation17 + $0x2b0] sm:$0xff]
    %v3611 = vld [vmem:[#allocation17 + $0x2b8] sm:$0xff]
    %v3612 = vld [vmem:[#allocation17 + $0x2c0] sm:$0xff]
    %v3613 = vld [vmem:[#allocation17 + $0x2c8] sm:$0xff]
    %v3614 = vld [vmem:[#allocation17 + $0x2d0] sm:$0xff]
    %v3615 = vld [vmem:[#allocation17 + $0x2d8] sm:$0xff]
    %v3616 = vld [vmem:[#allocation17 + $0x2e0] sm:$0xff]
    %v3617 = vld [vmem:[#allocation17 + $0x2e8] sm:$0xff]
    %v3618 = vld [vmem:[#allocation17 + $0x2f0] sm:$0xff]
    %v3619 = vld [vmem:[#allocation17 + $0x2f8] sm:$0xff]
    %v3620 = vld [vmem:[#allocation17 + $0x300] sm:$0xff]
    %v3621 = vld [vmem:[#allocation17 + $0x308] sm:$0xff]
    %v3622 = vld [vmem:[#allocation17 + $0x310] sm:$0xff]
    %v3623 = vld [vmem:[#allocation17 + $0x318] sm:$0xff]
    %v3624 = vld [vmem:[#allocation17 + $0x320] sm:$0xff]
    %v3625 = vld [vmem:[#allocation17 + $0x328] sm:$0xff]
    %v3626 = vld [vmem:[#allocation17 + $0x330] sm:$0xff]
    %v3627 = vld [vmem:[#allocation17 + $0x338] sm:$0xff]
    %v3628 = vld [vmem:[#allocation17 + $0x340] sm:$0xff]
    %v3629 = vld [vmem:[#allocation17 + $0x348] sm:$0xff]
    %v3630 = vld [vmem:[#allocation17 + $0x350] sm:$0xff]
    %v3631 = vld [vmem:[#allocation17 + $0x358] sm:$0xff]
    %v3632 = vld [vmem:[#allocation17 + $0x360] sm:$0xff]
    %v3633 = vld [vmem:[#allocation17 + $0x368] sm:$0xff]
    %v3634 = vld [vmem:[#allocation17 + $0x370] sm:$0xff]
    %v3635 = vld [vmem:[#allocation17 + $0x378] sm:$0xff]
    %v3636 = vld [vmem:[#allocation17 + $0x380] sm:$0xff]
    %v3637 = vld [vmem:[#allocation17 + $0x388] sm:$0xff]
    %v3638 = vld [vmem:[#allocation17 + $0x390] sm:$0xff]
    %v3639 = vld [vmem:[#allocation17 + $0x398] sm:$0xff]
    %v3640 = vld [vmem:[#allocation17 + $0x3a0] sm:$0xff]
    %v3641 = vld [vmem:[#allocation17 + $0x3a8] sm:$0xff]
    %v3642 = vld [vmem:[#allocation17 + $0x3b0] sm:$0xff]
    %v3643 = vld [vmem:[#allocation17 + $0x3b8] sm:$0xff]
    %v3644 = vld [vmem:[#allocation17 + $0x3c0] sm:$0xff]
    %v3645 = vld [vmem:[#allocation17 + $0x3c8] sm:$0xff]
    %v3646 = vld [vmem:[#allocation17 + $0x3d0] sm:$0xff]
    %v3647 = vld [vmem:[#allocation17 + $0x3d8] sm:$0xff]
    %v3648 = vld [vmem:[#allocation17 + $0x3e0] sm:$0xff]
    %v3649 = vld [vmem:[#allocation17 + $0x3e8] sm:$0xff]
    %v3650 = vld [vmem:[#allocation17 + $0x3f0] sm:$0xff]
    %v3651 = vld [vmem:[#allocation17 + $0x3f8] sm:$0xff]
    %v3652 = vld [vmem:[%s11] sm:$0xff]
    %v3654 = vperm.slane %v3652, 0
    %v3655 = vperm.slane %v3652, 1
    %v3656 = vperm.slane %v3652, 2
    %v3657 = vperm.slane %v3652, 3
    %v3658 = vperm.slane %v3652, 4
    %v3659 = vperm.slane %v3652, 5
    %v3660 = vperm.slane %v3652, 6
    %v3661 = vperm.slane %v3652, 7
    %v3798 = vunpack.c.l.b16 %v3524
    %v3799 = vunpack.c.h.b16 %v3524
    %v3800 = vunpack.c.l.b16 %v3525
    %v3801 = vunpack.c.h.b16 %v3525
    %v3802 = vunpack.c.l.b16 %v3526
    %v3803 = vunpack.c.h.b16 %v3526
    %v3804 = vunpack.c.l.b16 %v3527
    %v3805 = vunpack.c.h.b16 %v3527
    %v3806 = vunpack.c.l.b16 %v3528
    %v3807 = vunpack.c.h.b16 %v3528
    %v3808 = vunpack.c.l.b16 %v3529
    %v3809 = vunpack.c.h.b16 %v3529
    %v3810 = vunpack.c.l.b16 %v3530
    %v3811 = vunpack.c.h.b16 %v3530
    %v3812 = vunpack.c.l.b16 %v3531
    %v3813 = vunpack.c.h.b16 %v3531
    %v3814 = vunpack.c.l.b16 %v3532
    %v3815 = vunpack.c.h.b16 %v3532
    %v3816 = vunpack.c.l.b16 %v3533
    %v3817 = vunpack.c.h.b16 %v3533
    %v3818 = vunpack.c.l.b16 %v3534
    %v3819 = vunpack.c.h.b16 %v3534
    %v3820 = vunpack.c.l.b16 %v3535
    %v3821 = vunpack.c.h.b16 %v3535
    %v3822 = vunpack.c.l.b16 %v3536
    %v3823 = vunpack.c.h.b16 %v3536
    %v3824 = vunpack.c.l.b16 %v3537
    %v3825 = vunpack.c.h.b16 %v3537
    %v3826 = vunpack.c.l.b16 %v3538
    %v3827 = vunpack.c.h.b16 %v3538
    %v3828 = vunpack.c.l.b16 %v3539
    %v3829 = vunpack.c.h.b16 %v3539
    %v3830 = vunpack.c.l.b16 %v3540
    %v3831 = vunpack.c.h.b16 %v3540
    %v3832 = vunpack.c.l.b16 %v3541
    %v3833 = vunpack.c.h.b16 %v3541
    %v3834 = vunpack.c.l.b16 %v3542
    %v3835 = vunpack.c.h.b16 %v3542
    %v3836 = vunpack.c.l.b16 %v3543
    %v3837 = vunpack.c.h.b16 %v3543
    %v3838 = vunpack.c.l.b16 %v3544
    %v3839 = vunpack.c.h.b16 %v3544
    %v3840 = vunpack.c.l.b16 %v3545
    %v3841 = vunpack.c.h.b16 %v3545
    %v3842 = vunpack.c.l.b16 %v3546
    %v3843 = vunpack.c.h.b16 %v3546
    %v3844 = vunpack.c.l.b16 %v3547
    %v3845 = vunpack.c.h.b16 %v3547
    %v3846 = vunpack.c.l.b16 %v3548
    %v3847 = vunpack.c.h.b16 %v3548
    %v3848 = vunpack.c.l.b16 %v3549
    %v3849 = vunpack.c.h.b16 %v3549
    %v3850 = vunpack.c.l.b16 %v3550
    %v3851 = vunpack.c.h.b16 %v3550
    %v3852 = vunpack.c.l.b16 %v3551
    %v3853 = vunpack.c.h.b16 %v3551
    %v3854 = vunpack.c.l.b16 %v3552
    %v3855 = vunpack.c.h.b16 %v3552
    %v3856 = vunpack.c.l.b16 %v3553
    %v3857 = vunpack.c.h.b16 %v3553
    %v3858 = vunpack.c.l.b16 %v3554
    %v3859 = vunpack.c.h.b16 %v3554
    %v3860 = vunpack.c.l.b16 %v3555
    %v3861 = vunpack.c.h.b16 %v3555
    %v3862 = vunpack.c.l.b16 %v3556
    %v3863 = vunpack.c.h.b16 %v3556
    %v3864 = vunpack.c.l.b16 %v3557
    %v3865 = vunpack.c.h.b16 %v3557
    %v3866 = vunpack.c.l.b16 %v3558
    %v3867 = vunpack.c.h.b16 %v3558
    %v3868 = vunpack.c.l.b16 %v3559
    %v3869 = vunpack.c.h.b16 %v3559
    %v3870 = vunpack.c.l.b16 %v3560
    %v3871 = vunpack.c.h.b16 %v3560
    %v3872 = vunpack.c.l.b16 %v3561
    %v3873 = vunpack.c.h.b16 %v3561
    %v3874 = vunpack.c.l.b16 %v3562
    %v3875 = vunpack.c.h.b16 %v3562
    %v3876 = vunpack.c.l.b16 %v3563
    %v3877 = vunpack.c.h.b16 %v3563
    %v3878 = vunpack.c.l.b16 %v3564
    %v3879 = vunpack.c.h.b16 %v3564
    %v3880 = vunpack.c.l.b16 %v3565
    %v3881 = vunpack.c.h.b16 %v3565
    %v3882 = vunpack.c.l.b16 %v3566
    %v3883 = vunpack.c.h.b16 %v3566
    %v3884 = vunpack.c.l.b16 %v3567
    %v3885 = vunpack.c.h.b16 %v3567
    %v3886 = vunpack.c.l.b16 %v3568
    %v3887 = vunpack.c.h.b16 %v3568
    %v3888 = vunpack.c.l.b16 %v3569
    %v3889 = vunpack.c.h.b16 %v3569
    %v3890 = vunpack.c.l.b16 %v3570
    %v3891 = vunpack.c.h.b16 %v3570
    %v3892 = vunpack.c.l.b16 %v3571
    %v3893 = vunpack.c.h.b16 %v3571
    %v3894 = vunpack.c.l.b16 %v3572
    %v3895 = vunpack.c.h.b16 %v3572
    %v3896 = vunpack.c.l.b16 %v3573
    %v3897 = vunpack.c.h.b16 %v3573
    %v3898 = vunpack.c.l.b16 %v3574
    %v3899 = vunpack.c.h.b16 %v3574
    %v3900 = vunpack.c.l.b16 %v3575
    %v3901 = vunpack.c.h.b16 %v3575
    %v3902 = vunpack.c.l.b16 %v3576
    %v3903 = vunpack.c.h.b16 %v3576
    %v3904 = vunpack.c.l.b16 %v3577
    %v3905 = vunpack.c.h.b16 %v3577
    %v3906 = vunpack.c.l.b16 %v3578
    %v3907 = vunpack.c.h.b16 %v3578
    %v3908 = vunpack.c.l.b16 %v3579
    %v3909 = vunpack.c.h.b16 %v3579
    %v3910 = vunpack.c.l.b16 %v3580
    %v3911 = vunpack.c.h.b16 %v3580
    %v3912 = vunpack.c.l.b16 %v3581
    %v3913 = vunpack.c.h.b16 %v3581
    %v3914 = vunpack.c.l.b16 %v3582
    %v3915 = vunpack.c.h.b16 %v3582
    %v3916 = vunpack.c.l.b16 %v3583
    %v3917 = vunpack.c.h.b16 %v3583
    %v3918 = vunpack.c.l.b16 %v3584
    %v3919 = vunpack.c.h.b16 %v3584
    %v3920 = vunpack.c.l.b16 %v3585
    %v3921 = vunpack.c.h.b16 %v3585
    %v3922 = vunpack.c.l.b16 %v3586
    %v3923 = vunpack.c.h.b16 %v3586
    %v3924 = vunpack.c.l.b16 %v3587
    %v3925 = vunpack.c.h.b16 %v3587
    %v3926 = vunpack.c.l.b16 %v3588
    %v3927 = vunpack.c.h.b16 %v3588
    %v3928 = vunpack.c.l.b16 %v3589
    %v3929 = vunpack.c.h.b16 %v3589
    %v3930 = vunpack.c.l.b16 %v3590
    %v3931 = vunpack.c.h.b16 %v3590
    %v3932 = vunpack.c.l.b16 %v3591
    %v3933 = vunpack.c.h.b16 %v3591
    %v3934 = vunpack.c.l.b16 %v3592
    %v3935 = vunpack.c.h.b16 %v3592
    %v3936 = vunpack.c.l.b16 %v3593
    %v3937 = vunpack.c.h.b16 %v3593
    %v3938 = vunpack.c.l.b16 %v3594
    %v3939 = vunpack.c.h.b16 %v3594
    %v3940 = vunpack.c.l.b16 %v3595
    %v3941 = vunpack.c.h.b16 %v3595
    %v3942 = vunpack.c.l.b16 %v3596
    %v3943 = vunpack.c.h.b16 %v3596
    %v3944 = vunpack.c.l.b16 %v3597
    %v3945 = vunpack.c.h.b16 %v3597
    %v3946 = vunpack.c.l.b16 %v3598
    %v3947 = vunpack.c.h.b16 %v3598
    %v3948 = vunpack.c.l.b16 %v3599
    %v3949 = vunpack.c.h.b16 %v3599
    %v3950 = vunpack.c.l.b16 %v3600
    %v3951 = vunpack.c.h.b16 %v3600
    %v3952 = vunpack.c.l.b16 %v3601
    %v3953 = vunpack.c.h.b16 %v3601
    %v3954 = vunpack.c.l.b16 %v3602
    %v3955 = vunpack.c.h.b16 %v3602
    %v3956 = vunpack.c.l.b16 %v3603
    %v3957 = vunpack.c.h.b16 %v3603
    %v3958 = vunpack.c.l.b16 %v3604
    %v3959 = vunpack.c.h.b16 %v3604
    %v3960 = vunpack.c.l.b16 %v3605
    %v3961 = vunpack.c.h.b16 %v3605
    %v3962 = vunpack.c.l.b16 %v3606
    %v3963 = vunpack.c.h.b16 %v3606
    %v3964 = vunpack.c.l.b16 %v3607
    %v3965 = vunpack.c.h.b16 %v3607
    %v3966 = vunpack.c.l.b16 %v3608
    %v3967 = vunpack.c.h.b16 %v3608
    %v3968 = vunpack.c.l.b16 %v3609
    %v3969 = vunpack.c.h.b16 %v3609
    %v3970 = vunpack.c.l.b16 %v3610
    %v3971 = vunpack.c.h.b16 %v3610
    %v3972 = vunpack.c.l.b16 %v3611
    %v3973 = vunpack.c.h.b16 %v3611
    %v3974 = vunpack.c.l.b16 %v3612
    %v3975 = vunpack.c.h.b16 %v3612
    %v3976 = vunpack.c.l.b16 %v3613
    %v3977 = vunpack.c.h.b16 %v3613
    %v3978 = vunpack.c.l.b16 %v3614
    %v3979 = vunpack.c.h.b16 %v3614
    %v3980 = vunpack.c.l.b16 %v3615
    %v3981 = vunpack.c.h.b16 %v3615
    %v3982 = vunpack.c.l.b16 %v3616
    %v3983 = vunpack.c.h.b16 %v3616
    %v3984 = vunpack.c.l.b16 %v3617
    %v3985 = vunpack.c.h.b16 %v3617
    %v3986 = vunpack.c.l.b16 %v3618
    %v3987 = vunpack.c.h.b16 %v3618
    %v3988 = vunpack.c.l.b16 %v3619
    %v3989 = vunpack.c.h.b16 %v3619
    %v3990 = vunpack.c.l.b16 %v3620
    %v3991 = vunpack.c.h.b16 %v3620
    %v3992 = vunpack.c.l.b16 %v3621
    %v3993 = vunpack.c.h.b16 %v3621
    %v3994 = vunpack.c.l.b16 %v3622
    %v3995 = vunpack.c.h.b16 %v3622
    %v3996 = vunpack.c.l.b16 %v3623
    %v3997 = vunpack.c.h.b16 %v3623
    %v3998 = vunpack.c.l.b16 %v3624
    %v3999 = vunpack.c.h.b16 %v3624
    %v4000 = vunpack.c.l.b16 %v3625
    %v4001 = vunpack.c.h.b16 %v3625
    %v4002 = vunpack.c.l.b16 %v3626
    %v4003 = vunpack.c.h.b16 %v3626
    %v4004 = vunpack.c.l.b16 %v3627
    %v4005 = vunpack.c.h.b16 %v3627
    %v4006 = vunpack.c.l.b16 %v3628
    %v4007 = vunpack.c.h.b16 %v3628
    %v4008 = vunpack.c.l.b16 %v3629
    %v4009 = vunpack.c.h.b16 %v3629
    %v4010 = vunpack.c.l.b16 %v3630
    %v4011 = vunpack.c.h.b16 %v3630
    %v4012 = vunpack.c.l.b16 %v3631
    %v4013 = vunpack.c.h.b16 %v3631
    %v4014 = vunpack.c.l.b16 %v3632
    %v4015 = vunpack.c.h.b16 %v3632
    %v4016 = vunpack.c.l.b16 %v3633
    %v4017 = vunpack.c.h.b16 %v3633
    %v4018 = vunpack.c.l.b16 %v3634
    %v4019 = vunpack.c.h.b16 %v3634
    %v4020 = vunpack.c.l.b16 %v3635
    %v4021 = vunpack.c.h.b16 %v3635
    %v4022 = vunpack.c.l.b16 %v3636
    %v4023 = vunpack.c.h.b16 %v3636
    %v4024 = vunpack.c.l.b16 %v3637
    %v4025 = vunpack.c.h.b16 %v3637
    %v4026 = vunpack.c.l.b16 %v3638
    %v4027 = vunpack.c.h.b16 %v3638
    %v4028 = vunpack.c.l.b16 %v3639
    %v4029 = vunpack.c.h.b16 %v3639
    %v4030 = vunpack.c.l.b16 %v3640
    %v4031 = vunpack.c.h.b16 %v3640
    %v4032 = vunpack.c.l.b16 %v3641
    %v4033 = vunpack.c.h.b16 %v3641
    %v4034 = vunpack.c.l.b16 %v3642
    %v4035 = vunpack.c.h.b16 %v3642
    %v4036 = vunpack.c.l.b16 %v3643
    %v4037 = vunpack.c.h.b16 %v3643
    %v4038 = vunpack.c.l.b16 %v3644
    %v4039 = vunpack.c.h.b16 %v3644
    %v4040 = vunpack.c.l.b16 %v3645
    %v4041 = vunpack.c.h.b16 %v3645
    %v4042 = vunpack.c.l.b16 %v3646
    %v4043 = vunpack.c.h.b16 %v3646
    %v4044 = vunpack.c.l.b16 %v3647
    %v4045 = vunpack.c.h.b16 %v3647
    %v4046 = vunpack.c.l.b16 %v3648
    %v4047 = vunpack.c.h.b16 %v3648
    %v4048 = vunpack.c.l.b16 %v3649
    %v4049 = vunpack.c.h.b16 %v3649
    %v4050 = vunpack.c.l.b16 %v3650
    %v4051 = vunpack.c.h.b16 %v3650
    %v4052 = vunpack.c.l.b16 %v3651
    %v4053 = vunpack.c.h.b16 %v3651
    %v4054 = vpack.c.b16 %v3806, %v3798
    %v4055 = vpack.c.b16 %v3807, %v3799
    %v4056 = vpack.c.b16 %v3808, %v3800
    %v4057 = vpack.c.b16 %v3809, %v3801
    %v4058 = vpack.c.b16 %v3810, %v3802
    %v4059 = vpack.c.b16 %v3811, %v3803
    %v4060 = vpack.c.b16 %v3812, %v3804
    %v4061 = vpack.c.b16 %v3813, %v3805
    %v4062 = vpack.c.b16 %v3822, %v3814
    %v4063 = vpack.c.b16 %v3823, %v3815
    %v4064 = vpack.c.b16 %v3824, %v3816
    %v4065 = vpack.c.b16 %v3825, %v3817
    %v4066 = vpack.c.b16 %v3826, %v3818
    %v4067 = vpack.c.b16 %v3827, %v3819
    %v4068 = vpack.c.b16 %v3828, %v3820
    %v4069 = vpack.c.b16 %v3829, %v3821
    %v4070 = vpack.c.b16 %v3838, %v3830
    %v4071 = vpack.c.b16 %v3839, %v3831
    %v4072 = vpack.c.b16 %v3840, %v3832
    %v4073 = vpack.c.b16 %v3841, %v3833
    %v4074 = vpack.c.b16 %v3842, %v3834
    %v4075 = vpack.c.b16 %v3843, %v3835
    %v4076 = vpack.c.b16 %v3844, %v3836
    %v4077 = vpack.c.b16 %v3845, %v3837
    %v4078 = vpack.c.b16 %v3854, %v3846
    %v4079 = vpack.c.b16 %v3855, %v3847
    %v4080 = vpack.c.b16 %v3856, %v3848
    %v4081 = vpack.c.b16 %v3857, %v3849
    %v4082 = vpack.c.b16 %v3858, %v3850
    %v4083 = vpack.c.b16 %v3859, %v3851
    %v4084 = vpack.c.b16 %v3860, %v3852
    %v4085 = vpack.c.b16 %v3861, %v3853
    %v4086 = vpack.c.b16 %v3870, %v3862
    %v4087 = vpack.c.b16 %v3871, %v3863
    %v4088 = vpack.c.b16 %v3872, %v3864
    %v4089 = vpack.c.b16 %v3873, %v3865
    %v4090 = vpack.c.b16 %v3874, %v3866
    %v4091 = vpack.c.b16 %v3875, %v3867
    %v4092 = vpack.c.b16 %v3876, %v3868
    %v4093 = vpack.c.b16 %v3877, %v3869
    %v4094 = vpack.c.b16 %v3886, %v3878
    %v4095 = vpack.c.b16 %v3887, %v3879
    %v4096 = vpack.c.b16 %v3888, %v3880
    %v4097 = vpack.c.b16 %v3889, %v3881
    %v4098 = vpack.c.b16 %v3890, %v3882
    %v4099 = vpack.c.b16 %v3891, %v3883
    %v4100 = vpack.c.b16 %v3892, %v3884
    %v4101 = vpack.c.b16 %v3893, %v3885
    %v4102 = vpack.c.b16 %v3902, %v3894
    %v4103 = vpack.c.b16 %v3903, %v3895
    %v4104 = vpack.c.b16 %v3904, %v3896
    %v4105 = vpack.c.b16 %v3905, %v3897
    %v4106 = vpack.c.b16 %v3906, %v3898
    %v4107 = vpack.c.b16 %v3907, %v3899
    %v4108 = vpack.c.b16 %v3908, %v3900
    %v4109 = vpack.c.b16 %v3909, %v3901
    %v4110 = vpack.c.b16 %v3918, %v3910
    %v4111 = vpack.c.b16 %v3919, %v3911
    %v4112 = vpack.c.b16 %v3920, %v3912
    %v4113 = vpack.c.b16 %v3921, %v3913
    %v4114 = vpack.c.b16 %v3922, %v3914
    %v4115 = vpack.c.b16 %v3923, %v3915
    %v4116 = vpack.c.b16 %v3924, %v3916
    %v4117 = vpack.c.b16 %v3925, %v3917
    %v4118 = vpack.c.b16 %v3934, %v3926
    %v4119 = vpack.c.b16 %v3935, %v3927
    %v4120 = vpack.c.b16 %v3936, %v3928
    %v4121 = vpack.c.b16 %v3937, %v3929
    %v4122 = vpack.c.b16 %v3938, %v3930
    %v4123 = vpack.c.b16 %v3939, %v3931
    %v4124 = vpack.c.b16 %v3940, %v3932
    %v4125 = vpack.c.b16 %v3941, %v3933
    %v4126 = vpack.c.b16 %v3950, %v3942
    %v4127 = vpack.c.b16 %v3951, %v3943
    %v4128 = vpack.c.b16 %v3952, %v3944
    %v4129 = vpack.c.b16 %v3953, %v3945
    %v4130 = vpack.c.b16 %v3954, %v3946
    %v4131 = vpack.c.b16 %v3955, %v3947
    %v4132 = vpack.c.b16 %v3956, %v3948
    %v4133 = vpack.c.b16 %v3957, %v3949
    %v4134 = vpack.c.b16 %v3966, %v3958
    %v4135 = vpack.c.b16 %v3967, %v3959
    %v4136 = vpack.c.b16 %v3968, %v3960
    %v4137 = vpack.c.b16 %v3969, %v3961
    %v4138 = vpack.c.b16 %v3970, %v3962
    %v4139 = vpack.c.b16 %v3971, %v3963
    %v4140 = vpack.c.b16 %v3972, %v3964
    %v4141 = vpack.c.b16 %v3973, %v3965
    %v4142 = vpack.c.b16 %v3982, %v3974
    %v4143 = vpack.c.b16 %v3983, %v3975
    %v4144 = vpack.c.b16 %v3984, %v3976
    %v4145 = vpack.c.b16 %v3985, %v3977
    %v4146 = vpack.c.b16 %v3986, %v3978
    %v4147 = vpack.c.b16 %v3987, %v3979
    %v4148 = vpack.c.b16 %v3988, %v3980
    %v4149 = vpack.c.b16 %v3989, %v3981
    %v4150 = vpack.c.b16 %v3998, %v3990
    %v4151 = vpack.c.b16 %v3999, %v3991
    %v4152 = vpack.c.b16 %v4000, %v3992
    %v4153 = vpack.c.b16 %v4001, %v3993
    %v4154 = vpack.c.b16 %v4002, %v3994
    %v4155 = vpack.c.b16 %v4003, %v3995
    %v4156 = vpack.c.b16 %v4004, %v3996
    %v4157 = vpack.c.b16 %v4005, %v3997
    %v4158 = vpack.c.b16 %v4014, %v4006
    %v4159 = vpack.c.b16 %v4015, %v4007
    %v4160 = vpack.c.b16 %v4016, %v4008
    %v4161 = vpack.c.b16 %v4017, %v4009
    %v4162 = vpack.c.b16 %v4018, %v4010
    %v4163 = vpack.c.b16 %v4019, %v4011
    %v4164 = vpack.c.b16 %v4020, %v4012
    %v4165 = vpack.c.b16 %v4021, %v4013
    %v4166 = vpack.c.b16 %v4030, %v4022
    %v4167 = vpack.c.b16 %v4031, %v4023
    %v4168 = vpack.c.b16 %v4032, %v4024
    %v4169 = vpack.c.b16 %v4033, %v4025
    %v4170 = vpack.c.b16 %v4034, %v4026
    %v4171 = vpack.c.b16 %v4035, %v4027
    %v4172 = vpack.c.b16 %v4036, %v4028
    %v4173 = vpack.c.b16 %v4037, %v4029
    %v4174 = vpack.c.b16 %v4046, %v4038
    %v4175 = vpack.c.b16 %v4047, %v4039
    %v4176 = vpack.c.b16 %v4048, %v4040
    %v4177 = vpack.c.b16 %v4049, %v4041
    %v4178 = vpack.c.b16 %v4050, %v4042
    %v4179 = vpack.c.b16 %v4051, %v4043
    %v4180 = vpack.c.b16 %v4052, %v4044
    %v4181 = vpack.c.b16 %v4053, %v4045
    %4310 = vmatpush.bf16.msra.mxu0 %v4110
    %4311 = vmatpush.bf16.msra.mxu0 %v4102
    %4312 = vmatpush.bf16.msra.mxu0 %v4094
    %4313 = vmatpush.bf16.msra.mxu0 %v4086
    %4314 = vmatpush.bf16.msra.mxu0 %v4078
    %4315 = vmatpush.bf16.msra.mxu0 %v4070
    %4316 = vmatpush.bf16.msra.mxu0 %v4062
    %4317 = vmatpush.bf16.msra.mxu0 %v4054
    %4318 = vmatmul.bf16.gmra.mxu0 %v3520
    %v4319 = vpop.f32.mrf.mxu0
    %v4320 = vadd.f32 %v3654, %v4319
    %v4321 = vpop.f32.mrf.mxu0
    %v4322 = vadd.f32 %v3654, %v4321
    %4323 = vmatmul.bf16.gmra.mxu0 %v3522
    %v4324 = vpop.f32.mrf.mxu0
    %v4325 = vadd.f32 %v3654, %v4324
    %v4326 = vpop.f32.mrf.mxu0
    %v4327 = vadd.f32 %v3654, %v4326
    %4328 = vdwg.mxu0
    %4329 = vmatpush.bf16.msra.mxu0 %v4174
    %4330 = vmatpush.bf16.msra.mxu0 %v4166
    %4331 = vmatpush.bf16.msra.mxu0 %v4158
    %4332 = vmatpush.bf16.msra.mxu0 %v4150
    %4333 = vmatpush.bf16.msra.mxu0 %v4142
    %4334 = vmatpush.bf16.msra.mxu0 %v4134
    %4335 = vmatpush.bf16.msra.mxu0 %v4126
    %4336 = vmatpush.bf16.msra.mxu0 %v4118
    %4337 = vmatmul.bf16.gmra.mxu0 %v3521
    %v4338 = vpop.f32.mrf.mxu0
    %v4339 = vadd.f32 %v4320, %v4338
    %v4340 = vpop.f32.mrf.mxu0
    %v4341 = vadd.f32 %v4322, %v4340
    %4342 = vmatmul.bf16.gmra.mxu0 %v3523
    %v4343 = vpop.f32.mrf.mxu0
    %v4344 = vadd.f32 %v4325, %v4343
    %v4345 = vpop.f32.mrf.mxu0
    %v4346 = vadd.f32 %v4327, %v4345
    %4347 = vdwg.mxu0
    %4348 = vmatpush.bf16.msra.mxu0 %v4111
    %4349 = vmatpush.bf16.msra.mxu0 %v4103
    %4350 = vmatpush.bf16.msra.mxu0 %v4095
    %4351 = vmatpush.bf16.msra.mxu0 %v4087
    %4352 = vmatpush.bf16.msra.mxu0 %v4079
    %4353 = vmatpush.bf16.msra.mxu0 %v4071
    %4354 = vmatpush.bf16.msra.mxu0 %v4063
    %4355 = vmatpush.bf16.msra.mxu0 %v4055
    %4356 = vmatmul.bf16.gmra.mxu0 %v3520
    %v4357 = vpop.f32.mrf.mxu0
    %v4358 = vadd.f32 %v3655, %v4357
    %v4359 = vpop.f32.mrf.mxu0
    %v4360 = vadd.f32 %v3655, %v4359
    %4361 = vmatmul.bf16.gmra.mxu0 %v3522
    %v4362 = vpop.f32.mrf.mxu0
    %v4363 = vadd.f32 %v3655, %v4362
    %v4364 = vpop.f32.mrf.mxu0
    %v4365 = vadd.f32 %v3655, %v4364
    %4366 = vdwg.mxu0
    %4367 = vmatpush.bf16.msra.mxu0 %v4175
    %4368 = vmatpush.bf16.msra.mxu0 %v4167
    %4369 = vmatpush.bf16.msra.mxu0 %v4159
    %4370 = vmatpush.bf16.msra.mxu0 %v4151
    %4371 = vmatpush.bf16.msra.mxu0 %v4143
    %4372 = vmatpush.bf16.msra.mxu0 %v4135
    %4373 = vmatpush.bf16.msra.mxu0 %v4127
    %4374 = vmatpush.bf16.msra.mxu0 %v4119
    %4375 = vmatmul.bf16.gmra.mxu0 %v3521
    %v4376 = vpop.f32.mrf.mxu0
    %v4377 = vadd.f32 %v4358, %v4376
    %v4378 = vpop.f32.mrf.mxu0
    %v4379 = vadd.f32 %v4360, %v4378
    %4380 = vmatmul.bf16.gmra.mxu0 %v3523
    %v4381 = vpop.f32.mrf.mxu0
    %v4382 = vadd.f32 %v4363, %v4381
    %v4383 = vpop.f32.mrf.mxu0
    %v4384 = vadd.f32 %v4365, %v4383
    %4385 = vdwg.mxu0
    %4386 = vmatpush.bf16.msra.mxu0 %v4112
    %4387 = vmatpush.bf16.msra.mxu0 %v4104
    %4388 = vmatpush.bf16.msra.mxu0 %v4096
    %4389 = vmatpush.bf16.msra.mxu0 %v4088
    %4390 = vmatpush.bf16.msra.mxu0 %v4080
    %4391 = vmatpush.bf16.msra.mxu0 %v4072
    %4392 = vmatpush.bf16.msra.mxu0 %v4064
    %4393 = vmatpush.bf16.msra.mxu0 %v4056
    %4394 = vmatmul.bf16.gmra.mxu0 %v3520
    %v4395 = vpop.f32.mrf.mxu0
    %v4396 = vadd.f32 %v3656, %v4395
    %v4397 = vpop.f32.mrf.mxu0
    %v4398 = vadd.f32 %v3656, %v4397
    %4399 = vmatmul.bf16.gmra.mxu0 %v3522
    %v4400 = vpop.f32.mrf.mxu0
    %v4401 = vadd.f32 %v3656, %v4400
    %v4402 = vpop.f32.mrf.mxu0
    %v4403 = vadd.f32 %v3656, %v4402
    %4404 = vdwg.mxu0
    %4405 = vmatpush.bf16.msra.mxu0 %v4176
    %4406 = vmatpush.bf16.msra.mxu0 %v4168
    %4407 = vmatpush.bf16.msra.mxu0 %v4160
    %4408 = vmatpush.bf16.msra.mxu0 %v4152
    %4409 = vmatpush.bf16.msra.mxu0 %v4144
    %4410 = vmatpush.bf16.msra.mxu0 %v4136
    %4411 = vmatpush.bf16.msra.mxu0 %v4128
    %4412 = vmatpush.bf16.msra.mxu0 %v4120
    %4413 = vmatmul.bf16.gmra.mxu0 %v3521
    %v4414 = vpop.f32.mrf.mxu0
    %v4415 = vadd.f32 %v4396, %v4414
    %v4416 = vpop.f32.mrf.mxu0
    %v4417 = vadd.f32 %v4398, %v4416
    %4418 = vmatmul.bf16.gmra.mxu0 %v3523
    %v4419 = vpop.f32.mrf.mxu0
    %v4420 = vadd.f32 %v4401, %v4419
    %v4421 = vpop.f32.mrf.mxu0
    %v4422 = vadd.f32 %v4403, %v4421
    %4423 = vdwg.mxu0
    %4424 = vmatpush.bf16.msra.mxu0 %v4113
    %4425 = vmatpush.bf16.msra.mxu0 %v4105
    %4426 = vmatpush.bf16.msra.mxu0 %v4097
    %4427 = vmatpush.bf16.msra.mxu0 %v4089
    %4428 = vmatpush.bf16.msra.mxu0 %v4081
    %4429 = vmatpush.bf16.msra.mxu0 %v4073
    %4430 = vmatpush.bf16.msra.mxu0 %v4065
    %4431 = vmatpush.bf16.msra.mxu0 %v4057
    %4432 = vmatmul.bf16.gmra.mxu0 %v3520
    %v4433 = vpop.f32.mrf.mxu0
    %v4434 = vadd.f32 %v3657, %v4433
    %v4435 = vpop.f32.mrf.mxu0
    %v4436 = vadd.f32 %v3657, %v4435
    %4437 = vmatmul.bf16.gmra.mxu0 %v3522
    %v4438 = vpop.f32.mrf.mxu0
    %v4439 = vadd.f32 %v3657, %v4438
    %v4440 = vpop.f32.mrf.mxu0
    %v4441 = vadd.f32 %v3657, %v4440
    %4442 = vdwg.mxu0
    %4443 = vmatpush.bf16.msra.mxu0 %v4177
    %4444 = vmatpush.bf16.msra.mxu0 %v4169
    %4445 = vmatpush.bf16.msra.mxu0 %v4161
    %4446 = vmatpush.bf16.msra.mxu0 %v4153
    %4447 = vmatpush.bf16.msra.mxu0 %v4145
    %4448 = vmatpush.bf16.msra.mxu0 %v4137
    %4449 = vmatpush.bf16.msra.mxu0 %v4129
    %4450 = vmatpush.bf16.msra.mxu0 %v4121
    %4451 = vmatmul.bf16.gmra.mxu0 %v3521
    %v4452 = vpop.f32.mrf.mxu0
    %v4453 = vadd.f32 %v4434, %v4452
    %v4454 = vpop.f32.mrf.mxu0
    %v4455 = vadd.f32 %v4436, %v4454
    %4456 = vmatmul.bf16.gmra.mxu0 %v3523
    %v4457 = vpop.f32.mrf.mxu0
    %v4458 = vadd.f32 %v4439, %v4457
    %v4459 = vpop.f32.mrf.mxu0
    %v4460 = vadd.f32 %v4441, %v4459
    %4461 = vdwg.mxu0
    %4462 = vmatpush.bf16.msra.mxu0 %v4114
    %4463 = vmatpush.bf16.msra.mxu0 %v4106
    %4464 = vmatpush.bf16.msra.mxu0 %v4098
    %4465 = vmatpush.bf16.msra.mxu0 %v4090
    %4466 = vmatpush.bf16.msra.mxu0 %v4082
    %4467 = vmatpush.bf16.msra.mxu0 %v4074
    %4468 = vmatpush.bf16.msra.mxu0 %v4066
    %4469 = vmatpush.bf16.msra.mxu0 %v4058
    %4470 = vmatmul.bf16.gmra.mxu0 %v3520
    %v4471 = vpop.f32.mrf.mxu0
    %v4472 = vadd.f32 %v3658, %v4471
    %v4473 = vpop.f32.mrf.mxu0
    %v4474 = vadd.f32 %v3658, %v4473
    %4475 = vmatmul.bf16.gmra.mxu0 %v3522
    %v4476 = vpop.f32.mrf.mxu0
    %v4477 = vadd.f32 %v3658, %v4476
    %v4478 = vpop.f32.mrf.mxu0
    %v4479 = vadd.f32 %v3658, %v4478
    %4480 = vdwg.mxu0
    %4481 = vmatpush.bf16.msra.mxu0 %v4178
    %4482 = vmatpush.bf16.msra.mxu0 %v4170
    %4483 = vmatpush.bf16.msra.mxu0 %v4162
    %4484 = vmatpush.bf16.msra.mxu0 %v4154
    %4485 = vmatpush.bf16.msra.mxu0 %v4146
    %4486 = vmatpush.bf16.msra.mxu0 %v4138
    %4487 = vmatpush.bf16.msra.mxu0 %v4130
    %4488 = vmatpush.bf16.msra.mxu0 %v4122
    %4489 = vmatmul.bf16.gmra.mxu0 %v3521
    %v4490 = vpop.f32.mrf.mxu0
    %v4491 = vadd.f32 %v4472, %v4490
    %v4492 = vpop.f32.mrf.mxu0
    %v4493 = vadd.f32 %v4474, %v4492
    %4494 = vmatmul.bf16.gmra.mxu0 %v3523
    %v4495 = vpop.f32.mrf.mxu0
    %v4496 = vadd.f32 %v4477, %v4495
    %v4497 = vpop.f32.mrf.mxu0
    %v4498 = vadd.f32 %v4479, %v4497
    %4499 = vdwg.mxu0
    %4500 = vmatpush.bf16.msra.mxu0 %v4115
    %4501 = vmatpush.bf16.msra.mxu0 %v4107
    %4502 = vmatpush.bf16.msra.mxu0 %v4099
    %4503 = vmatpush.bf16.msra.mxu0 %v4091
    %4504 = vmatpush.bf16.msra.mxu0 %v4083
    %4505 = vmatpush.bf16.msra.mxu0 %v4075
    %4506 = vmatpush.bf16.msra.mxu0 %v4067
    %4507 = vmatpush.bf16.msra.mxu0 %v4059
    %4508 = vmatmul.bf16.gmra.mxu0 %v3520
    %v4509 = vpop.f32.mrf.mxu0
    %v4510 = vadd.f32 %v3659, %v4509
    %v4511 = vpop.f32.mrf.mxu0
    %v4512 = vadd.f32 %v3659, %v4511
    %4513 = vmatmul.bf16.gmra.mxu0 %v3522
    %v4514 = vpop.f32.mrf.mxu0
    %v4515 = vadd.f32 %v3659, %v4514
    %v4516 = vpop.f32.mrf.mxu0
    %v4517 = vadd.f32 %v3659, %v4516
    %4518 = vdwg.mxu0
    %4519 = vmatpush.bf16.msra.mxu0 %v4179
    %4520 = vmatpush.bf16.msra.mxu0 %v4171
    %4521 = vmatpush.bf16.msra.mxu0 %v4163
    %4522 = vmatpush.bf16.msra.mxu0 %v4155
    %4523 = vmatpush.bf16.msra.mxu0 %v4147
    %4524 = vmatpush.bf16.msra.mxu0 %v4139
    %4525 = vmatpush.bf16.msra.mxu0 %v4131
    %4526 = vmatpush.bf16.msra.mxu0 %v4123
    %4527 = vmatmul.bf16.gmra.mxu0 %v3521
    %v4528 = vpop.f32.mrf.mxu0
    %v4529 = vadd.f32 %v4510, %v4528
    %v4530 = vpop.f32.mrf.mxu0
    %v4531 = vadd.f32 %v4512, %v4530
    %4532 = vmatmul.bf16.gmra.mxu0 %v3523
    %v4533 = vpop.f32.mrf.mxu0
    %v4534 = vadd.f32 %v4515, %v4533
    %v4535 = vpop.f32.mrf.mxu0
    %v4536 = vadd.f32 %v4517, %v4535
    %4537 = vdwg.mxu0
    %4538 = vmatpush.bf16.msra.mxu0 %v4116
    %4539 = vmatpush.bf16.msra.mxu0 %v4108
    %4540 = vmatpush.bf16.msra.mxu0 %v4100
    %4541 = vmatpush.bf16.msra.mxu0 %v4092
    %4542 = vmatpush.bf16.msra.mxu0 %v4084
    %4543 = vmatpush.bf16.msra.mxu0 %v4076
    %4544 = vmatpush.bf16.msra.mxu0 %v4068
    %4545 = vmatpush.bf16.msra.mxu0 %v4060
    %4546 = vmatmul.bf16.gmra.mxu0 %v3520
    %v4547 = vpop.f32.mrf.mxu0
    %v4548 = vadd.f32 %v3660, %v4547
    %v4549 = vpop.f32.mrf.mxu0
    %v4550 = vadd.f32 %v3660, %v4549
    %4551 = vmatmul.bf16.gmra.mxu0 %v3522
    %v4552 = vpop.f32.mrf.mxu0
    %v4553 = vadd.f32 %v3660, %v4552
    %v4554 = vpop.f32.mrf.mxu0
    %v4555 = vadd.f32 %v3660, %v4554
    %4556 = vdwg.mxu0
    %4557 = vmatpush.bf16.msra.mxu0 %v4180
    %4558 = vmatpush.bf16.msra.mxu0 %v4172
    %4559 = vmatpush.bf16.msra.mxu0 %v4164
    %4560 = vmatpush.bf16.msra.mxu0 %v4156
    %4561 = vmatpush.bf16.msra.mxu0 %v4148
    %4562 = vmatpush.bf16.msra.mxu0 %v4140
    %4563 = vmatpush.bf16.msra.mxu0 %v4132
    %4564 = vmatpush.bf16.msra.mxu0 %v4124
    %4565 = vmatmul.bf16.gmra.mxu0 %v3521
    %v4566 = vpop.f32.mrf.mxu0
    %v4567 = vadd.f32 %v4548, %v4566
    %v4568 = vpop.f32.mrf.mxu0
    %v4569 = vadd.f32 %v4550, %v4568
    %4570 = vmatmul.bf16.gmra.mxu0 %v3523
    %v4571 = vpop.f32.mrf.mxu0
    %v4572 = vadd.f32 %v4553, %v4571
    %v4573 = vpop.f32.mrf.mxu0
    %v4574 = vadd.f32 %v4555, %v4573
    %4575 = vdwg.mxu0
    %4576 = vmatpush.bf16.msra.mxu0 %v4117
    %4577 = vmatpush.bf16.msra.mxu0 %v4109
    %4578 = vmatpush.bf16.msra.mxu0 %v4101
    %4579 = vmatpush.bf16.msra.mxu0 %v4093
    %4580 = vmatpush.bf16.msra.mxu0 %v4085
    %4581 = vmatpush.bf16.msra.mxu0 %v4077
    %4582 = vmatpush.bf16.msra.mxu0 %v4069
    %4583 = vmatpush.bf16.msra.mxu0 %v4061
    %4584 = vmatmul.bf16.gmra.mxu0 %v3520
    %v4585 = vpop.f32.mrf.mxu0
    %v4586 = vadd.f32 %v3661, %v4585
    %v4587 = vpop.f32.mrf.mxu0
    %v4588 = vadd.f32 %v3661, %v4587
    %4589 = vmatmul.bf16.gmra.mxu0 %v3522
    %v4590 = vpop.f32.mrf.mxu0
    %v4591 = vadd.f32 %v3661, %v4590
    %v4592 = vpop.f32.mrf.mxu0
    %v4593 = vadd.f32 %v3661, %v4592
    %4594 = vdwg.mxu0
    %4595 = vmatpush.bf16.msra.mxu0 %v4181
    %4596 = vmatpush.bf16.msra.mxu0 %v4173
    %4597 = vmatpush.bf16.msra.mxu0 %v4165
    %4598 = vmatpush.bf16.msra.mxu0 %v4157
    %4599 = vmatpush.bf16.msra.mxu0 %v4149
    %4600 = vmatpush.bf16.msra.mxu0 %v4141
    %4601 = vmatpush.bf16.msra.mxu0 %v4133
    %4602 = vmatpush.bf16.msra.mxu0 %v4125
    %4603 = vmatmul.bf16.gmra.mxu0 %v3521
    %v4604 = vpop.f32.mrf.mxu0
    %v4605 = vadd.f32 %v4586, %v4604
    %v4606 = vpop.f32.mrf.mxu0
    %v4607 = vadd.f32 %v4588, %v4606
    %4608 = vmatmul.bf16.gmra.mxu0 %v3523
    %v4609 = vpop.f32.mrf.mxu0
    %v4610 = vadd.f32 %v4591, %v4609
    %v4611 = vpop.f32.mrf.mxu0
    %v4612 = vadd.f32 %v4593, %v4611
    %4613 = vdwg.mxu0
    %v4614 = vmax.f32 %v4339, 0.0
    %v4615 = vmax.f32 %v4377, 0.0
    %v4616 = vmax.f32 %v4415, 0.0
    %v4617 = vmax.f32 %v4453, 0.0
    %v4618 = vmax.f32 %v4491, 0.0
    %v4619 = vmax.f32 %v4529, 0.0
    %v4620 = vmax.f32 %v4567, 0.0
    %v4621 = vmax.f32 %v4605, 0.0
    %v4622 = vmax.f32 %v4341, 0.0
    %v4623 = vmax.f32 %v4379, 0.0
    %v4624 = vmax.f32 %v4417, 0.0
    %v4625 = vmax.f32 %v4455, 0.0
    %v4626 = vmax.f32 %v4493, 0.0
    %v4627 = vmax.f32 %v4531, 0.0
    %v4628 = vmax.f32 %v4569, 0.0
    %v4629 = vmax.f32 %v4607, 0.0
    %v4630 = vmax.f32 %v4344, 0.0
    %v4631 = vmax.f32 %v4382, 0.0
    %v4632 = vmax.f32 %v4420, 0.0
    %v4633 = vmax.f32 %v4458, 0.0
    %v4634 = vmax.f32 %v4496, 0.0
    %v4635 = vmax.f32 %v4534, 0.0
    %v4636 = vmax.f32 %v4572, 0.0
    %v4637 = vmax.f32 %v4610, 0.0
    %v4638 = vmax.f32 %v4346, 0.0
    %v4639 = vmax.f32 %v4384, 0.0
    %v4640 = vmax.f32 %v4422, 0.0
    %v4641 = vmax.f32 %v4460, 0.0
    %v4642 = vmax.f32 %v4498, 0.0
    %v4643 = vmax.f32 %v4536, 0.0
    %v4644 = vmax.f32 %v4574, 0.0
    %v4645 = vmax.f32 %v4612, 0.0
    %v4646 = vpack.c.bf16 %v4615, %v4614
    %v4647 = vpack.c.bf16 %v4617, %v4616
    %v4648 = vpack.c.bf16 %v4619, %v4618
    %v4649 = vpack.c.bf16 %v4621, %v4620
    %v4650 = vpack.c.bf16 %v4623, %v4622
    %v4651 = vpack.c.bf16 %v4625, %v4624
    %v4652 = vpack.c.bf16 %v4627, %v4626
    %v4653 = vpack.c.bf16 %v4629, %v4628
    %v4654 = vpack.c.bf16 %v4631, %v4630
    %v4655 = vpack.c.bf16 %v4633, %v4632
    %v4656 = vpack.c.bf16 %v4635, %v4634
    %v4657 = vpack.c.bf16 %v4637, %v4636
    %v4658 = vpack.c.bf16 %v4639, %v4638
    %v4659 = vpack.c.bf16 %v4641, %v4640
    %v4660 = vpack.c.bf16 %v4643, %v4642
    %v4661 = vpack.c.bf16 %v4645, %v4644
    %v4662 = vld [vmem:[#allocation19] sm:$0xf]
    %v4663 = vld [vmem:[#allocation19 + $0x4] sm:$0xf]
    %v4664 = vld [vmem:[#allocation19 + $0x8] sm:$0xf]
    %v4665 = vld [vmem:[#allocation19 + $0xc] sm:$0xf]
    %v4666 = vld [vmem:[#allocation19 + $0x10] sm:$0xf]
    %v4667 = vld [vmem:[#allocation19 + $0x14] sm:$0xf]
    %v4668 = vld [vmem:[#allocation19 + $0x18] sm:$0xf]
    %v4669 = vld [vmem:[#allocation19 + $0x1c] sm:$0xf]
    %v4670 = vld [vmem:[#allocation19 + $0x20] sm:$0xf]
    %v4671 = vld [vmem:[#allocation19 + $0x24] sm:$0xf]
    %v4672 = vld [vmem:[#allocation19 + $0x28] sm:$0xf]
    %v4673 = vld [vmem:[#allocation19 + $0x2c] sm:$0xf]
    %v4674 = vld [vmem:[#allocation19 + $0x30] sm:$0xf]
    %v4675 = vld [vmem:[#allocation19 + $0x34] sm:$0xf]
    %v4676 = vld [vmem:[#allocation19 + $0x38] sm:$0xf]
    %v4677 = vld [vmem:[#allocation19 + $0x3c] sm:$0xf]
    %v4678 = vld [vmem:[#allocation19 + $0x40] sm:$0xf]
    %v4679 = vld [vmem:[#allocation19 + $0x44] sm:$0xf]
    %v4680 = vld [vmem:[#allocation19 + $0x48] sm:$0xf]
    %v4681 = vld [vmem:[#allocation19 + $0x4c] sm:$0xf]
    %v4682 = vld [vmem:[#allocation19 + $0x50] sm:$0xf]
    %v4683 = vld [vmem:[#allocation19 + $0x54] sm:$0xf]
    %v4684 = vld [vmem:[#allocation19 + $0x58] sm:$0xf]
    %v4685 = vld [vmem:[#allocation19 + $0x5c] sm:$0xf]
    %v4686 = vld [vmem:[#allocation19 + $0x60] sm:$0xf]
    %v4687 = vld [vmem:[#allocation19 + $0x64] sm:$0xf]
    %v4688 = vld [vmem:[#allocation19 + $0x68] sm:$0xf]
    %v4689 = vld [vmem:[#allocation19 + $0x6c] sm:$0xf]
    %v4690 = vld [vmem:[#allocation19 + $0x70] sm:$0xf]
    %v4691 = vld [vmem:[#allocation19 + $0x74] sm:$0xf]
    %v4692 = vld [vmem:[#allocation19 + $0x78] sm:$0xf]
    %v4693 = vld [vmem:[#allocation19 + $0x7c] sm:$0xf]
    %v4694 = vld [vmem:[%s13] sm:$0x1]
    %v4696 = vperm.slane %v4694, 0
    %v4702 = vunpack.c.l.b16 %v4646
    %v4703 = vunpack.c.h.b16 %v4646
    %v4704 = vunpack.c.l.b16 %v4650
    %v4705 = vunpack.c.h.b16 %v4650
    %v4706 = vunpack.c.l.b16 %v4654
    %v4707 = vunpack.c.h.b16 %v4654
    %v4708 = vunpack.c.l.b16 %v4658
    %v4709 = vunpack.c.h.b16 %v4658
    %v4710 = vpack.c.b16 %v4704, %v4702
    %v4711 = vpack.c.b16 %v4705, %v4703
    %v4712 = vpack.c.b16 %v4708, %v4706
    %v4713 = vpack.c.b16 %v4709, %v4707
    %v4750 = vunpack.c.l.b16 %v4662
    %v4751 = vunpack.c.l.b16 %v4663
    %v4752 = vunpack.c.l.b16 %v4664
    %v4753 = vunpack.c.l.b16 %v4665
    %v4754 = vunpack.c.l.b16 %v4666
    %v4755 = vunpack.c.l.b16 %v4667
    %v4756 = vunpack.c.l.b16 %v4668
    %v4757 = vunpack.c.l.b16 %v4669
    %v4758 = vunpack.c.l.b16 %v4670
    %v4759 = vunpack.c.l.b16 %v4671
    %v4760 = vunpack.c.l.b16 %v4672
    %v4761 = vunpack.c.l.b16 %v4673
    %v4762 = vunpack.c.l.b16 %v4674
    %v4763 = vunpack.c.l.b16 %v4675
    %v4764 = vunpack.c.l.b16 %v4676
    %v4765 = vunpack.c.l.b16 %v4677
    %v4766 = vunpack.c.l.b16 %v4678
    %v4767 = vunpack.c.l.b16 %v4679
    %v4768 = vunpack.c.l.b16 %v4680
    %v4769 = vunpack.c.l.b16 %v4681
    %v4770 = vunpack.c.l.b16 %v4682
    %v4771 = vunpack.c.l.b16 %v4683
    %v4772 = vunpack.c.l.b16 %v4684
    %v4773 = vunpack.c.l.b16 %v4685
    %v4774 = vunpack.c.l.b16 %v4686
    %v4775 = vunpack.c.l.b16 %v4687
    %v4776 = vunpack.c.l.b16 %v4688
    %v4777 = vunpack.c.l.b16 %v4689
    %v4778 = vunpack.c.l.b16 %v4690
    %v4779 = vunpack.c.l.b16 %v4691
    %v4780 = vunpack.c.l.b16 %v4692
    %v4781 = vunpack.c.l.b16 %v4693
    %v4782 = vpack.c.b16 %v4751, %v4750
    %v4783 = vpack.c.b16 %v4753, %v4752
    %v4784 = vpack.c.b16 %v4755, %v4754
    %v4785 = vpack.c.b16 %v4757, %v4756
    %v4786 = vpack.c.b16 %v4759, %v4758
    %v4787 = vpack.c.b16 %v4761, %v4760
    %v4788 = vpack.c.b16 %v4763, %v4762
    %v4789 = vpack.c.b16 %v4765, %v4764
    %v4790 = vpack.c.b16 %v4767, %v4766
    %v4791 = vpack.c.b16 %v4769, %v4768
    %v4792 = vpack.c.b16 %v4771, %v4770
    %v4793 = vpack.c.b16 %v4773, %v4772
    %v4794 = vpack.c.b16 %v4775, %v4774
    %v4795 = vpack.c.b16 %v4777, %v4776
    %v4796 = vpack.c.b16 %v4779, %v4778
    %v4797 = vpack.c.b16 %v4781, %v4780
    %4814 = vmatpush.bf16.msra.mxu0 %v4789
    %4815 = vmatpush.bf16.msra.mxu0 %v4788
    %4816 = vmatpush.bf16.msra.mxu0 %v4787
    %4817 = vmatpush.bf16.msra.mxu0 %v4786
    %4818 = vmatpush.bf16.msra.mxu0 %v4785
    %4819 = vmatpush.bf16.msra.mxu0 %v4784
    %4820 = vmatpush.bf16.msra.mxu0 %v4783
    %4821 = vmatpush.bf16.msra.mxu0 %v4782
    %4822 = vmatmul.bf16.gmra.mxu0 %v4710
    %v4823 = vpop.f32.mrf.mxu0
    %v4824 = vadd.f32 %v4696, %v4823
    %v4825 = vpop.f32.mrf.mxu0
    %v4826 = vadd.f32 %v4696, %v4825
    %4827 = vmatmul.bf16.gmra.mxu0 %v4712
    %v4828 = vpop.f32.mrf.mxu0
    %v4829 = vadd.f32 %v4696, %v4828
    %v4830 = vpop.f32.mrf.mxu0
    %v4831 = vadd.f32 %v4696, %v4830
    %4832 = vdwg.mxu0
    %4833 = vmatpush.bf16.msra.mxu0 %v4797
    %4834 = vmatpush.bf16.msra.mxu0 %v4796
    %4835 = vmatpush.bf16.msra.mxu0 %v4795
    %4836 = vmatpush.bf16.msra.mxu0 %v4794
    %4837 = vmatpush.bf16.msra.mxu0 %v4793
    %4838 = vmatpush.bf16.msra.mxu0 %v4792
    %4839 = vmatpush.bf16.msra.mxu0 %v4791
    %4840 = vmatpush.bf16.msra.mxu0 %v4790
    %4841 = vmatmul.bf16.gmra.mxu0 %v4711
    %v4842 = vpop.f32.mrf.mxu0
    %v4843 = vadd.f32 %v4824, %v4842
    %v4844 = vpop.f32.mrf.mxu0
    %v4845 = vadd.f32 %v4826, %v4844
    %4846 = vmatmul.bf16.gmra.mxu0 %v4713
    %v4847 = vpop.f32.mrf.mxu0
    %v4848 = vadd.f32 %v4829, %v4847
    %v4849 = vpop.f32.mrf.mxu0
    %v4850 = vadd.f32 %v4831, %v4849
    %4851 = vdwg.mxu0
    %4852 = vst [vmem:[#allocation20] sm:$0xff] %v4843
    %4853 = vst [vmem:[#allocation20 + $0x8] sm:$0xff] %v4845
    %4854 = vst [vmem:[#allocation20 + $0x10] sm:$0xff] %v4848
    %4855 = vst [vmem:[#allocation20 + $0x18] sm:$0xff] %v4850
    %v4860 = vunpack.c.l.b16 %v4647
    %v4861 = vunpack.c.h.b16 %v4647
    %v4862 = vunpack.c.l.b16 %v4651
    %v4863 = vunpack.c.h.b16 %v4651
    %v4864 = vunpack.c.l.b16 %v4655
    %v4865 = vunpack.c.h.b16 %v4655
    %v4866 = vunpack.c.l.b16 %v4659
    %v4867 = vunpack.c.h.b16 %v4659
    %v4868 = vpack.c.b16 %v4862, %v4860
    %v4869 = vpack.c.b16 %v4863, %v4861
    %v4870 = vpack.c.b16 %v4866, %v4864
    %v4871 = vpack.c.b16 %v4867, %v4865
    %4876 = vmatpush.bf16.msra.mxu0 %v4789
    %4877 = vmatpush.bf16.msra.mxu0 %v4788
    %4878 = vmatpush.bf16.msra.mxu0 %v4787
    %4879 = vmatpush.bf16.msra.mxu0 %v4786
    %4880 = vmatpush.bf16.msra.mxu0 %v4785
    %4881 = vmatpush.bf16.msra.mxu0 %v4784
    %4882 = vmatpush.bf16.msra.mxu0 %v4783
    %4883 = vmatpush.bf16.msra.mxu0 %v4782
    %4884 = vmatmul.bf16.gmra.mxu0 %v4868
    %v4885 = vpop.f32.mrf.mxu0
    %v4886 = vadd.f32 %v4696, %v4885
    %v4887 = vpop.f32.mrf.mxu0
    %v4888 = vadd.f32 %v4696, %v4887
    %4889 = vmatmul.bf16.gmra.mxu0 %v4870
    %v4890 = vpop.f32.mrf.mxu0
    %v4891 = vadd.f32 %v4696, %v4890
    %v4892 = vpop.f32.mrf.mxu0
    %v4893 = vadd.f32 %v4696, %v4892
    %4894 = vdwg.mxu0
    %4895 = vmatpush.bf16.msra.mxu0 %v4797
    %4896 = vmatpush.bf16.msra.mxu0 %v4796
    %4897 = vmatpush.bf16.msra.mxu0 %v4795
    %4898 = vmatpush.bf16.msra.mxu0 %v4794
    %4899 = vmatpush.bf16.msra.mxu0 %v4793
    %4900 = vmatpush.bf16.msra.mxu0 %v4792
    %4901 = vmatpush.bf16.msra.mxu0 %v4791
    %4902 = vmatpush.bf16.msra.mxu0 %v4790
    %4903 = vmatmul.bf16.gmra.mxu0 %v4869
    %v4904 = vpop.f32.mrf.mxu0
    %v4905 = vadd.f32 %v4886, %v4904
    %v4906 = vpop.f32.mrf.mxu0
    %v4907 = vadd.f32 %v4888, %v4906
    %4908 = vmatmul.bf16.gmra.mxu0 %v4871
    %v4909 = vpop.f32.mrf.mxu0
    %v4910 = vadd.f32 %v4891, %v4909
    %v4911 = vpop.f32.mrf.mxu0
    %v4912 = vadd.f32 %v4893, %v4911
    %4913 = vdwg.mxu0
    %s4914 = scalar_lea.vmem [#allocation20], 32
    %4915 = vst [vmem:[%s4914] sm:$0xff] %v4905
    %4916 = vst [vmem:[%s4914 + $0x8] sm:$0xff] %v4907
    %4917 = vst [vmem:[%s4914 + $0x10] sm:$0xff] %v4910
    %4918 = vst [vmem:[%s4914 + $0x18] sm:$0xff] %v4912
    %v4923 = vunpack.c.l.b16 %v4648
    %v4924 = vunpack.c.h.b16 %v4648
    %v4925 = vunpack.c.l.b16 %v4652
    %v4926 = vunpack.c.h.b16 %v4652
    %v4927 = vunpack.c.l.b16 %v4656
    %v4928 = vunpack.c.h.b16 %v4656
    %v4929 = vunpack.c.l.b16 %v4660
    %v4930 = vunpack.c.h.b16 %v4660
    %v4931 = vpack.c.b16 %v4925, %v4923
    %v4932 = vpack.c.b16 %v4926, %v4924
    %v4933 = vpack.c.b16 %v4929, %v4927
    %v4934 = vpack.c.b16 %v4930, %v4928
    %4939 = vmatpush.bf16.msra.mxu0 %v4789
    %4940 = vmatpush.bf16.msra.mxu0 %v4788
    %4941 = vmatpush.bf16.msra.mxu0 %v4787
    %4942 = vmatpush.bf16.msra.mxu0 %v4786
    %4943 = vmatpush.bf16.msra.mxu0 %v4785
    %4944 = vmatpush.bf16.msra.mxu0 %v4784
    %4945 = vmatpush.bf16.msra.mxu0 %v4783
    %4946 = vmatpush.bf16.msra.mxu0 %v4782
    %4947 = vmatmul.bf16.gmra.mxu0 %v4931
    %v4948 = vpop.f32.mrf.mxu0
    %v4949 = vadd.f32 %v4696, %v4948
    %v4950 = vpop.f32.mrf.mxu0
    %v4951 = vadd.f32 %v4696, %v4950
    %4952 = vmatmul.bf16.gmra.mxu0 %v4933
    %v4953 = vpop.f32.mrf.mxu0
    %v4954 = vadd.f32 %v4696, %v4953
    %v4955 = vpop.f32.mrf.mxu0
    %v4956 = vadd.f32 %v4696, %v4955
    %4957 = vdwg.mxu0
    %4958 = vmatpush.bf16.msra.mxu0 %v4797
    %4959 = vmatpush.bf16.msra.mxu0 %v4796
    %4960 = vmatpush.bf16.msra.mxu0 %v4795
    %4961 = vmatpush.bf16.msra.mxu0 %v4794
    %4962 = vmatpush.bf16.msra.mxu0 %v4793
    %4963 = vmatpush.bf16.msra.mxu0 %v4792
    %4964 = vmatpush.bf16.msra.mxu0 %v4791
    %4965 = vmatpush.bf16.msra.mxu0 %v4790
    %4966 = vmatmul.bf16.gmra.mxu0 %v4932
    %v4967 = vpop.f32.mrf.mxu0
    %v4968 = vadd.f32 %v4949, %v4967
    %v4969 = vpop.f32.mrf.mxu0
    %v4970 = vadd.f32 %v4951, %v4969
    %4971 = vmatmul.bf16.gmra.mxu0 %v4934
    %v4972 = vpop.f32.mrf.mxu0
    %v4973 = vadd.f32 %v4954, %v4972
    %v4974 = vpop.f32.mrf.mxu0
    %v4975 = vadd.f32 %v4956, %v4974
    %4976 = vdwg.mxu0
    %s4977 = scalar_lea.vmem [#allocation20], 64
    %4978 = vst [vmem:[%s4977] sm:$0xff] %v4968
    %4979 = vst [vmem:[%s4977 + $0x8] sm:$0xff] %v4970
    %4980 = vst [vmem:[%s4977 + $0x10] sm:$0xff] %v4973
    %4981 = vst [vmem:[%s4977 + $0x18] sm:$0xff] %v4975
    %v4986 = vunpack.c.l.b16 %v4649
    %v4987 = vunpack.c.h.b16 %v4649
    %v4988 = vunpack.c.l.b16 %v4653
    %v4989 = vunpack.c.h.b16 %v4653
    %v4990 = vunpack.c.l.b16 %v4657
    %v4991 = vunpack.c.h.b16 %v4657
    %v4992 = vunpack.c.l.b16 %v4661
    %v4993 = vunpack.c.h.b16 %v4661
    %v4994 = vpack.c.b16 %v4988, %v4986
    %v4995 = vpack.c.b16 %v4989, %v4987
    %v4996 = vpack.c.b16 %v4992, %v4990
    %v4997 = vpack.c.b16 %v4993, %v4991
    %5002 = vmatpush.bf16.msra.mxu0 %v4789
    %5003 = vmatpush.bf16.msra.mxu0 %v4788
    %5004 = vmatpush.bf16.msra.mxu0 %v4787
    %5005 = vmatpush.bf16.msra.mxu0 %v4786
    %5006 = vmatpush.bf16.msra.mxu0 %v4785
    %5007 = vmatpush.bf16.msra.mxu0 %v4784
    %5008 = vmatpush.bf16.msra.mxu0 %v4783
    %5009 = vmatpush.bf16.msra.mxu0 %v4782
    %5010 = vmatmul.bf16.gmra.mxu0 %v4994
    %v5011 = vpop.f32.mrf.mxu0
    %v5012 = vadd.f32 %v4696, %v5011
    %v5013 = vpop.f32.mrf.mxu0
    %v5014 = vadd.f32 %v4696, %v5013
    %5015 = vmatmul.bf16.gmra.mxu0 %v4996
    %v5016 = vpop.f32.mrf.mxu0
    %v5017 = vadd.f32 %v4696, %v5016
    %v5018 = vpop.f32.mrf.mxu0
    %v5019 = vadd.f32 %v4696, %v5018
    %5020 = vdwg.mxu0
    %5021 = vmatpush.bf16.msra.mxu0 %v4797
    %5022 = vmatpush.bf16.msra.mxu0 %v4796
    %5023 = vmatpush.bf16.msra.mxu0 %v4795
    %5024 = vmatpush.bf16.msra.mxu0 %v4794
    %5025 = vmatpush.bf16.msra.mxu0 %v4793
    %5026 = vmatpush.bf16.msra.mxu0 %v4792
    %5027 = vmatpush.bf16.msra.mxu0 %v4791
    %5028 = vmatpush.bf16.msra.mxu0 %v4790
    %5029 = vmatmul.bf16.gmra.mxu0 %v4995
    %v5030 = vpop.f32.mrf.mxu0
    %v5031 = vadd.f32 %v5012, %v5030
    %v5032 = vpop.f32.mrf.mxu0
    %v5033 = vadd.f32 %v5014, %v5032
    %5034 = vmatmul.bf16.gmra.mxu0 %v4997
    %v5035 = vpop.f32.mrf.mxu0
    %v5036 = vadd.f32 %v5017, %v5035
    %v5037 = vpop.f32.mrf.mxu0
    %v5038 = vadd.f32 %v5019, %v5037
    %5039 = vdwg.mxu0
    %s5040 = scalar_lea.vmem [#allocation20], 96
    %5041 = vst [vmem:[%s5040] sm:$0xff] %v5031
    %5042 = vst [vmem:[%s5040 + $0x8] sm:$0xff] %v5033
    %5043 = vst [vmem:[%s5040 + $0x10] sm:$0xff] %v5036
    %5044 = vst [vmem:[%s5040 + $0x18] sm:$0xff] %v5038
    // Predicated region
    $region102: #{tpu_custom_call.1} parent=1 // pred_check
      _
    $region103: #{tpu_custom_call.1} parent=1 // pred_check_branch
      %5046 = sbr.rel (0) target = $region105
    $region104: #{tpu_custom_call.1} parent=1 // pred_region
      %5048 = vsyncadd [#allocation4], 0
      %s5049 = sshll.u32 [#allocation20], 4
      %s5050 = int_to_ptr.vmem [resolvable:$true] %s5049
      %s5051 = sshll.u32 %s14, 4
      %s5052 = int_to_ptr.hbm [resolvable:$true] %s5051
      %5057 = dma.vmem_to_hbm [thread:$0]  %s5050, 2048, %s5052, [#allocation4], 128, 128, 8
    $region105: #{tpu_custom_call.1} parent=1 // pred_fallthru
      _
    // Predicated region
    $region106: #{tpu_custom_call.1} parent=1 // pred_check
      _
    $region107: #{tpu_custom_call.1} parent=1 // pred_check_branch
      %5059 = sbr.rel (0) target = $region109
    $region108: #{tpu_custom_call.1} parent=1 // pred_region
      %5061 = dma.done [#allocation4], 2048
    $region109: #{tpu_custom_call.1} parent=1 // pred_fallthru
      _
    %5062 = vsyncpa [#allocation3], 1
    %5063 = vsyncpa [#allocation6], 1
    %5064 = vsyncpa [#allocation9], 1
    %5065 = vsyncpa [#allocation12], 1
    %5066 = vsyncpa [#allocation15], 1
    %5067 = vsyncpa [#allocation18], 1
    %5068 = vsyncpa [#allocation4], 1

</llo_original>
